<compile_context>
chip_gen: v7x
topology: tpu7x:2x2x1
jax: 0.10.0
libtpu: 0.0.40
codegen_flags: <defaults>
</compile_context>

<pallas_src>
import functools

import numpy as np
import jax
import jax.numpy as jnp
from jax import lax
from jax.experimental import pallas as pl
from jax.experimental.pallas import tpu as pltpu

PAD_ID = 0
NUM_PADDING_AT_BEGINNING = 0   # in-kernel index logic assumes this is 0


# -----------------------------------------------------------------------------
# VMEM budgeting helpers (generation-aware)
# -----------------------------------------------------------------------------
def _vmem_budget_bytes():
    """~3/4 of physical VMEM; conservative 48 MiB fallback (fits v7x 64 MiB)."""
    try:
        info = pltpu.get_tpu_info()
        cap = int(getattr(info, "vmem_capacity_bytes", 0) or 0)
        if cap > 0:
            return (cap * 3) // 4
    except Exception:
        pass
    return 48 * 1024 * 1024


def _vmem_use_bytes(tm, tk, H):
    return (2 * tm * tk * 2      # emb blocks (bf16, double-buffered)
            + 2 * tk * H * 2     # w1 blocks (bf16, double-buffered)
            + 2 * H * 4          # v_head row
            + tm * H * 4         # f32 accumulator scratch
            + 2 * tm * 4)        # output block


def _select_tk(tm, H, budget):
    """Largest K-slab (divisor of H) that fits the VMEM budget.
    tk == H means w1 is fully VMEM-resident (streamed from HBM once)."""
    fallback = None
    for tk in (H, 4096, 2048, 1024, 512, 256, 128):
        if tk > H or H % tk != 0:
            continue
        fallback = tk
        if _vmem_use_bytes(tm, tk, H) <= budget:
            return tk
    return fallback if fallback is not None else H


# -----------------------------------------------------------------------------
# Kernel A: synthetic hidden-state layer + v_head projection (tiled GEMM)
#   acc += emb_tile(bf16) @ w1_tile(bf16)          (MXU, f32 accumulation)
#   on last K step:  h = tanh(acc);  reward = sum(h * w_v, lanes)
#   (epilogue chunked over H to stay in registers; EUP + VPU + XLU slots)
#   store reward lane-dense as a (1, tm) row.
# -----------------------------------------------------------------------------
def hidden_vhead_kernel(emb_ref, w1_ref, wv_ref, out_ref, acc_ref,
                        *, n_chunks, chunk):
    k = pl.program_id(1)

    @pl.when(k == 0)
    def _():
        acc_ref[...] = jnp.zeros_like(acc_ref)

    acc_ref[...] += jnp.dot(emb_ref[...], w1_ref[...],
                            preferred_element_type=jnp.float32)

    @pl.when(k == pl.num_programs(1) - 1)
    def _():
        tm = acc_ref.shape[0]

        def body(c, r):
            off = pl.multiple_of(c * chunk, chunk)
            h = jnp.tanh(acc_ref[:, pl.ds(off, chunk)])          # [tm, chunk] EUP
            w = wv_ref[:, pl.ds(off, chunk)]                     # [1,  chunk]
            return r + jnp.sum(h * w, axis=-1)                   # VPU + XLU

        r = lax.fori_loop(0, n_chunks, body,
                          jnp.zeros((tm,), jnp.float32), unroll=True)
        out_ref[...] = r.reshape(out_ref.shape)                  # lane-dense (1, tm)


def compute_rewards(emb_flat, w1, wv_row, *, tm):
    """emb_flat: [R_pad, H] bf16, w1: [H, H] bf16, wv_row: [1, H] f32
       -> rewards as a lane-dense (1, R_pad) f32 row."""
    R_pad, H = emb_flat.shape
    budget = _vmem_budget_bytes()
    tk = _select_tk(tm, H, budget)
    nk = H // tk
    n_row = R_pad // tm

    # epilogue chunk over H
    chunk = next((c for c in (512, 256, 128) if H % c == 0), H)
    n_chunks = H // chunk

    # serpentine K order: reverse K direction on odd row tiles so the boundary
    # w1 slab is reused when i increments (no-op when nk == 1).
    def kk(i, k):
        par = i % 2
        return (1 - par) * k + par * (nk - 1 - k)

    # w1 is re-streamed per row tile only when K is actually tiled (nk > 1);
    # with nk == 1 the block index is constant so it is fetched once.
    w1_passes = n_row if nk > 1 else 1
    cost = pl.CostEstimate(
        flops=2 * R_pad * H * H + 3 * R_pad * H,
        transcendentals=R_pad * H,
        bytes_accessed=(R_pad * H * 2
                        + w1_passes * H * H * 2
                        + H * 4
                        + R_pad * 4))

    kernel = functools.partial(hidden_vhead_kernel, n_chunks=n_chunks, chunk=chunk)

    return pl.pallas_call(
        kernel,
        out_shape=jax.ShapeDtypeStruct((1, R_pad), jnp.float32),
        grid_spec=pltpu.PrefetchScalarGridSpec(
            num_scalar_prefetch=0,
            grid=(n_row, nk),
            in_specs=[
                # emb row-tile x K-slab, streamed (double-buffered) from HBM
                pl.BlockSpec((tm, tk), lambda i, k: (i, kk(i, k))),
                # w1 K-slab (full output width H per tile); tk == H => resident
                pl.BlockSpec((tk, H), lambda i, k: (kk(i, k), 0)),
                # v_head weights as a single broadcastable row
                pl.BlockSpec((1, H), lambda i, k: (0, 0)),
            ],
            out_specs=pl.BlockSpec((1, tm), lambda i, k: (0, i)),
            scratch_shapes=[pltpu.VMEM((tm, H), jnp.float32)],
        ),
        compiler_params=pltpu.CompilerParams(
            # row axis shards across TensorCores on multi-TC parts; K reduces.
            dimension_semantics=("parallel", "arbitrary"),
            vmem_limit_bytes=budget),
        cost_estimate=cost,
    )(emb_flat, w1, wv_row)


# -----------------------------------------------------------------------------
# Kernel B: pairwise reward loss + mean-score extraction (llama branch)
#   All per-example index logic (first PAD, first divergence, end index) is
#   computed in-kernel with exact int32 comparisons, vectorized over the
#   batch, assuming num_padding_at_beginning == 0.
# -----------------------------------------------------------------------------
def pairwise_loss_kernel(cid_ref, rid_ref, c_ref, r_ref,
                         loss_ref, cms_ref, rms_ref):
    cid = cid_ref[...]                  # [bs, S] i32
    rid = rid_ref[...]                  # [bs, S] i32
    c = c_ref[...]                      # [bs, S] f32
    r = r_ref[...]                      # [bs, S] f32
    bs, S = c.shape

    pos = jax.lax.broadcasted_iota(jnp.int32, (bs, S), 1)
    big = jnp.int32(S)

    # first divergence position (S if sequences identical)
    div_first = jnp.min(jnp.where(cid != rid, pos, big), axis=-1, keepdims=True)
    diverged = div_first < big
    # first PAD position (S if no PAD) -- num_padding_at_beginning == 0
    c_ind = jnp.min(jnp.where(cid == PAD_ID, pos, big), axis=-1, keepdims=True)
    r_pad = jnp.min(jnp.where(rid == PAD_ID, pos, big), axis=-1, keepdims=True)

    end_ind = jnp.where(diverged, jnp.maximum(c_ind, r_pad), big)
    div_ind = jnp.where(diverged, div_first, big - 1)
    r_ind = jnp.where(diverged, r_pad, c_ind)

    diff = c - r
    # numerically-stable logsigmoid
    logsig = jnp.minimum(diff, 0.0) - jnp.log1p(jnp.exp(-jnp.abs(diff)))

    mask = (pos >= div_ind) & (pos < end_ind)
    cnt = jnp.maximum(end_ind - div_ind, 1).astype(jnp.float32)
    per_ex = -jnp.sum(jnp.where(mask, logsig, 0.0), axis=-1, keepdims=True) / cnt
    loss_ref[...] = (jnp.sum(per_ex) / bs).reshape(1, 1)

    # score at index (ind - 1); out-of-contract case ind == 0 yields 0.0
    # (the PyTorch reference asserts divergence_ind > 0 so this never occurs).
    cms_ref[...] = jnp.sum(jnp.where(pos == (c_ind - 1), c, 0.0),
                           axis=-1, keepdims=True)
    rms_ref[...] = jnp.sum(jnp.where(pos == (r_ind - 1), r, 0.0),
                           axis=-1, keepdims=True)


def pairwise_loss(chosen_ids, rejected_ids, chosen_rewards, rejected_rewards):
    bs, S = chosen_rewards.shape
    vmem = pltpu.MemorySpace.VMEM
    loss, cms, rms = pl.pallas_call(
        pairwise_loss_kernel,
        out_shape=(jax.ShapeDtypeStruct((1, 1), jnp.float32),
                   jax.ShapeDtypeStruct((bs, 1), jnp.float32),
                   jax.ShapeDtypeStruct((bs, 1), jnp.float32)),
        in_specs=[pl.BlockSpec(memory_space=vmem)] * 4,
        out_specs=(pl.BlockSpec(memory_space=vmem),
                   pl.BlockSpec(memory_space=vmem),
                   pl.BlockSpec(memory_space=vmem)),
    )(chosen_ids.astype(jnp.int32), rejected_ids.astype(jnp.int32),
      chosen_rewards, rejected_rewards)
    return loss[0, 0], cms[:, 0], rms[:, 0]


# -----------------------------------------------------------------------------
# Forward wrapper (mirrors RewardModel.forward, llama branch)
# -----------------------------------------------------------------------------
def reward_model_forward(input_ids, embed_table, w1, w_v, *, tm=256):
    """input_ids: [2*bs, S] int32.  Returns dict like the torch module."""
    two_bs, S = input_ids.shape
    bs = two_bs // 2
    H = embed_table.shape[1]

    # synthetic base model hidden states: embedding lookup (glue) feeding the
    # tiled tanh-dense + v_head Pallas kernel.  Cast AFTER the gather so only
    # R x H elements are converted; w1 is expected bf16 at rest (astype is a
    # no-op in that case).
    emb = jnp.take(embed_table, input_ids, axis=0).astype(jnp.bfloat16)
    R = two_bs * S
    R_pad = ((R + tm - 1) // tm) * tm
    emb_flat = emb.reshape(R, H)
    if R_pad != R:
        emb_flat = jnp.pad(emb_flat, ((0, R_pad - R), (0, 0)))

    rewards_row = compute_rewards(
        emb_flat,
        w1.astype(jnp.bfloat16),
        w_v.reshape(1, H).astype(jnp.float32),
        tm=tm)                                            # (1, R_pad) f32
    rewards = rewards_row[0, :R].reshape(two_bs, S)       # v_head(...).squeeze(-1)

    chosen_ids, rejected_ids = input_ids[:bs], input_ids[bs:]
    chosen_rewards, rejected_rewards = rewards[:bs], rewards[bs:]

    loss, cms, rms = pairwise_loss(chosen_ids, rejected_ids,
                                   chosen_rewards, rejected_rewards)
    return {"loss": loss,
            "chosen_mean_scores": cms,
            "rejected_mean_scores": rms,
            "rewards": rewards}


# -----------------------------------------------------------------------------
# Pure numpy reference mirroring the PyTorch loop (for verification)
# -----------------------------------------------------------------------------
def reference_forward(input_ids, rewards):
    input_ids = np.asarray(input_ids)
    rewards = np.asarray(rewards)
    bs = input_ids.shape[0] // 2
    S = input_ids.shape[1]
    chosen_ids, rejected_ids = input_ids[:bs], input_ids[bs:]
    chosen_rewards, rejected_rewards = rewards[:bs], rewards[bs:]
    loss = 0.0
    cms, rms = [], []
    for i in range(bs):
        cid, rid = chosen_ids[i], rejected_ids[i]
        crw, rrw = chosen_rewards[i], rejected_rewards[i]
        c_inds = np.nonzero(cid == PAD_ID)[0]
        c_ind = c_inds[NUM_PADDING_AT_BEGINNING] if len(c_inds) > NUM_PADDING_AT_BEGINNING else S
        diverg = np.nonzero(cid != rid)[0]
        if len(diverg) == 0:
            end_ind = S
            divergence_ind = end_ind - 1
            r_ind = c_ind
        else:
            r_inds = np.nonzero(rid == PAD_ID)[0]
            r_ind = r_inds[NUM_PADDING_AT_BEGINNING] if len(r_inds) > NUM_PADDING_AT_BEGINNING else S
            end_ind = max(c_ind, r_ind)
            divergence_ind = diverg[0]
        assert divergence_ind > 0
        ct = crw[divergence_ind:end_ind]
        rt = rrw[divergence_ind:end_ind]
        d = ct - rt
        logsig = np.minimum(d, 0.0) - np.log1p(np.exp(-np.abs(d)))
        loss += -logsig.mean()
        cms.append(crw[c_ind - 1])
        rms.append(rrw[r_ind - 1])
    return loss / bs, np.array(cms), np.array(rms)


if __name__ == "__main__":
    bs, S, H, V = 2, 64, 256, 64     # small shapes that still exercise the grid
    two_bs = 2 * bs

    # deterministic parameters; w1 stored bf16 at rest (no per-forward convert)
    key = jax.random.PRNGKey(0)
    k_emb, k_w1, k_v = jax.random.split(key, 3)
    embed_table = jax.random.normal(k_emb, (V, H), jnp.float32) * 0.5
    w1 = (jax.random.normal(k_w1, (H, H), jnp.float32)
          * (1.0 / np.sqrt(H))).astype(jnp.bfloat16)
    w_v = jax.random.normal(k_v, (H, 1), jnp.float32) * (1.0 / np.sqrt(H))

    # deterministic token ids: [chosen(bs); rejected(bs)], PAD_ID == 0 padding,
    # shared non-PAD prefix so divergence_ind > 0 (matches reference contract).
    rng = np.random.RandomState(0)

    def make_pair(shared_len, c_len, r_len):
        shared = rng.randint(1, V, size=(shared_len,))
        c = np.full((S,), PAD_ID, np.int32)
        r = np.full((S,), PAD_ID, np.int32)
        c[:shared_len] = shared
        r[:shared_len] = shared
        c[shared_len:c_len] = rng.randint(1, V, size=(c_len - shared_len,))
        r[shared_len:r_len] = rng.randint(1, V, size=(r_len - shared_len,))
        return c, r

    pairs = [make_pair(6, 40, 28), make_pair(3, 50, 35)]
    chosen_np = np.stack([p[0] for p in pairs])
    rejected_np = np.stack([p[1] for p in pairs])
    input_ids = jnp.asarray(np.concatenate([chosen_np, rejected_np], axis=0),
                            dtype=jnp.int32)

    fwd = jax.jit(reward_model_forward)
    out = fwd(input_ids, embed_table, w1, w_v)
    jax.block_until_ready(out)

    rewards = np.asarray(out["rewards"])

    # Kernel A vs plain-JAX reference (same bf16 operand rounding, f32 accum)
    emb_ref = jnp.take(embed_table, input_ids, axis=0).astype(jnp.bfloat16)
    h_ref = jnp.tanh(jnp.dot(emb_ref.reshape(two_bs * S, H), w1,
                             preferred_element_type=jnp.float32))
    rew_ref = np.asarray((h_ref @ w_v).reshape(two_bs, S))
    np.testing.assert_allclose(rewards, rew_ref, rtol=1e-2, atol=1e-2)

    # Kernel B vs numpy reference of the PyTorch loop (on the kernel's rewards)
    ref_loss, ref_cms, ref_rms = reference_forward(input_ids, rewards)
    np.testing.assert_allclose(np.asarray(out["loss"]), ref_loss,
                               rtol=1e-4, atol=1e-4)
    np.testing.assert_allclose(np.asarray(out["chosen_mean_scores"]), ref_cms,
                               rtol=1e-4, atol=1e-4)
    np.testing.assert_allclose(np.asarray(out["rejected_mean_scores"]), ref_rms,
                               rtol=1e-4, atol=1e-4)

    print("KERNEL_OK")
</pallas_src>

<mosaic_0001>
module attributes {stable_mosaic.version = 11 : i64} {
  func.func @hidden_vhead_kernel(%arg0: i32, %arg1: i32, %arg2: memref<256x256xbf16, #tpu.memory_space<vmem>>, %arg3: memref<256x256xbf16, #tpu.memory_space<vmem>>, %arg4: memref<1x256xf32, #tpu.memory_space<vmem>>, %arg5: memref<1x256xf32, #tpu.memory_space<vmem>>, %arg6: memref<256x256xf32, #tpu.memory_space<vmem>>) attributes {dimension_semantics = [#tpu.dimension_semantics<parallel>, #tpu.dimension_semantics<arbitrary>], iteration_bounds = array<i64: 1, 1>, scalar_prefetch = 0 : i64, scratch_operands = 1 : i64, tpu.core_type = #tpu.core_type<tc>, window_params = [{transform_indices = @transform_0, window_bounds = array<i64: 256, 256>}, {transform_indices = @transform_1, window_bounds = array<i64: 256, 256>}, {pipeline_mode = #tpu.pipeline_mode<synchronous>, transform_indices = @transform_2, window_bounds = array<i64: 1, 256>}, {transform_indices = @transform_3, window_bounds = array<i64: 1, 256>}]} {
    %c0_i32 = arith.constant 0 : i32
    %0 = arith.cmpi eq, %arg1, %c0_i32 : i32
    %1 = arith.extui %0 : i1 to i32
    %c0_i32_0 = arith.constant 0 : i32
    %2 = arith.cmpi ne, %1, %c0_i32_0 : i32
    scf.if %2 {
      %cst_10 = arith.constant 0.000000e+00 : f32
      %12 = vector.broadcast %cst_10 : f32 to vector<256x256xf32>
      %c0_11 = arith.constant 0 : index
      %c0_12 = arith.constant 0 : index
      %13 = vector.load %arg6[%c0_11, %c0_12] : memref<256x256xf32, #tpu.memory_space<vmem>>, vector<256x256xf32>
      tpu.vector_store %arg6[%c0_11, %c0_12], %12 {strides = array<i32>} : memref<256x256xf32, #tpu.memory_space<vmem>>, vector<256x256xf32>,
    } else {
    }
    %c0 = arith.constant 0 : index
    %c0_1 = arith.constant 0 : index
    %3 = vector.load %arg6[%c0, %c0_1] : memref<256x256xf32, #tpu.memory_space<vmem>>, vector<256x256xf32>
    %c0_2 = arith.constant 0 : index
    %c0_3 = arith.constant 0 : index
    %4 = vector.load %arg2[%c0_2, %c0_3] : memref<256x256xbf16, #tpu.memory_space<vmem>>, vector<256x256xbf16>
    %c0_4 = arith.constant 0 : index
    %c0_5 = arith.constant 0 : index
    %5 = vector.load %arg3[%c0_4, %c0_5] : memref<256x256xbf16, #tpu.memory_space<vmem>>, vector<256x256xbf16>
    %cst = arith.constant dense<0.000000e+00> : vector<256x256xf32>
    %6 = tpu.matmul %4, %5, %cst {dimension_numbers = #tpu.dot_dimension_numbers<[1], [0], [0], [1], [0, 0, 1, 1], [], []>} : vector<256x256xbf16>, vector<256x256xbf16>, vector<256x256xf32> -> vector<256x256xf32>
    %7 = arith.addf %3, %6 : vector<256x256xf32>
    %c0_6 = arith.constant 0 : index
    %c0_7 = arith.constant 0 : index
    %8 = vector.load %arg6[%c0_6, %c0_7] : memref<256x256xf32, #tpu.memory_space<vmem>>, vector<256x256xf32>
    tpu.vector_store %arg6[%c0_6, %c0_7], %7 {strides = array<i32>} : memref<256x256xf32, #tpu.memory_space<vmem>>, vector<256x256xf32>,
    %c0_i32_8 = arith.constant 0 : i32
    %9 = arith.cmpi eq, %arg1, %c0_i32_8 : i32
    %10 = arith.extui %9 : i1 to i32
    %c0_i32_9 = arith.constant 0 : i32
    %11 = arith.cmpi ne, %10, %c0_i32_9 : i32
    scf.if %11 {
      %cst_10 = arith.constant 0.000000e+00 : f32
      %12 = vector.broadcast %cst_10 : f32 to vector<256xf32>
      %c0_i32_11 = arith.constant 0 : i32
      %c256_i32 = arith.constant 256 : i32
      %13 = arith.muli %c0_i32_11, %c256_i32 : i32
      %14 = tpu.assume_multiple %13, 256 : i32
      %c0_12 = arith.constant 0 : index
      %15 = arith.index_cast %14 : i32 to index
      %16 = vector.load %arg6[%c0_12, %15] : memref<256x256xf32, #tpu.memory_space<vmem>>, vector<256x256xf32>
      %17 = math.tanh %16 : vector<256x256xf32>
      %c0_13 = arith.constant 0 : index
      %18 = arith.index_cast %14 : i32 to index
      %19 = vector.load %arg4[%c0_13, %18] : memref<1x256xf32, #tpu.memory_space<vmem>>, vector<1x256xf32>
      %20 = vector.broadcast %19 : vector<1x256xf32> to vector<256x256xf32>
      %21 = arith.mulf %17, %20 : vector<256x256xf32>
      %cst_14 = arith.constant dense<0.000000e+00> : vector<256xf32>
      %22 = vector.multi_reduction <add>, %21, %cst_14 [1] : vector<256x256xf32> to vector<256xf32>
      %23 = arith.addf %12, %22 : vector<256xf32>
      %c1_i32 = arith.constant 1 : i32
      %24 = vector.shape_cast %23 : vector<256xf32> to vector<1x256xf32>
      %c0_15 = arith.constant 0 : index
      %c0_16 = arith.constant 0 : index
      %25 = vector.load %arg5[%c0_15, %c0_16] : memref<1x256xf32, #tpu.memory_space<vmem>>, vector<1x256xf32>
      tpu.vector_store %arg5[%c0_15, %c0_16], %24 {strides = array<i32>} : memref<1x256xf32, #tpu.memory_space<vmem>>, vector<1x256xf32>,
    } else {
    }
    return
  }
  func.func @transform_0(%arg0: i32, %arg1: i32) -> (i32, i32) {
    %c2_i32 = arith.constant 2 : i32
    %c0_i32 = arith.constant 0 : i32
    %0 = arith.cmpi eq, %c2_i32, %c0_i32 : i32
    %c1_i32 = arith.constant 1 : i32
    %1 = arith.select %0, %c1_i32, %c2_i32 : i32
    %2 = arith.remsi %arg0, %1 : i32
    %c0_i32_0 = arith.constant 0 : i32
    %3 = arith.cmpi ne, %2, %c0_i32_0 : i32
    %c0_i32_1 = arith.constant 0 : i32
    %4 = arith.cmpi slt, %2, %c0_i32_1 : i32
    %c0_i32_2 = arith.constant 0 : i32
    %5 = arith.cmpi slt, %1, %c0_i32_2 : i32
    %6 = arith.xori %4, %5 : i1
    %7 = arith.andi %6, %3 : i1
    %8 = arith.addi %2, %1 : i32
    %9 = arith.select %7, %8, %2 : i32
    %c1_i32_3 = arith.constant 1 : i32
    %10 = arith.subi %c1_i32_3, %9 : i32
    %11 = arith.muli %10, %arg1 : i32
    %c0_i32_4 = arith.constant 0 : i32
    %12 = arith.subi %c0_i32_4, %arg1 : i32
    %13 = arith.muli %9, %12 : i32
    %14 = arith.addi %11, %13 : i32
    %c0_i32_5 = arith.constant 0 : i32
    return %arg0, %14 : i32, i32
  }
  func.func @transform_1(%arg0: i32, %arg1: i32) -> (i32, i32) {
    %c2_i32 = arith.constant 2 : i32
    %c0_i32 = arith.constant 0 : i32
    %0 = arith.cmpi eq, %c2_i32, %c0_i32 : i32
    %c1_i32 = arith.constant 1 : i32
    %1 = arith.select %0, %c1_i32, %c2_i32 : i32
    %2 = arith.remsi %arg0, %1 : i32
    %c0_i32_0 = arith.constant 0 : i32
    %3 = arith.cmpi ne, %2, %c0_i32_0 : i32
    %c0_i32_1 = arith.constant 0 : i32
    %4 = arith.cmpi slt, %2, %c0_i32_1 : i32
    %c0_i32_2 = arith.constant 0 : i32
    %5 = arith.cmpi slt, %1, %c0_i32_2 : i32
    %6 = arith.xori %4, %5 : i1
    %7 = arith.andi %6, %3 : i1
    %8 = arith.addi %2, %1 : i32
    %9 = arith.select %7, %8, %2 : i32
    %c1_i32_3 = arith.constant 1 : i32
    %10 = arith.subi %c1_i32_3, %9 : i32
    %11 = arith.muli %10, %arg1 : i32
    %c0_i32_4 = arith.constant 0 : i32
    %12 = arith.subi %c0_i32_4, %arg1 : i32
    %13 = arith.muli %9, %12 : i32
    %14 = arith.addi %11, %13 : i32
    %c0_i32_5 = arith.constant 0 : i32
    %c0_i32_6 = arith.constant 0 : i32
    return %14, %c0_i32_5 : i32, i32
  }
  func.func @transform_2(%arg0: i32, %arg1: i32) -> (i32, i32) {
    %c0_i32 = arith.constant 0 : i32
    %c0_i32_0 = arith.constant 0 : i32
    %c0_i32_1 = arith.constant 0 : i32
    return %c0_i32, %c0_i32_0 : i32, i32
  }
  func.func @transform_3(%arg0: i32, %arg1: i32) -> (i32, i32) {
    %c0_i32 = arith.constant 0 : i32
    %c0_i32_0 = arith.constant 0 : i32
    return %c0_i32, %arg0 : i32, i32
  }
}

module attributes {stable_mosaic.version = 11 : i64} {
  func.func @pairwise_loss_kernel(%arg0: memref<2x64xi32, #tpu.memory_space<vmem>>, %arg1: memref<2x64xi32, #tpu.memory_space<vmem>>, %arg2: memref<2x64xf32, #tpu.memory_space<vmem>>, %arg3: memref<2x64xf32, #tpu.memory_space<vmem>>, %arg4: memref<1x1xf32, #tpu.memory_space<vmem>>, %arg5: memref<2x1xf32, #tpu.memory_space<vmem>>, %arg6: memref<2x1xf32, #tpu.memory_space<vmem>>) attributes {dimension_semantics = [], scalar_prefetch = 0 : i64, scratch_operands = 0 : i64, tpu.core_type = #tpu.core_type<tc>} {
    %c0 = arith.constant 0 : index
    %c0_0 = arith.constant 0 : index
    %0 = vector.load %arg0[%c0, %c0_0] : memref<2x64xi32, #tpu.memory_space<vmem>>, vector<2x64xi32>
    %c0_1 = arith.constant 0 : index
    %c0_2 = arith.constant 0 : index
    %1 = vector.load %arg1[%c0_1, %c0_2] : memref<2x64xi32, #tpu.memory_space<vmem>>, vector<2x64xi32>
    %c0_3 = arith.constant 0 : index
    %c0_4 = arith.constant 0 : index
    %2 = vector.load %arg2[%c0_3, %c0_4] : memref<2x64xf32, #tpu.memory_space<vmem>>, vector<2x64xf32>
    %c0_5 = arith.constant 0 : index
    %c0_6 = arith.constant 0 : index
    %3 = vector.load %arg3[%c0_5, %c0_6] : memref<2x64xf32, #tpu.memory_space<vmem>>, vector<2x64xf32>
    %4 = tpu.iota {dimensions = array<i32: 1>} : vector<2x64xi32>
    %5 = arith.cmpi ne, %0, %1 : vector<2x64xi32>
    %c64_i32 = arith.constant 64 : i32
    %6 = vector.broadcast %c64_i32 : i32 to vector<2x64xi32>
    %7 = arith.select %5, %4, %6 : vector<2x64xi1>, vector<2x64xi32>
    %cst = arith.constant dense<2147483647> : vector<2xi32>
    %8 = vector.multi_reduction <minsi>, %7, %cst [1] : vector<2x64xi32> to vector<2xi32>
    %9 = vector.shape_cast %8 : vector<2xi32> to vector<2x1xi32>
    %c64_i32_7 = arith.constant 64 : i32
    %10 = vector.broadcast %c64_i32_7 : i32 to vector<2x1xi32>
    %11 = arith.cmpi slt, %9, %10 : vector<2x1xi32>
    %c0_i32 = arith.constant 0 : i32
    %12 = vector.broadcast %c0_i32 : i32 to vector<2x64xi32>
    %13 = arith.cmpi eq, %0, %12 : vector<2x64xi32>
    %c64_i32_8 = arith.constant 64 : i32
    %14 = vector.broadcast %c64_i32_8 : i32 to vector<2x64xi32>
    %15 = arith.select %13, %4, %14 : vector<2x64xi1>, vector<2x64xi32>
    %cst_9 = arith.constant dense<2147483647> : vector<2xi32>
    %16 = vector.multi_reduction <minsi>, %15, %cst_9 [1] : vector<2x64xi32> to vector<2xi32>
    %17 = vector.shape_cast %16 : vector<2xi32> to vector<2x1xi32>
    %c0_i32_10 = arith.constant 0 : i32
    %18 = vector.broadcast %c0_i32_10 : i32 to vector<2x64xi32>
    %19 = arith.cmpi eq, %1, %18 : vector<2x64xi32>
    %c64_i32_11 = arith.constant 64 : i32
    %20 = vector.broadcast %c64_i32_11 : i32 to vector<2x64xi32>
    %21 = arith.select %19, %4, %20 : vector<2x64xi1>, vector<2x64xi32>
    %cst_12 = arith.constant dense<2147483647> : vector<2xi32>
    %22 = vector.multi_reduction <minsi>, %21, %cst_12 [1] : vector<2x64xi32> to vector<2xi32>
    %23 = vector.shape_cast %22 : vector<2xi32> to vector<2x1xi32>
    %24 = arith.maxsi %17, %23 : vector<2x1xi32>
    %c64_i32_13 = arith.constant 64 : i32
    %25 = vector.broadcast %c64_i32_13 : i32 to vector<2x1xi32>
    %26 = arith.select %11, %24, %25 : vector<2x1xi1>, vector<2x1xi32>
    %c64_i32_14 = arith.constant 64 : i32
    %c1_i32 = arith.constant 1 : i32
    %27 = arith.subi %c64_i32_14, %c1_i32 : i32
    %28 = vector.broadcast %27 : i32 to vector<2x1xi32>
    %29 = arith.select %11, %9, %28 : vector<2x1xi1>, vector<2x1xi32>
    %30 = arith.select %11, %23, %17 : vector<2x1xi1>, vector<2x1xi32>
    %31 = arith.subf %2, %3 : vector<2x64xf32>
    %cst_15 = arith.constant 0.000000e+00 : f32
    %32 = vector.broadcast %cst_15 : f32 to vector<2x64xf32>
    %33 = arith.minimumf %31, %32 : vector<2x64xf32>
    %34 = math.absf %31 : vector<2x64xf32>
    %cst_16 = arith.constant 0.000000e+00 : f32
    %35 = vector.broadcast %cst_16 : f32 to vector<2x64xf32>
    %36 = arith.subf %35, %34 : vector<2x64xf32>
    %37 = math.exp %36 : vector<2x64xf32>
    %38 = math.log1p %37 : vector<2x64xf32>
    %39 = arith.subf %33, %38 : vector<2x64xf32>
    %40 = vector.broadcast %29 : vector<2x1xi32> to vector<2x64xi32>
    %41 = arith.cmpi sge, %4, %40 : vector<2x64xi32>
    %42 = vector.broadcast %26 : vector<2x1xi32> to vector<2x64xi32>
    %43 = arith.cmpi slt, %4, %42 : vector<2x64xi32>
    %44 = arith.andi %41, %43 : vector<2x64xi1>
    %45 = arith.subi %26, %29 : vector<2x1xi32>
    %c1_i32_17 = arith.constant 1 : i32
    %46 = vector.broadcast %c1_i32_17 : i32 to vector<2x1xi32>
    %47 = arith.maxsi %45, %46 : vector<2x1xi32>
    %48 = arith.sitofp %47 : vector<2x1xi32> to vector<2x1xf32>
    %cst_18 = arith.constant 0.000000e+00 : f32
    %49 = vector.broadcast %cst_18 : f32 to vector<2x64xf32>
    %50 = arith.select %44, %39, %49 : vector<2x64xi1>, vector<2x64xf32>
    %cst_19 = arith.constant dense<0.000000e+00> : vector<2xf32>
    %51 = vector.multi_reduction <add>, %50, %cst_19 [1] : vector<2x64xf32> to vector<2xf32>
    %52 = vector.shape_cast %51 : vector<2xf32> to vector<2x1xf32>
    %cst_20 = arith.constant 0.000000e+00 : f32
    %53 = vector.broadcast %cst_20 : f32 to vector<2x1xf32>
    %54 = arith.subf %53, %52 : vector<2x1xf32>
    %55 = arith.divf %54, %48 : vector<2x1xf32>
    %56 = vector.shape_cast %55 : vector<2x1xf32> to vector<1x2x1xf32>
    %cst_21 = arith.constant dense<0.000000e+00> : vector<1xf32>
    %57 = vector.multi_reduction <add>, %56, %cst_21 [1, 2] : vector<1x2x1xf32> to vector<1xf32>
    %58 = vector.shape_cast %57 : vector<1xf32> to vector<1x1x1xf32>
    %59 = vector.extract %58[0, 0, 0] : f32 from vector<1x1x1xf32>
    %cst_22 = arith.constant 2.000000e+00 : f32
    %60 = arith.divf %59, %cst_22 : f32
    %61 = vector.broadcast %60 : f32 to vector<1x1xf32>
    %c0_23 = arith.constant 0 : index
    %c0_24 = arith.constant 0 : index
    %62 = vector.load %arg4[%c0_23, %c0_24] : memref<1x1xf32, #tpu.memory_space<vmem>>, vector<1x1xf32>
    tpu.vector_store %arg4[%c0_23, %c0_24], %61 {strides = array<i32>} : memref<1x1xf32, #tpu.memory_space<vmem>>, vector<1x1xf32>,
    %c1_i32_25 = arith.constant 1 : i32
    %63 = vector.broadcast %c1_i32_25 : i32 to vector<2x1xi32>
    %64 = arith.subi %17, %63 : vector<2x1xi32>
    %65 = vector.broadcast %64 : vector<2x1xi32> to vector<2x64xi32>
    %66 = arith.cmpi eq, %4, %65 : vector<2x64xi32>
    %cst_26 = arith.constant 0.000000e+00 : f32
    %67 = vector.broadcast %cst_26 : f32 to vector<2x64xf32>
    %68 = arith.select %66, %2, %67 : vector<2x64xi1>, vector<2x64xf32>
    %cst_27 = arith.constant dense<0.000000e+00> : vector<2xf32>
    %69 = vector.multi_reduction <add>, %68, %cst_27 [1] : vector<2x64xf32> to vector<2xf32>
    %70 = vector.shape_cast %69 : vector<2xf32> to vector<2x1xf32>
    %c0_28 = arith.constant 0 : index
    %c0_29 = arith.constant 0 : index
    %71 = vector.load %arg5[%c0_28, %c0_29] : memref<2x1xf32, #tpu.memory_space<vmem>>, vector<2x1xf32>
    tpu.vector_store %arg5[%c0_28, %c0_29], %70 {strides = array<i32>} : memref<2x1xf32, #tpu.memory_space<vmem>>, vector<2x1xf32>,
    %c1_i32_30 = arith.constant 1 : i32
    %72 = vector.broadcast %c1_i32_30 : i32 to vector<2x1xi32>
    %73 = arith.subi %30, %72 : vector<2x1xi32>
    %74 = vector.broadcast %73 : vector<2x1xi32> to vector<2x64xi32>
    %75 = arith.cmpi eq, %4, %74 : vector<2x64xi32>
    %cst_31 = arith.constant 0.000000e+00 : f32
    %76 = vector.broadcast %cst_31 : f32 to vector<2x64xf32>
    %77 = arith.select %75, %3, %76 : vector<2x64xi1>, vector<2x64xf32>
    %cst_32 = arith.constant dense<0.000000e+00> : vector<2xf32>
    %78 = vector.multi_reduction <add>, %77, %cst_32 [1] : vector<2x64xf32> to vector<2xf32>
    %79 = vector.shape_cast %78 : vector<2xf32> to vector<2x1xf32>
    %c0_33 = arith.constant 0 : index
    %c0_34 = arith.constant 0 : index
    %80 = vector.load %arg6[%c0_33, %c0_34] : memref<2x1xf32, #tpu.memory_space<vmem>>, vector<2x1xf32>
    tpu.vector_store %arg6[%c0_33, %c0_34], %79 {strides = array<i32>} : memref<2x1xf32, #tpu.memory_space<vmem>>, vector<2x1xf32>,
    return
  }
}

</mosaic_0001>

<llo_original>
// kernel: squeeze.4
$region0: #{squeeze.4}
  %s0 = inlined_call_operand.vmem [shape: f32[256], index: 0, kind: input, shape index: {}]
  %s1 = inlined_call_operand.vmem [shape: f32[4,64], index: 1, kind: output, shape index: {}]
  $region1: #{squeeze.4} parent=0
    #allocation0 [shape = 'u8[4096]{0}', space=vmem, size = 0x1000, scoped, tag = 'scoped mem for output reshape']
    #allocation1 [shape = 'u8[4096]{0}', space=vmem, size = 0x1000, scoped, tag = 'scoped mem for input reshape']
    %s3 = sshllo.u32 0, 2
    %v4 = vld [vmem:[%s0] sm:%s3]
    %5 = vst [vmem:[#allocation1] sm:%s3] %v4
    %v6 = vld [vmem:[#allocation1] sm:$0x3]
    %vm7 = vcmask 523264
    %8 = vst.msk [vmem:[#allocation0] ss:$2 sm:$0x3] %vm7, %v6
    %v9 = vld [vmem:[#allocation1] sm:$0x3]
    %10 = vrot.lane.b32.xlu0 %v9, 64
    %v11 = vpop.permute.xlu0 %10
    %vm12 = vcmask 523264
    %s13 = scalar_lea.vmem [#allocation0], 1
    %14 = vst.msk [vmem:[%s13] ss:$2 sm:$0x3] %vm12, %v11
    %s16 = sshllo.u32 0, 4
    %v18 = vld [vmem:[#allocation0] sm:%s16]
    %s19 = sshllo.u32 0, 4
    %20 = vst [vmem:[%s1] sm:%s19] %v18

// kernel: reward_model_forward.3
$region0: #{reward_model_forward.3}
  #allocation0 [shape = 'u32[]', space=smem, size = 0x4, offset = 0x4, fixed_abs, tag = 'smem constant byte address 0x4 - core index']
  #allocation1 [shape = 'u32[144,128]{1,0:T(1,128)}', space=vmem, size = 0x12000, scoped, tag = 'internal scratch']
  %s0 = inlined_call_operand.vmem [shape: s32[2,64], index: 0, kind: input, shape index: {}]
  %s1 = inlined_call_operand.vmem [shape: s32[2,64], index: 1, kind: input, shape index: {}]
  %s2 = inlined_call_operand.vmem [shape: f32[2,64], index: 2, kind: input, shape index: {}]
  %s3 = inlined_call_operand.vmem [shape: f32[2,64], index: 3, kind: input, shape index: {}]
  %s4 = inlined_call_operand.hbm [shape: f32[1,1], index: 4, kind: output, shape index: {0}]
  %s5 = inlined_call_operand.vmem [shape: f32[2,1], index: 5, kind: output, shape index: {1}]
  %s6 = inlined_call_operand.vmem [shape: f32[2,1], index: 6, kind: output, shape index: {2}]
  %7 = xla_tuple %s4, %s5, %s6
  %s8 = sld [smem:[#allocation0]]
  $region42: #{reward_model_forward.3} parent=0
    _
  %s10 = ssub.s32 1, %s8
  %s11 = scalar_select 0, %s10, %s8
  $region1: #{reward_model_forward.3} parent=0
    #allocation2 [shape = 'u8[512]{0}', space=vmem, size = 0x400, scoped, tag = 'output window, operand 0, single buffered']
    #allocation3 [shape = 's32[1]{0}', space=sflag, size = 0x4, scoped, tag = 'scoped memory for reward_model_forward.3']
    %12 = vsyncpa [#allocation3], 0
    // Predicated region
    $region2: #{reward_model_forward.3} parent=1 // pred_check
      _
    $region3: #{reward_model_forward.3} parent=1 // pred_check_branch
      %14 = sbr.rel (0) target = $region5
    $region4: #{reward_model_forward.3} parent=1 // pred_region
      _
    $region5: #{reward_model_forward.3} parent=1 // pred_fallthru
      _
    // Predicated region
    $region6: #{reward_model_forward.3} parent=1 // pred_check
      _
    $region7: #{reward_model_forward.3} parent=1 // pred_check_branch
      %16 = sbr.rel (0) target = $region9
    $region8: #{reward_model_forward.3} parent=1 // pred_region
      _
    $region9: #{reward_model_forward.3} parent=1 // pred_fallthru
      _
    // Predicated region
    $region10: #{reward_model_forward.3} parent=1 // pred_check
      _
    $region11: #{reward_model_forward.3} parent=1 // pred_check_branch
      %18 = sbr.rel (0) target = $region13
    $region12: #{reward_model_forward.3} parent=1 // pred_region
      _
    $region13: #{reward_model_forward.3} parent=1 // pred_fallthru
      _
    // Predicated region
    $region14: #{reward_model_forward.3} parent=1 // pred_check
      _
    $region15: #{reward_model_forward.3} parent=1 // pred_check_branch
      %20 = sbr.rel (0) target = $region17
    $region16: #{reward_model_forward.3} parent=1 // pred_region
      _
    $region17: #{reward_model_forward.3} parent=1 // pred_fallthru
      _
    %v21 = vld [vmem:[%s0] sm:$0x3]
    %v22 = vld [vmem:[%s1] sm:$0x3]
    %v23 = vld [vmem:[%s2] sm:$0x3]
    %v24 = vld [vmem:[%s3] sm:$0x3]
    %v25 = vlaneseq
    %v26 = vand.u32 %v25, 127
    %vm27 = vcmp.ne.s32.totalorder %v21, %v22
    %v28 = vsel %vm27, %v26, 64
    %vm29 = vcmask 517120
    %v30 = vsel %vm29, %v28, 2147483647
    %v31 = vand.u32 %v30, 65535
    %v32 = vshra.s32 %v30, 16
    %v33 = vcvt.s32.f32 %v31
    %v34 = vcvt.s32.f32 %v32
    %35 = vmin.xlane.f32.xlu0 %v34
    %v36 = vpop.xlane.xlu0 %35
    %vm37 = vcmp.eq.f32.partialorder %v34, %v36
    %v38 = vsel %vm37, %v33, inf
    %39 = vmin.xlane.f32.xlu0 %v38
    %v40 = vpop.xlane.xlu0 %39
    %v41 = vcvt.f32.s32 %v40
    %v42 = vcvt.f32.s32 %v36
    %v43 = vshll.u32 %v42, 16
    %v44 = vadd.s32 %v43, %v41
    %vm45 = vcmp.lt.s32.totalorder %v44, 64
    %vm46 = vcmp.eq.s32.totalorder %v21, 0
    %v47 = vsel %vm46, %v26, 64
    %v48 = vsel %vm29, %v47, 2147483647
    %v49 = vand.u32 %v48, 65535
    %v50 = vshra.s32 %v48, 16
    %v51 = vcvt.s32.f32 %v49
    %v52 = vcvt.s32.f32 %v50
    %53 = vmin.xlane.f32.xlu0 %v52
    %v54 = vpop.xlane.xlu0 %53
    %vm55 = vcmp.eq.f32.partialorder %v52, %v54
    %v56 = vsel %vm55, %v51, inf
    %57 = vmin.xlane.f32.xlu0 %v56
    %v58 = vpop.xlane.xlu0 %57
    %v59 = vcvt.f32.s32 %v58
    %v60 = vcvt.f32.s32 %v54
    %v61 = vshll.u32 %v60, 16
    %v62 = vadd.s32 %v61, %v59
    %vm63 = vcmp.eq.s32.totalorder %v22, 0
    %v64 = vsel %vm63, %v26, 64
    %v65 = vsel %vm29, %v64, 2147483647
    %v66 = vand.u32 %v65, 65535
    %v67 = vshra.s32 %v65, 16
    %v68 = vcvt.s32.f32 %v66
    %v69 = vcvt.s32.f32 %v67
    %70 = vmin.xlane.f32.xlu0 %v69
    %v71 = vpop.xlane.xlu0 %70
    %vm72 = vcmp.eq.f32.partialorder %v69, %v71
    %v73 = vsel %vm72, %v68, inf
    %74 = vmin.xlane.f32.xlu0 %v73
    %v75 = vpop.xlane.xlu0 %74
    %v76 = vcvt.f32.s32 %v75
    %v77 = vcvt.f32.s32 %v71
    %v78 = vshll.u32 %v77, 16
    %v79 = vadd.s32 %v78, %v76
    %vm80 = vcmp.gt.s32.totalorder %v62, %v79
    %v81 = vsel %vm80, %v62, %v79
    %v82 = vsel %vm45, %v81, 64
    %v83 = vsel %vm45, %v44, 63
    %v84 = vsel %vm45, %v79, %v62
    %v85 = vsub.f32 %v23, %v24
    %v86 = vmin.f32 %v85, 0.0
    %v87 = vand.u32 2147483647, %v85
    %v88 = vsub.f32 0.0, %v87
    %v89 = vmul.f32 %v88, 1.442695
    %v90 = vpow.pop %v89
    %v91 = vadd.f32 %v90, 1.0
    %v92 = vlog2.pop %v91
    %v93 = vmul.f32 %v92, 0.6931472
    %v94 = vmul.f32 -0.5, %v90
    %v95 = vadd.f32 %v94, 1.0
    %v96 = vmul.f32 %v95, %v90
    %v97 = vand.u32 2147483647, %v90
    %vm98 = vcmp.lt.f32.partialorder %v97, 0.0004427343
    %v99 = vsel %vm98, %v96, %v93
    %v100 = vsub.f32 %v86, %v99
    %vm101 = vcmp.ge.s32.totalorder %v26, %v83
    %vm102 = vcmp.lt.s32.totalorder %v26, %v82
    %vm103 = vmand %vm101, %vm102
    %v104 = vsub.s32 %v82, %v83
    %vm105 = vcmp.gt.s32.totalorder %v104, 1
    %v106 = vsel %vm105, %v104, 1
    %v107 = vcvt.s32.f32 %v106
    %v108 = vsel %vm103, %v100, 0.0
    %v109 = vsel %vm29, %v108, 0.0
    %110 = vadd.xlane.f32.xlu0 %v109
    %v111 = vpop.xlane.xlu0 %110
    %v112 = vsub.f32 0.0, %v111
    %v113 = vrcp.pop %v107
    %v114 = vmul.f32 %v112, %v113
    %vm115 = vcmask 1024
    %v116 = vsel %vm115, %v114, 0.0
    %117 = vadd.xlane.f32.xlu0 %v116
    %v118 = vpop.xlane.xlu0 %117
    %v119 = vrot.slane %v118, 4
    %v120 = vadd.f32 %v118, %v119
    %v121 = vrot.slane %v120, 2
    %v122 = vadd.f32 %v120, %v121
    %v123 = vrot.slane %v122, 1
    %v124 = vadd.f32 %v122, %v123
    %s125 = vtos %v124
    %v126 = vrcp.pop 2.0
    %s127 = vtos %v126
    %s128 = smul.f32 %s125, %s127
    %v129 = vstv %s128
    %vm130 = vcmask 0
    %131 = vst.msk [vmem:[#allocation2] sm:$0x1] %vm130, %v129
    %v132 = vsub.s32 %v62, 1
    %vm133 = vcmp.eq.s32.totalorder %v26, %v132
    %v134 = vsel %vm133, %v23, 0.0
    %v135 = vsel %vm29, %v134, 0.0
    %136 = vadd.xlane.f32.xlu0 %v135
    %v137 = vpop.xlane.xlu0 %136
    %138 = vst.msk [vmem:[%s5] sm:$0x3] %vm115, %v137
    %v139 = vsub.s32 %v84, 1
    %vm140 = vcmp.eq.s32.totalorder %v26, %v139
    %v141 = vsel %vm140, %v24, 0.0
    %v142 = vsel %vm29, %v141, 0.0
    %143 = vadd.xlane.f32.xlu0 %v142
    %v144 = vpop.xlane.xlu0 %143
    %145 = vst.msk [vmem:[%s6] sm:$0x3] %vm115, %v144
    // Predicated region
    $region18: #{reward_model_forward.3} parent=1 // pred_check
      _
    $region19: #{reward_model_forward.3} parent=1 // pred_check_branch
      %147 = sbr.rel (0) target = $region21
    $region20: #{reward_model_forward.3} parent=1 // pred_region
      %s149 = ssub.s32 16, 16
      %150 = vsyncadd [#allocation3], %s149
      %s152 = sshll.u32 [#allocation2], 4
      %s153 = int_to_ptr.vmem [resolvable:$true] %s152
      %155 = dma.vmem_to_hbm [thread:$0]  %s153, 16, %s4, [#allocation3]
    $region21: #{reward_model_forward.3} parent=1 // pred_fallthru
      _
    // Predicated region
    $region22: #{reward_model_forward.3} parent=1 // pred_check
      _
    $region23: #{reward_model_forward.3} parent=1 // pred_check_branch
      %157 = sbr.rel (0) target = $region25
    $region24: #{reward_model_forward.3} parent=1 // pred_region
      _
    $region25: #{reward_model_forward.3} parent=1 // pred_fallthru
      _
    // Predicated region
    $region26: #{reward_model_forward.3} parent=1 // pred_check
      _
    $region27: #{reward_model_forward.3} parent=1 // pred_check_branch
      %159 = sbr.rel (0) target = $region29
    $region28: #{reward_model_forward.3} parent=1 // pred_region
      _
    $region29: #{reward_model_forward.3} parent=1 // pred_fallthru
      _
    // Predicated region
    $region30: #{reward_model_forward.3} parent=1 // pred_check
      _
    $region31: #{reward_model_forward.3} parent=1 // pred_check_branch
      %161 = sbr.rel (0) target = $region33
    $region32: #{reward_model_forward.3} parent=1 // pred_region
      %162 = dma.done [#allocation3], 16
    $region33: #{reward_model_forward.3} parent=1 // pred_fallthru
      _
    // Predicated region
    $region34: #{reward_model_forward.3} parent=1 // pred_check
      _
    $region35: #{reward_model_forward.3} parent=1 // pred_check_branch
      %164 = sbr.rel (0) target = $region37
    $region36: #{reward_model_forward.3} parent=1 // pred_region
      _
    $region37: #{reward_model_forward.3} parent=1 // pred_fallthru
      _
    // Predicated region
    $region38: #{reward_model_forward.3} parent=1 // pred_check
      _
    $region39: #{reward_model_forward.3} parent=1 // pred_check_branch
      %166 = sbr.rel (0) target = $region41
    $region40: #{reward_model_forward.3} parent=1 // pred_region
      _
    $region41: #{reward_model_forward.3} parent=1 // pred_fallthru
      _
    %167 = vsyncpa [#allocation3], 1

// kernel: reward_model_forward.2
$region0: #{reward_model_forward.2}
  #allocation0 [shape = 'u32[]', space=smem, size = 0x4, offset = 0x4, fixed_abs, tag = 'smem constant byte address 0x4 - core index']
  #allocation1 [shape = 'u32[144,128]{1,0:T(1,128)}', space=vmem, size = 0x12000, scoped, tag = 'internal scratch']
  #allocation2 [shape = 'f32[256,256]{1,0:T(8,128)}', space=vmem, size = 0x40000, scoped, tag = 'scratch operand']
  %s0 = inlined_call_operand.vmem [shape: bf16[256,256], index: 0, kind: input, shape index: {}]
  %s1 = inlined_call_operand.vmem [shape: bf16[256,256], index: 1, kind: input, shape index: {}]
  %s2 = inlined_call_operand.vmem [shape: f32[1,256], index: 2, kind: input, shape index: {}]
  %s3 = inlined_call_operand.vmem [shape: f32[1,256], index: 3, kind: output, shape index: {}]
  %s4 = sld [smem:[#allocation0]]
  $region30: #{reward_model_forward.2} parent=0
    _
  %s6 = ssub.s32 1, %s4
  %s7 = scalar_select 0, %s6, %s4
  // Predicated region
  $region2: #{reward_model_forward.2} parent=0 // pred_check
    _
  $region3: #{reward_model_forward.2} parent=0 // pred_check_branch
    %9 = sbr.rel (0) target = $region5
  $region4: #{reward_model_forward.2} parent=0 // pred_region
    %s10 = ssub.s32 0, 0
    %s11 = ssub.s32 0, 0
    %p12 = scmp.ne.s32.totalorder 0, 0
    %p13 = scmp.lt.s32.totalorder 0, 0
    %p14 = pnand %p13, %p12
    %p15 = pneg %p14
    %s16 = sadd.s32 0, 2
    %s17 = scalar_select %p15, %s16, 0
    %s18 = ssub.s32 1, %s17
    %s19 = smul.u32 %s18, 0
    %s20 = ssub.s32 0, 0
    %s21 = smul.u32 %s17, %s20
    %s22 = sadd.s32 %s19, %s21
    %s23 = smul.u32 2, %s22
    %p24 = scmp.lt.s32.totalorder %s23, 1
    %s25 = scalar_select %p24, %s23, 1
    %s26 = smul.addr %s25, 4
    %s27 = scalar_lea.vmem %s0, %s26
    %s28 = ssub.s32 0, 0
    %s29 = ssub.s32 0, 0
    %p30 = scmp.ne.s32.totalorder 0, 0
    %p31 = scmp.lt.s32.totalorder 0, 0
    %p32 = pnand %p31, %p30
    %p33 = pneg %p32
    %s34 = sadd.s32 0, 2
    %s35 = scalar_select %p33, %s34, 0
    %s36 = ssub.s32 1, %s35
    %s37 = smul.u32 %s36, 0
    %s38 = ssub.s32 0, 0
    %s39 = smul.u32 %s35, %s38
    %s40 = sadd.s32 %s37, %s39
    %s41 = smul.u32 2, %s40
  $region5: #{reward_model_forward.2} parent=0 // pred_fallthru
    _
  // Predicated region
  $region6: #{reward_model_forward.2} parent=0 // pred_check
    _
  $region7: #{reward_model_forward.2} parent=0 // pred_check_branch
    %43 = sbr.rel (0) target = $region9
  $region8: #{reward_model_forward.2} parent=0 // pred_region
    %s44 = ssub.s32 0, 0
    %s45 = ssub.s32 0, 0
    %p46 = scmp.ne.s32.totalorder 0, 0
    %p47 = scmp.lt.s32.totalorder 0, 0
    %p48 = pnand %p47, %p46
    %p49 = pneg %p48
    %s50 = sadd.s32 0, 2
    %s51 = scalar_select %p49, %s50, 0
    %s52 = ssub.s32 1, %s51
    %s53 = smul.u32 %s52, 0
    %s54 = ssub.s32 0, 0
    %s55 = smul.u32 %s51, %s54
    %s56 = sadd.s32 %s53, %s55
    %s57 = smul.u32 32, %s56
    %p58 = scmp.lt.s32.totalorder %s57, 31
    %s59 = scalar_select %p58, %s57, 31
    %s60 = smul.addr %s59, 2
    %s61 = smul.addr %s60, 4
    %s62 = scalar_lea.vmem %s1, %s61
    %s63 = ssub.s32 0, 0
    %s64 = ssub.s32 0, 0
    %p65 = scmp.ne.s32.totalorder 0, 0
    %p66 = scmp.lt.s32.totalorder 0, 0
    %p67 = pnand %p66, %p65
    %p68 = pneg %p67
    %s69 = sadd.s32 0, 2
    %s70 = scalar_select %p68, %s69, 0
    %s71 = ssub.s32 1, %s70
    %s72 = smul.u32 %s71, 0
    %s73 = ssub.s32 0, 0
    %s74 = smul.u32 %s70, %s73
    %s75 = sadd.s32 %s72, %s74
    %s76 = smul.u32 32, %s75
  $region9: #{reward_model_forward.2} parent=0 // pred_fallthru
    _
  // Predicated region
  $region10: #{reward_model_forward.2} parent=0 // pred_check
    _
  $region11: #{reward_model_forward.2} parent=0 // pred_check_branch
    %78 = sbr.rel (0) target = $region13
  $region12: #{reward_model_forward.2} parent=0 // pred_region
    _
  $region13: #{reward_model_forward.2} parent=0 // pred_fallthru
    _
  %s79 = ssub.s32 0, 0
  %s80 = ssub.s32 0, 0
  %p81 = scmp.ne.s32.totalorder 0, 0
  %p82 = scmp.lt.s32.totalorder 0, 0
  %p83 = pnand %p82, %p81
  %p84 = pneg %p83
  %s85 = sadd.s32 0, 2
  %s86 = scalar_select %p84, %s85, 0
  %s87 = ssub.s32 1, %s86
  %s88 = smul.u32 %s87, 0
  %s89 = ssub.s32 0, 0
  %s90 = smul.u32 %s86, %s89
  %s91 = sadd.s32 %s88, %s90
  %s92 = smul.u32 2, %s91
  %p93 = scmp.lt.s32.totalorder %s92, 1
  %s94 = scalar_select %p93, %s92, 1
  %s95 = smul.addr %s94, 4
  %s96 = scalar_lea.vmem %s0, %s95
  %s97 = ssub.s32 0, 0
  %s98 = ssub.s32 0, 0
  %p99 = scmp.ne.s32.totalorder 0, 0
  %p100 = scmp.lt.s32.totalorder 0, 0
  %p101 = pnand %p100, %p99
  %p102 = pneg %p101
  %s103 = sadd.s32 0, 2
  %s104 = scalar_select %p102, %s103, 0
  %s105 = ssub.s32 1, %s104
  %s106 = smul.u32 %s105, 0
  %s107 = ssub.s32 0, 0
  %s108 = smul.u32 %s104, %s107
  %s109 = sadd.s32 %s106, %s108
  %s110 = smul.u32 32, %s109
  %p111 = scmp.lt.s32.totalorder %s110, 31
  %s112 = scalar_select %p111, %s110, 31
  %s113 = smul.addr %s112, 2
  %s114 = smul.addr %s113, 4
  %s115 = scalar_lea.vmem %s1, %s114
  %s116 = ssub.s32 0, 0
  %s117 = ssub.s32 0, 0
  %p118 = scmp.ne.s32.totalorder 0, 0
  %p119 = scmp.lt.s32.totalorder 0, 0
  %p120 = pnand %p119, %p118
  %p121 = pneg %p120
  %s122 = sadd.s32 0, 2
  %s123 = scalar_select %p121, %s122, 0
  %s124 = ssub.s32 1, %s123
  %s125 = smul.u32 %s124, 0
  %s126 = ssub.s32 0, 0
  %s127 = smul.u32 %s123, %s126
  %s128 = sadd.s32 %s125, %s127
  %s129 = smul.u32 2, %s128
  %p130 = scmp.lt.s32.totalorder %s129, 1
  %s131 = scalar_select %p130, %s129, 1
  %s132 = smul.addr %s131, 4
  %s133 = scalar_lea.vmem %s0, %s132
  %s134 = ssub.s32 0, 0
  %s135 = ssub.s32 0, 0
  %p136 = scmp.ne.s32.totalorder 0, 0
  %p137 = scmp.lt.s32.totalorder 0, 0
  %p138 = pnand %p137, %p136
  %p139 = pneg %p138
  %s140 = sadd.s32 0, 2
  %s141 = scalar_select %p139, %s140, 0
  %s142 = ssub.s32 1, %s141
  %s143 = smul.u32 %s142, 0
  %s144 = ssub.s32 0, 0
  %s145 = smul.u32 %s141, %s144
  %s146 = sadd.s32 %s143, %s145
  %s147 = smul.u32 2, %s146
  %s148 = ssub.s32 0, 0
  %s149 = ssub.s32 0, 0
  %p150 = scmp.ne.s32.totalorder 0, 0
  %p151 = scmp.lt.s32.totalorder 0, 0
  %p152 = pnand %p151, %p150
  %p153 = pneg %p152
  %s154 = sadd.s32 0, 2
  %s155 = scalar_select %p153, %s154, 0
  %s156 = ssub.s32 1, %s155
  %s157 = smul.u32 %s156, 0
  %s158 = ssub.s32 0, 0
  %s159 = smul.u32 %s155, %s158
  %s160 = sadd.s32 %s157, %s159
  %s161 = smul.u32 32, %s160
  %p162 = scmp.lt.s32.totalorder %s161, 31
  %s163 = scalar_select %p162, %s161, 31
  %s164 = smul.addr %s163, 2
  %s165 = smul.addr %s164, 4
  %s166 = scalar_lea.vmem %s1, %s165
  %s167 = ssub.s32 0, 0
  %s168 = ssub.s32 0, 0
  %p169 = scmp.ne.s32.totalorder 0, 0
  %p170 = scmp.lt.s32.totalorder 0, 0
  %p171 = pnand %p170, %p169
  %p172 = pneg %p171
  %s173 = sadd.s32 0, 2
  %s174 = scalar_select %p172, %s173, 0
  %s175 = ssub.s32 1, %s174
  %s176 = smul.u32 %s175, 0
  %s177 = ssub.s32 0, 0
  %s178 = smul.u32 %s174, %s177
  %s179 = sadd.s32 %s176, %s178
  %s180 = smul.u32 32, %s179
  %p181 = scmp.eq.s32.totalorder 0, 0
  // Predicated region
  $region14: #{reward_model_forward.2} parent=0 // pred_check
    %p182 = pneg %p181
  $region15: #{reward_model_forward.2} parent=0 // pred_check_branch
    %184 = sbr.rel (%p182) target = $region17
  $region16: #{reward_model_forward.2} parent=0 // pred_region
    %185 = vst [vmem:[#allocation2] sm:$0xff] 0.0
    %186 = vst [vmem:[#allocation2 + $0x8] sm:$0xff] 0.0
    %187 = vst [vmem:[#allocation2 + $0x10] sm:$0xff] 0.0
    %188 = vst [vmem:[#allocation2 + $0x18] sm:$0xff] 0.0
    %189 = vst [vmem:[#allocation2 + $0x20] sm:$0xff] 0.0
    %190 = vst [vmem:[#allocation2 + $0x28] sm:$0xff] 0.0
    %191 = vst [vmem:[#allocation2 + $0x30] sm:$0xff] 0.0
    %192 = vst [vmem:[#allocation2 + $0x38] sm:$0xff] 0.0
    %193 = vst [vmem:[#allocation2 + $0x40] sm:$0xff] 0.0
    %194 = vst [vmem:[#allocation2 + $0x48] sm:$0xff] 0.0
    %195 = vst [vmem:[#allocation2 + $0x50] sm:$0xff] 0.0
    %196 = vst [vmem:[#allocation2 + $0x58] sm:$0xff] 0.0
    %197 = vst [vmem:[#allocation2 + $0x60] sm:$0xff] 0.0
    %198 = vst [vmem:[#allocation2 + $0x68] sm:$0xff] 0.0
    %199 = vst [vmem:[#allocation2 + $0x70] sm:$0xff] 0.0
    %200 = vst [vmem:[#allocation2 + $0x78] sm:$0xff] 0.0
    %201 = vst [vmem:[#allocation2 + $0x80] sm:$0xff] 0.0
    %202 = vst [vmem:[#allocation2 + $0x88] sm:$0xff] 0.0
    %203 = vst [vmem:[#allocation2 + $0x90] sm:$0xff] 0.0
    %204 = vst [vmem:[#allocation2 + $0x98] sm:$0xff] 0.0
    %205 = vst [vmem:[#allocation2 + $0xa0] sm:$0xff] 0.0
    %206 = vst [vmem:[#allocation2 + $0xa8] sm:$0xff] 0.0
    %207 = vst [vmem:[#allocation2 + $0xb0] sm:$0xff] 0.0
    %208 = vst [vmem:[#allocation2 + $0xb8] sm:$0xff] 0.0
    %209 = vst [vmem:[#allocation2 + $0xc0] sm:$0xff] 0.0
    %210 = vst [vmem:[#allocation2 + $0xc8] sm:$0xff] 0.0
    %211 = vst [vmem:[#allocation2 + $0xd0] sm:$0xff] 0.0
    %212 = vst [vmem:[#allocation2 + $0xd8] sm:$0xff] 0.0
    %213 = vst [vmem:[#allocation2 + $0xe0] sm:$0xff] 0.0
    %214 = vst [vmem:[#allocation2 + $0xe8] sm:$0xff] 0.0
    %215 = vst [vmem:[#allocation2 + $0xf0] sm:$0xff] 0.0
    %216 = vst [vmem:[#allocation2 + $0xf8] sm:$0xff] 0.0
    %217 = vst [vmem:[#allocation2 + $0x100] sm:$0xff] 0.0
    %218 = vst [vmem:[#allocation2 + $0x108] sm:$0xff] 0.0
    %219 = vst [vmem:[#allocation2 + $0x110] sm:$0xff] 0.0
    %220 = vst [vmem:[#allocation2 + $0x118] sm:$0xff] 0.0
    %221 = vst [vmem:[#allocation2 + $0x120] sm:$0xff] 0.0
    %222 = vst [vmem:[#allocation2 + $0x128] sm:$0xff] 0.0
    %223 = vst [vmem:[#allocation2 + $0x130] sm:$0xff] 0.0
    %224 = vst [vmem:[#allocation2 + $0x138] sm:$0xff] 0.0
    %225 = vst [vmem:[#allocation2 + $0x140] sm:$0xff] 0.0
    %226 = vst [vmem:[#allocation2 + $0x148] sm:$0xff] 0.0
    %227 = vst [vmem:[#allocation2 + $0x150] sm:$0xff] 0.0
    %228 = vst [vmem:[#allocation2 + $0x158] sm:$0xff] 0.0
    %229 = vst [vmem:[#allocation2 + $0x160] sm:$0xff] 0.0
    %230 = vst [vmem:[#allocation2 + $0x168] sm:$0xff] 0.0
    %231 = vst [vmem:[#allocation2 + $0x170] sm:$0xff] 0.0
    %232 = vst [vmem:[#allocation2 + $0x178] sm:$0xff] 0.0
    %233 = vst [vmem:[#allocation2 + $0x180] sm:$0xff] 0.0
    %234 = vst [vmem:[#allocation2 + $0x188] sm:$0xff] 0.0
    %235 = vst [vmem:[#allocation2 + $0x190] sm:$0xff] 0.0
    %236 = vst [vmem:[#allocation2 + $0x198] sm:$0xff] 0.0
    %237 = vst [vmem:[#allocation2 + $0x1a0] sm:$0xff] 0.0
    %238 = vst [vmem:[#allocation2 + $0x1a8] sm:$0xff] 0.0
    %239 = vst [vmem:[#allocation2 + $0x1b0] sm:$0xff] 0.0
    %240 = vst [vmem:[#allocation2 + $0x1b8] sm:$0xff] 0.0
    %241 = vst [vmem:[#allocation2 + $0x1c0] sm:$0xff] 0.0
    %242 = vst [vmem:[#allocation2 + $0x1c8] sm:$0xff] 0.0
    %243 = vst [vmem:[#allocation2 + $0x1d0] sm:$0xff] 0.0
    %244 = vst [vmem:[#allocation2 + $0x1d8] sm:$0xff] 0.0
    %245 = vst [vmem:[#allocation2 + $0x1e0] sm:$0xff] 0.0
    %246 = vst [vmem:[#allocation2 + $0x1e8] sm:$0xff] 0.0
    %247 = vst [vmem:[#allocation2 + $0x1f0] sm:$0xff] 0.0
    %248 = vst [vmem:[#allocation2 + $0x1f8] sm:$0xff] 0.0
  $region17: #{reward_model_forward.2} parent=0 // pred_fallthru
    _
  %v249 = vld [vmem:[#allocation2] sm:$0xff]
  %v250 = vld [vmem:[#allocation2 + $0x8] sm:$0xff]
  %v251 = vld [vmem:[#allocation2 + $0x10] sm:$0xff]
  %v252 = vld [vmem:[#allocation2 + $0x18] sm:$0xff]
  %v253 = vld [vmem:[#allocation2 + $0x20] sm:$0xff]
  %v254 = vld [vmem:[#allocation2 + $0x28] sm:$0xff]
  %v255 = vld [vmem:[#allocation2 + $0x30] sm:$0xff]
  %v256 = vld [vmem:[#allocation2 + $0x38] sm:$0xff]
  %v257 = vld [vmem:[#allocation2 + $0x40] sm:$0xff]
  %v258 = vld [vmem:[#allocation2 + $0x48] sm:$0xff]
  %v259 = vld [vmem:[#allocation2 + $0x50] sm:$0xff]
  %v260 = vld [vmem:[#allocation2 + $0x58] sm:$0xff]
  %v261 = vld [vmem:[#allocation2 + $0x60] sm:$0xff]
  %v262 = vld [vmem:[#allocation2 + $0x68] sm:$0xff]
  %v263 = vld [vmem:[#allocation2 + $0x70] sm:$0xff]
  %v264 = vld [vmem:[#allocation2 + $0x78] sm:$0xff]
  %v265 = vld [vmem:[#allocation2 + $0x80] sm:$0xff]
  %v266 = vld [vmem:[#allocation2 + $0x88] sm:$0xff]
  %v267 = vld [vmem:[#allocation2 + $0x90] sm:$0xff]
  %v268 = vld [vmem:[#allocation2 + $0x98] sm:$0xff]
  %v269 = vld [vmem:[#allocation2 + $0xa0] sm:$0xff]
  %v270 = vld [vmem:[#allocation2 + $0xa8] sm:$0xff]
  %v271 = vld [vmem:[#allocation2 + $0xb0] sm:$0xff]
  %v272 = vld [vmem:[#allocation2 + $0xb8] sm:$0xff]
  %v273 = vld [vmem:[#allocation2 + $0xc0] sm:$0xff]
  %v274 = vld [vmem:[#allocation2 + $0xc8] sm:$0xff]
  %v275 = vld [vmem:[#allocation2 + $0xd0] sm:$0xff]
  %v276 = vld [vmem:[#allocation2 + $0xd8] sm:$0xff]
  %v277 = vld [vmem:[#allocation2 + $0xe0] sm:$0xff]
  %v278 = vld [vmem:[#allocation2 + $0xe8] sm:$0xff]
  %v279 = vld [vmem:[#allocation2 + $0xf0] sm:$0xff]
  %v280 = vld [vmem:[#allocation2 + $0xf8] sm:$0xff]
  %v281 = vld [vmem:[#allocation2 + $0x100] sm:$0xff]
  %v282 = vld [vmem:[#allocation2 + $0x108] sm:$0xff]
  %v283 = vld [vmem:[#allocation2 + $0x110] sm:$0xff]
  %v284 = vld [vmem:[#allocation2 + $0x118] sm:$0xff]
  %v285 = vld [vmem:[#allocation2 + $0x120] sm:$0xff]
  %v286 = vld [vmem:[#allocation2 + $0x128] sm:$0xff]
  %v287 = vld [vmem:[#allocation2 + $0x130] sm:$0xff]
  %v288 = vld [vmem:[#allocation2 + $0x138] sm:$0xff]
  %v289 = vld [vmem:[#allocation2 + $0x140] sm:$0xff]
  %v290 = vld [vmem:[#allocation2 + $0x148] sm:$0xff]
  %v291 = vld [vmem:[#allocation2 + $0x150] sm:$0xff]
  %v292 = vld [vmem:[#allocation2 + $0x158] sm:$0xff]
  %v293 = vld [vmem:[#allocation2 + $0x160] sm:$0xff]
  %v294 = vld [vmem:[#allocation2 + $0x168] sm:$0xff]
  %v295 = vld [vmem:[#allocation2 + $0x170] sm:$0xff]
  %v296 = vld [vmem:[#allocation2 + $0x178] sm:$0xff]
  %v297 = vld [vmem:[#allocation2 + $0x180] sm:$0xff]
  %v298 = vld [vmem:[#allocation2 + $0x188] sm:$0xff]
  %v299 = vld [vmem:[#allocation2 + $0x190] sm:$0xff]
  %v300 = vld [vmem:[#allocation2 + $0x198] sm:$0xff]
  %v301 = vld [vmem:[#allocation2 + $0x1a0] sm:$0xff]
  %v302 = vld [vmem:[#allocation2 + $0x1a8] sm:$0xff]
  %v303 = vld [vmem:[#allocation2 + $0x1b0] sm:$0xff]
  %v304 = vld [vmem:[#allocation2 + $0x1b8] sm:$0xff]
  %v305 = vld [vmem:[#allocation2 + $0x1c0] sm:$0xff]
  %v306 = vld [vmem:[#allocation2 + $0x1c8] sm:$0xff]
  %v307 = vld [vmem:[#allocation2 + $0x1d0] sm:$0xff]
  %v308 = vld [vmem:[#allocation2 + $0x1d8] sm:$0xff]
  %v309 = vld [vmem:[#allocation2 + $0x1e0] sm:$0xff]
  %v310 = vld [vmem:[#allocation2 + $0x1e8] sm:$0xff]
  %v311 = vld [vmem:[#allocation2 + $0x1f0] sm:$0xff]
  %v312 = vld [vmem:[#allocation2 + $0x1f8] sm:$0xff]
  %v313 = vld [vmem:[%s133] sm:$0xff]
  %v314 = vld [vmem:[%s133 + $0x8] sm:$0xff]
  %v315 = vld [vmem:[%s133 + $0x10] sm:$0xff]
  %v316 = vld [vmem:[%s133 + $0x18] sm:$0xff]
  %v317 = vld [vmem:[%s133 + $0x20] sm:$0xff]
  %v318 = vld [vmem:[%s133 + $0x28] sm:$0xff]
  %v319 = vld [vmem:[%s133 + $0x30] sm:$0xff]
  %v320 = vld [vmem:[%s133 + $0x38] sm:$0xff]
  %v321 = vld [vmem:[%s133 + $0x40] sm:$0xff]
  %v322 = vld [vmem:[%s133 + $0x48] sm:$0xff]
  %v323 = vld [vmem:[%s133 + $0x50] sm:$0xff]
  %v324 = vld [vmem:[%s133 + $0x58] sm:$0xff]
  %v325 = vld [vmem:[%s133 + $0x60] sm:$0xff]
  %v326 = vld [vmem:[%s133 + $0x68] sm:$0xff]
  %v327 = vld [vmem:[%s133 + $0x70] sm:$0xff]
  %v328 = vld [vmem:[%s133 + $0x78] sm:$0xff]
  %v329 = vld [vmem:[%s133 + $0x80] sm:$0xff]
  %v330 = vld [vmem:[%s133 + $0x88] sm:$0xff]
  %v331 = vld [vmem:[%s133 + $0x90] sm:$0xff]
  %v332 = vld [vmem:[%s133 + $0x98] sm:$0xff]
  %v333 = vld [vmem:[%s133 + $0xa0] sm:$0xff]
  %v334 = vld [vmem:[%s133 + $0xa8] sm:$0xff]
  %v335 = vld [vmem:[%s133 + $0xb0] sm:$0xff]
  %v336 = vld [vmem:[%s133 + $0xb8] sm:$0xff]
  %v337 = vld [vmem:[%s133 + $0xc0] sm:$0xff]
  %v338 = vld [vmem:[%s133 + $0xc8] sm:$0xff]
  %v339 = vld [vmem:[%s133 + $0xd0] sm:$0xff]
  %v340 = vld [vmem:[%s133 + $0xd8] sm:$0xff]
  %v341 = vld [vmem:[%s133 + $0xe0] sm:$0xff]
  %v342 = vld [vmem:[%s133 + $0xe8] sm:$0xff]
  %v343 = vld [vmem:[%s133 + $0xf0] sm:$0xff]
  %v344 = vld [vmem:[%s133 + $0xf8] sm:$0xff]
  %v345 = vld [vmem:[%s166] sm:$0xff]
  %v346 = vld [vmem:[%s166 + $0x8] sm:$0xff]
  %v347 = vld [vmem:[%s166 + $0x10] sm:$0xff]
  %v348 = vld [vmem:[%s166 + $0x18] sm:$0xff]
  %v349 = vld [vmem:[%s166 + $0x20] sm:$0xff]
  %v350 = vld [vmem:[%s166 + $0x28] sm:$0xff]
  %v351 = vld [vmem:[%s166 + $0x30] sm:$0xff]
  %v352 = vld [vmem:[%s166 + $0x38] sm:$0xff]
  %v353 = vld [vmem:[%s166 + $0x40] sm:$0xff]
  %v354 = vld [vmem:[%s166 + $0x48] sm:$0xff]
  %v355 = vld [vmem:[%s166 + $0x50] sm:$0xff]
  %v356 = vld [vmem:[%s166 + $0x58] sm:$0xff]
  %v357 = vld [vmem:[%s166 + $0x60] sm:$0xff]
  %v358 = vld [vmem:[%s166 + $0x68] sm:$0xff]
  %v359 = vld [vmem:[%s166 + $0x70] sm:$0xff]
  %v360 = vld [vmem:[%s166 + $0x78] sm:$0xff]
  %v361 = vld [vmem:[%s166 + $0x80] sm:$0xff]
  %v362 = vld [vmem:[%s166 + $0x88] sm:$0xff]
  %v363 = vld [vmem:[%s166 + $0x90] sm:$0xff]
  %v364 = vld [vmem:[%s166 + $0x98] sm:$0xff]
  %v365 = vld [vmem:[%s166 + $0xa0] sm:$0xff]
  %v366 = vld [vmem:[%s166 + $0xa8] sm:$0xff]
  %v367 = vld [vmem:[%s166 + $0xb0] sm:$0xff]
  %v368 = vld [vmem:[%s166 + $0xb8] sm:$0xff]
  %v369 = vld [vmem:[%s166 + $0xc0] sm:$0xff]
  %v370 = vld [vmem:[%s166 + $0xc8] sm:$0xff]
  %v371 = vld [vmem:[%s166 + $0xd0] sm:$0xff]
  %v372 = vld [vmem:[%s166 + $0xd8] sm:$0xff]
  %v373 = vld [vmem:[%s166 + $0xe0] sm:$0xff]
  %v374 = vld [vmem:[%s166 + $0xe8] sm:$0xff]
  %v375 = vld [vmem:[%s166 + $0xf0] sm:$0xff]
  %v376 = vld [vmem:[%s166 + $0xf8] sm:$0xff]
  %v409 = vunpack.c.l.b16 %v313
  %v410 = vunpack.c.h.b16 %v313
  %v411 = vunpack.c.l.b16 %v314
  %v412 = vunpack.c.h.b16 %v314
  %v413 = vunpack.c.l.b16 %v315
  %v414 = vunpack.c.h.b16 %v315
  %v415 = vunpack.c.l.b16 %v316
  %v416 = vunpack.c.h.b16 %v316
  %v417 = vunpack.c.l.b16 %v317
  %v418 = vunpack.c.h.b16 %v317
  %v419 = vunpack.c.l.b16 %v318
  %v420 = vunpack.c.h.b16 %v318
  %v421 = vunpack.c.l.b16 %v319
  %v422 = vunpack.c.h.b16 %v319
  %v423 = vunpack.c.l.b16 %v320
  %v424 = vunpack.c.h.b16 %v320
  %v425 = vunpack.c.l.b16 %v321
  %v426 = vunpack.c.h.b16 %v321
  %v427 = vunpack.c.l.b16 %v322
  %v428 = vunpack.c.h.b16 %v322
  %v429 = vunpack.c.l.b16 %v323
  %v430 = vunpack.c.h.b16 %v323
  %v431 = vunpack.c.l.b16 %v324
  %v432 = vunpack.c.h.b16 %v324
  %v433 = vunpack.c.l.b16 %v325
  %v434 = vunpack.c.h.b16 %v325
  %v435 = vunpack.c.l.b16 %v326
  %v436 = vunpack.c.h.b16 %v326
  %v437 = vunpack.c.l.b16 %v327
  %v438 = vunpack.c.h.b16 %v327
  %v439 = vunpack.c.l.b16 %v328
  %v440 = vunpack.c.h.b16 %v328
  %v441 = vunpack.c.l.b16 %v329
  %v442 = vunpack.c.h.b16 %v329
  %v443 = vunpack.c.l.b16 %v330
  %v444 = vunpack.c.h.b16 %v330
  %v445 = vunpack.c.l.b16 %v331
  %v446 = vunpack.c.h.b16 %v331
  %v447 = vunpack.c.l.b16 %v332
  %v448 = vunpack.c.h.b16 %v332
  %v449 = vunpack.c.l.b16 %v333
  %v450 = vunpack.c.h.b16 %v333
  %v451 = vunpack.c.l.b16 %v334
  %v452 = vunpack.c.h.b16 %v334
  %v453 = vunpack.c.l.b16 %v335
  %v454 = vunpack.c.h.b16 %v335
  %v455 = vunpack.c.l.b16 %v336
  %v456 = vunpack.c.h.b16 %v336
  %v457 = vunpack.c.l.b16 %v337
  %v458 = vunpack.c.h.b16 %v337
  %v459 = vunpack.c.l.b16 %v338
  %v460 = vunpack.c.h.b16 %v338
  %v461 = vunpack.c.l.b16 %v339
  %v462 = vunpack.c.h.b16 %v339
  %v463 = vunpack.c.l.b16 %v340
  %v464 = vunpack.c.h.b16 %v340
  %v465 = vunpack.c.l.b16 %v341
  %v466 = vunpack.c.h.b16 %v341
  %v467 = vunpack.c.l.b16 %v342
  %v468 = vunpack.c.h.b16 %v342
  %v469 = vunpack.c.l.b16 %v343
  %v470 = vunpack.c.h.b16 %v343
  %v471 = vunpack.c.l.b16 %v344
  %v472 = vunpack.c.h.b16 %v344
  %v473 = vpack.c.b16 %v411, %v409
  %v474 = vpack.c.b16 %v412, %v410
  %v475 = vpack.c.b16 %v415, %v413
  %v476 = vpack.c.b16 %v416, %v414
  %v477 = vpack.c.b16 %v419, %v417
  %v478 = vpack.c.b16 %v420, %v418
  %v479 = vpack.c.b16 %v423, %v421
  %v480 = vpack.c.b16 %v424, %v422
  %v481 = vpack.c.b16 %v427, %v425
  %v482 = vpack.c.b16 %v428, %v426
  %v483 = vpack.c.b16 %v431, %v429
  %v484 = vpack.c.b16 %v432, %v430
  %v485 = vpack.c.b16 %v435, %v433
  %v486 = vpack.c.b16 %v436, %v434
  %v487 = vpack.c.b16 %v439, %v437
  %v488 = vpack.c.b16 %v440, %v438
  %v489 = vpack.c.b16 %v443, %v441
  %v490 = vpack.c.b16 %v444, %v442
  %v491 = vpack.c.b16 %v447, %v445
  %v492 = vpack.c.b16 %v448, %v446
  %v493 = vpack.c.b16 %v451, %v449
  %v494 = vpack.c.b16 %v452, %v450
  %v495 = vpack.c.b16 %v455, %v453
  %v496 = vpack.c.b16 %v456, %v454
  %v497 = vpack.c.b16 %v459, %v457
  %v498 = vpack.c.b16 %v460, %v458
  %v499 = vpack.c.b16 %v463, %v461
  %v500 = vpack.c.b16 %v464, %v462
  %v501 = vpack.c.b16 %v467, %v465
  %v502 = vpack.c.b16 %v468, %v466
  %v503 = vpack.c.b16 %v471, %v469
  %v504 = vpack.c.b16 %v472, %v470
  %v569 = vunpack.c.l.b16 %v345
  %v570 = vunpack.c.h.b16 %v345
  %v571 = vunpack.c.l.b16 %v346
  %v572 = vunpack.c.h.b16 %v346
  %v573 = vunpack.c.l.b16 %v347
  %v574 = vunpack.c.h.b16 %v347
  %v575 = vunpack.c.l.b16 %v348
  %v576 = vunpack.c.h.b16 %v348
  %v577 = vunpack.c.l.b16 %v349
  %v578 = vunpack.c.h.b16 %v349
  %v579 = vunpack.c.l.b16 %v350
  %v580 = vunpack.c.h.b16 %v350
  %v581 = vunpack.c.l.b16 %v351
  %v582 = vunpack.c.h.b16 %v351
  %v583 = vunpack.c.l.b16 %v352
  %v584 = vunpack.c.h.b16 %v352
  %v585 = vunpack.c.l.b16 %v353
  %v586 = vunpack.c.h.b16 %v353
  %v587 = vunpack.c.l.b16 %v354
  %v588 = vunpack.c.h.b16 %v354
  %v589 = vunpack.c.l.b16 %v355
  %v590 = vunpack.c.h.b16 %v355
  %v591 = vunpack.c.l.b16 %v356
  %v592 = vunpack.c.h.b16 %v356
  %v593 = vunpack.c.l.b16 %v357
  %v594 = vunpack.c.h.b16 %v357
  %v595 = vunpack.c.l.b16 %v358
  %v596 = vunpack.c.h.b16 %v358
  %v597 = vunpack.c.l.b16 %v359
  %v598 = vunpack.c.h.b16 %v359
  %v599 = vunpack.c.l.b16 %v360
  %v600 = vunpack.c.h.b16 %v360
  %v601 = vunpack.c.l.b16 %v361
  %v602 = vunpack.c.h.b16 %v361
  %v603 = vunpack.c.l.b16 %v362
  %v604 = vunpack.c.h.b16 %v362
  %v605 = vunpack.c.l.b16 %v363
  %v606 = vunpack.c.h.b16 %v363
  %v607 = vunpack.c.l.b16 %v364
  %v608 = vunpack.c.h.b16 %v364
  %v609 = vunpack.c.l.b16 %v365
  %v610 = vunpack.c.h.b16 %v365
  %v611 = vunpack.c.l.b16 %v366
  %v612 = vunpack.c.h.b16 %v366
  %v613 = vunpack.c.l.b16 %v367
  %v614 = vunpack.c.h.b16 %v367
  %v615 = vunpack.c.l.b16 %v368
  %v616 = vunpack.c.h.b16 %v368
  %v617 = vunpack.c.l.b16 %v369
  %v618 = vunpack.c.h.b16 %v369
  %v619 = vunpack.c.l.b16 %v370
  %v620 = vunpack.c.h.b16 %v370
  %v621 = vunpack.c.l.b16 %v371
  %v622 = vunpack.c.h.b16 %v371
  %v623 = vunpack.c.l.b16 %v372
  %v624 = vunpack.c.h.b16 %v372
  %v625 = vunpack.c.l.b16 %v373
  %v626 = vunpack.c.h.b16 %v373
  %v627 = vunpack.c.l.b16 %v374
  %v628 = vunpack.c.h.b16 %v374
  %v629 = vunpack.c.l.b16 %v375
  %v630 = vunpack.c.h.b16 %v375
  %v631 = vunpack.c.l.b16 %v376
  %v632 = vunpack.c.h.b16 %v376
  %v633 = vpack.c.b16 %v571, %v569
  %v634 = vpack.c.b16 %v572, %v570
  %v635 = vpack.c.b16 %v575, %v573
  %v636 = vpack.c.b16 %v576, %v574
  %v637 = vpack.c.b16 %v579, %v577
  %v638 = vpack.c.b16 %v580, %v578
  %v639 = vpack.c.b16 %v583, %v581
  %v640 = vpack.c.b16 %v584, %v582
  %v641 = vpack.c.b16 %v587, %v585
  %v642 = vpack.c.b16 %v588, %v586
  %v643 = vpack.c.b16 %v591, %v589
  %v644 = vpack.c.b16 %v592, %v590
  %v645 = vpack.c.b16 %v595, %v593
  %v646 = vpack.c.b16 %v596, %v594
  %v647 = vpack.c.b16 %v599, %v597
  %v648 = vpack.c.b16 %v600, %v598
  %v649 = vpack.c.b16 %v603, %v601
  %v650 = vpack.c.b16 %v604, %v602
  %v651 = vpack.c.b16 %v607, %v605
  %v652 = vpack.c.b16 %v608, %v606
  %v653 = vpack.c.b16 %v611, %v609
  %v654 = vpack.c.b16 %v612, %v610
  %v655 = vpack.c.b16 %v615, %v613
  %v656 = vpack.c.b16 %v616, %v614
  %v657 = vpack.c.b16 %v619, %v617
  %v658 = vpack.c.b16 %v620, %v618
  %v659 = vpack.c.b16 %v623, %v621
  %v660 = vpack.c.b16 %v624, %v622
  %v661 = vpack.c.b16 %v627, %v625
  %v662 = vpack.c.b16 %v628, %v626
  %v663 = vpack.c.b16 %v631, %v629
  %v664 = vpack.c.b16 %v632, %v630
  %697 = vmatprep.subr.bf16.mxu0 %v634
  %698 = vmatpush1.bf16.msra.mxu0 %v633
  %699 = vmatprep.subr.bf16.mxu0 %v636
  %700 = vmatpush1.bf16.msra.mxu0 %v635
  %701 = vmatprep.subr.bf16.mxu0 %v638
  %702 = vmatpush1.bf16.msra.mxu0 %v637
  %703 = vmatprep.subr.bf16.mxu0 %v640
  %704 = vmatpush1.bf16.msra.mxu0 %v639
  %705 = vmatprep.subr.bf16.mxu0 %v642
  %706 = vmatpush1.bf16.msra.mxu0 %v641
  %707 = vmatprep.subr.bf16.mxu0 %v644
  %708 = vmatpush1.bf16.msra.mxu0 %v643
  %709 = vmatprep.subr.bf16.mxu0 %v646
  %710 = vmatpush1.bf16.msra.mxu0 %v645
  %711 = vmatprep.subr.bf16.mxu0 %v648
  %712 = vmatpush1.bf16.msra.mxu0 %v647
  %713 = vmatprep.subr.bf16.mxu0 %v650
  %714 = vmatpush1.bf16.msra.mxu0 %v649
  %715 = vmatprep.subr.bf16.mxu0 %v652
  %716 = vmatpush1.bf16.msra.mxu0 %v651
  %717 = vmatprep.subr.bf16.mxu0 %v654
  %718 = vmatpush1.bf16.msra.mxu0 %v653
  %719 = vmatprep.subr.bf16.mxu0 %v656
  %720 = vmatpush1.bf16.msra.mxu0 %v655
  %721 = vmatprep.subr.bf16.mxu0 %v658
  %722 = vmatpush1.bf16.msra.mxu0 %v657
  %723 = vmatprep.subr.bf16.mxu0 %v660
  %724 = vmatpush1.bf16.msra.mxu0 %v659
  %725 = vmatprep.subr.bf16.mxu0 %v662
  %726 = vmatpush1.bf16.msra.mxu0 %v661
  %727 = vmatprep.subr.bf16.mxu0 %v664
  %728 = vmatpush1.bf16.msra.mxu0 %v663
  %729 = vmatprep.mubr.bf16.mxu0 %v474
  %730 = vmatmul.mubr.bf16.gmra.mrb[0].mxu0 %v473
  %v731 = vpop.f32.mrb[0].mxu0
  %v732 = vadd.f32 0.0, %v731
  %v733 = vpop.f32.mrb[0].mxu0
  %v734 = vadd.f32 0.0, %v733
  %v735 = vpop.f32.mrb[0].mxu0
  %v736 = vadd.f32 0.0, %v735
  %v737 = vpop.f32.mrb[0].mxu0
  %v738 = vadd.f32 0.0, %v737
  %739 = vmatprep.mubr.bf16.mxu0 %v476
  %740 = vmatmul.mubr.bf16.gmra.mrb[0].mxu0 %v475
  %v741 = vpop.f32.mrb[0].mxu0
  %v742 = vadd.f32 0.0, %v741
  %v743 = vpop.f32.mrb[0].mxu0
  %v744 = vadd.f32 0.0, %v743
  %v745 = vpop.f32.mrb[0].mxu0
  %v746 = vadd.f32 0.0, %v745
  %v747 = vpop.f32.mrb[0].mxu0
  %v748 = vadd.f32 0.0, %v747
  %749 = vmatprep.mubr.bf16.mxu0 %v478
  %750 = vmatmul.mubr.bf16.gmra.mrb[0].mxu0 %v477
  %v751 = vpop.f32.mrb[0].mxu0
  %v752 = vadd.f32 0.0, %v751
  %v753 = vpop.f32.mrb[0].mxu0
  %v754 = vadd.f32 0.0, %v753
  %v755 = vpop.f32.mrb[0].mxu0
  %v756 = vadd.f32 0.0, %v755
  %v757 = vpop.f32.mrb[0].mxu0
  %v758 = vadd.f32 0.0, %v757
  %759 = vmatprep.mubr.bf16.mxu0 %v480
  %760 = vmatmul.mubr.bf16.gmra.mrb[0].mxu0 %v479
  %v761 = vpop.f32.mrb[0].mxu0
  %v762 = vadd.f32 0.0, %v761
  %v763 = vpop.f32.mrb[0].mxu0
  %v764 = vadd.f32 0.0, %v763
  %v765 = vpop.f32.mrb[0].mxu0
  %v766 = vadd.f32 0.0, %v765
  %v767 = vpop.f32.mrb[0].mxu0
  %v768 = vadd.f32 0.0, %v767
  %769 = vmatprep.mubr.bf16.mxu0 %v482
  %770 = vmatmul.mubr.bf16.gmra.mrb[0].mxu0 %v481
  %v771 = vpop.f32.mrb[0].mxu0
  %v772 = vadd.f32 0.0, %v771
  %v773 = vpop.f32.mrb[0].mxu0
  %v774 = vadd.f32 0.0, %v773
  %v775 = vpop.f32.mrb[0].mxu0
  %v776 = vadd.f32 0.0, %v775
  %v777 = vpop.f32.mrb[0].mxu0
  %v778 = vadd.f32 0.0, %v777
  %779 = vmatprep.mubr.bf16.mxu0 %v484
  %780 = vmatmul.mubr.bf16.gmra.mrb[0].mxu0 %v483
  %v781 = vpop.f32.mrb[0].mxu0
  %v782 = vadd.f32 0.0, %v781
  %v783 = vpop.f32.mrb[0].mxu0
  %v784 = vadd.f32 0.0, %v783
  %v785 = vpop.f32.mrb[0].mxu0
  %v786 = vadd.f32 0.0, %v785
  %v787 = vpop.f32.mrb[0].mxu0
  %v788 = vadd.f32 0.0, %v787
  %789 = vmatprep.mubr.bf16.mxu0 %v486
  %790 = vmatmul.mubr.bf16.gmra.mrb[0].mxu0 %v485
  %v791 = vpop.f32.mrb[0].mxu0
  %v792 = vadd.f32 0.0, %v791
  %v793 = vpop.f32.mrb[0].mxu0
  %v794 = vadd.f32 0.0, %v793
  %v795 = vpop.f32.mrb[0].mxu0
  %v796 = vadd.f32 0.0, %v795
  %v797 = vpop.f32.mrb[0].mxu0
  %v798 = vadd.f32 0.0, %v797
  %799 = vmatprep.mubr.bf16.mxu0 %v488
  %800 = vmatmul.mubr.bf16.gmra.mrb[0].mxu0 %v487
  %v801 = vpop.f32.mrb[0].mxu0
  %v802 = vadd.f32 0.0, %v801
  %v803 = vpop.f32.mrb[0].mxu0
  %v804 = vadd.f32 0.0, %v803
  %v805 = vpop.f32.mrb[0].mxu0
  %v806 = vadd.f32 0.0, %v805
  %v807 = vpop.f32.mrb[0].mxu0
  %v808 = vadd.f32 0.0, %v807
  %809 = vmatprep.mubr.bf16.mxu0 %v490
  %810 = vmatmul.mubr.bf16.gmra.mrb[0].mxu0 %v489
  %v811 = vpop.f32.mrb[0].mxu0
  %v812 = vadd.f32 0.0, %v811
  %v813 = vpop.f32.mrb[0].mxu0
  %v814 = vadd.f32 0.0, %v813
  %v815 = vpop.f32.mrb[0].mxu0
  %v816 = vadd.f32 0.0, %v815
  %v817 = vpop.f32.mrb[0].mxu0
  %v818 = vadd.f32 0.0, %v817
  %819 = vmatprep.mubr.bf16.mxu0 %v492
  %820 = vmatmul.mubr.bf16.gmra.mrb[0].mxu0 %v491
  %v821 = vpop.f32.mrb[0].mxu0
  %v822 = vadd.f32 0.0, %v821
  %v823 = vpop.f32.mrb[0].mxu0
  %v824 = vadd.f32 0.0, %v823
  %v825 = vpop.f32.mrb[0].mxu0
  %v826 = vadd.f32 0.0, %v825
  %v827 = vpop.f32.mrb[0].mxu0
  %v828 = vadd.f32 0.0, %v827
  %829 = vmatprep.mubr.bf16.mxu0 %v494
  %830 = vmatmul.mubr.bf16.gmra.mrb[0].mxu0 %v493
  %v831 = vpop.f32.mrb[0].mxu0
  %v832 = vadd.f32 0.0, %v831
  %v833 = vpop.f32.mrb[0].mxu0
  %v834 = vadd.f32 0.0, %v833
  %v835 = vpop.f32.mrb[0].mxu0
  %v836 = vadd.f32 0.0, %v835
  %v837 = vpop.f32.mrb[0].mxu0
  %v838 = vadd.f32 0.0, %v837
  %839 = vmatprep.mubr.bf16.mxu0 %v496
  %840 = vmatmul.mubr.bf16.gmra.mrb[0].mxu0 %v495
  %v841 = vpop.f32.mrb[0].mxu0
  %v842 = vadd.f32 0.0, %v841
  %v843 = vpop.f32.mrb[0].mxu0
  %v844 = vadd.f32 0.0, %v843
  %v845 = vpop.f32.mrb[0].mxu0
  %v846 = vadd.f32 0.0, %v845
  %v847 = vpop.f32.mrb[0].mxu0
  %v848 = vadd.f32 0.0, %v847
  %849 = vmatprep.mubr.bf16.mxu0 %v498
  %850 = vmatmul.mubr.bf16.gmra.mrb[0].mxu0 %v497
  %v851 = vpop.f32.mrb[0].mxu0
  %v852 = vadd.f32 0.0, %v851
  %v853 = vpop.f32.mrb[0].mxu0
  %v854 = vadd.f32 0.0, %v853
  %v855 = vpop.f32.mrb[0].mxu0
  %v856 = vadd.f32 0.0, %v855
  %v857 = vpop.f32.mrb[0].mxu0
  %v858 = vadd.f32 0.0, %v857
  %859 = vmatprep.mubr.bf16.mxu0 %v500
  %860 = vmatmul.mubr.bf16.gmra.mrb[0].mxu0 %v499
  %v861 = vpop.f32.mrb[0].mxu0
  %v862 = vadd.f32 0.0, %v861
  %v863 = vpop.f32.mrb[0].mxu0
  %v864 = vadd.f32 0.0, %v863
  %v865 = vpop.f32.mrb[0].mxu0
  %v866 = vadd.f32 0.0, %v865
  %v867 = vpop.f32.mrb[0].mxu0
  %v868 = vadd.f32 0.0, %v867
  %869 = vmatprep.mubr.bf16.mxu0 %v502
  %870 = vmatmul.mubr.bf16.gmra.mrb[0].mxu0 %v501
  %v871 = vpop.f32.mrb[0].mxu0
  %v872 = vadd.f32 0.0, %v871
  %v873 = vpop.f32.mrb[0].mxu0
  %v874 = vadd.f32 0.0, %v873
  %v875 = vpop.f32.mrb[0].mxu0
  %v876 = vadd.f32 0.0, %v875
  %v877 = vpop.f32.mrb[0].mxu0
  %v878 = vadd.f32 0.0, %v877
  %879 = vmatprep.mubr.bf16.mxu0 %v504
  %880 = vmatmul.mubr.bf16.gmra.mrb[0].mxu0 %v503
  %v881 = vpop.f32.mrb[0].mxu0
  %v882 = vadd.f32 0.0, %v881
  %v883 = vpop.f32.mrb[0].mxu0
  %v884 = vadd.f32 0.0, %v883
  %v885 = vpop.f32.mrb[0].mxu0
  %v886 = vadd.f32 0.0, %v885
  %v887 = vpop.f32.mrb[0].mxu0
  %v888 = vadd.f32 0.0, %v887
  %889 = vdwg.mxu0
  %v890 = vadd.f32 %v249, %v732
  %v891 = vadd.f32 %v250, %v734
  %v892 = vadd.f32 %v251, %v736
  %v893 = vadd.f32 %v252, %v738
  %v894 = vadd.f32 %v253, %v742
  %v895 = vadd.f32 %v254, %v744
  %v896 = vadd.f32 %v255, %v746
  %v897 = vadd.f32 %v256, %v748
  %v898 = vadd.f32 %v257, %v752
  %v899 = vadd.f32 %v258, %v754
  %v900 = vadd.f32 %v259, %v756
  %v901 = vadd.f32 %v260, %v758
  %v902 = vadd.f32 %v261, %v762
  %v903 = vadd.f32 %v262, %v764
  %v904 = vadd.f32 %v263, %v766
  %v905 = vadd.f32 %v264, %v768
  %v906 = vadd.f32 %v265, %v772
  %v907 = vadd.f32 %v266, %v774
  %v908 = vadd.f32 %v267, %v776
  %v909 = vadd.f32 %v268, %v778
  %v910 = vadd.f32 %v269, %v782
  %v911 = vadd.f32 %v270, %v784
  %v912 = vadd.f32 %v271, %v786
  %v913 = vadd.f32 %v272, %v788
  %v914 = vadd.f32 %v273, %v792
  %v915 = vadd.f32 %v274, %v794
  %v916 = vadd.f32 %v275, %v796
  %v917 = vadd.f32 %v276, %v798
  %v918 = vadd.f32 %v277, %v802
  %v919 = vadd.f32 %v278, %v804
  %v920 = vadd.f32 %v279, %v806
  %v921 = vadd.f32 %v280, %v808
  %v922 = vadd.f32 %v281, %v812
  %v923 = vadd.f32 %v282, %v814
  %v924 = vadd.f32 %v283, %v816
  %v925 = vadd.f32 %v284, %v818
  %v926 = vadd.f32 %v285, %v822
  %v927 = vadd.f32 %v286, %v824
  %v928 = vadd.f32 %v287, %v826
  %v929 = vadd.f32 %v288, %v828
  %v930 = vadd.f32 %v289, %v832
  %v931 = vadd.f32 %v290, %v834
  %v932 = vadd.f32 %v291, %v836
  %v933 = vadd.f32 %v292, %v838
  %v934 = vadd.f32 %v293, %v842
  %v935 = vadd.f32 %v294, %v844
  %v936 = vadd.f32 %v295, %v846
  %v937 = vadd.f32 %v296, %v848
  %v938 = vadd.f32 %v297, %v852
  %v939 = vadd.f32 %v298, %v854
  %v940 = vadd.f32 %v299, %v856
  %v941 = vadd.f32 %v300, %v858
  %v942 = vadd.f32 %v301, %v862
  %v943 = vadd.f32 %v302, %v864
  %v944 = vadd.f32 %v303, %v866
  %v945 = vadd.f32 %v304, %v868
  %v946 = vadd.f32 %v305, %v872
  %v947 = vadd.f32 %v306, %v874
  %v948 = vadd.f32 %v307, %v876
  %v949 = vadd.f32 %v308, %v878
  %v950 = vadd.f32 %v309, %v882
  %v951 = vadd.f32 %v310, %v884
  %v952 = vadd.f32 %v311, %v886
  %v953 = vadd.f32 %v312, %v888
  %954 = vst [vmem:[#allocation2] sm:$0xff] %v890
  %955 = vst [vmem:[#allocation2 + $0x8] sm:$0xff] %v891
  %956 = vst [vmem:[#allocation2 + $0x10] sm:$0xff] %v892
  %957 = vst [vmem:[#allocation2 + $0x18] sm:$0xff] %v893
  %958 = vst [vmem:[#allocation2 + $0x20] sm:$0xff] %v894
  %959 = vst [vmem:[#allocation2 + $0x28] sm:$0xff] %v895
  %960 = vst [vmem:[#allocation2 + $0x30] sm:$0xff] %v896
  %961 = vst [vmem:[#allocation2 + $0x38] sm:$0xff] %v897
  %962 = vst [vmem:[#allocation2 + $0x40] sm:$0xff] %v898
  %963 = vst [vmem:[#allocation2 + $0x48] sm:$0xff] %v899
  %964 = vst [vmem:[#allocation2 + $0x50] sm:$0xff] %v900
  %965 = vst [vmem:[#allocation2 + $0x58] sm:$0xff] %v901
  %966 = vst [vmem:[#allocation2 + $0x60] sm:$0xff] %v902
  %967 = vst [vmem:[#allocation2 + $0x68] sm:$0xff] %v903
  %968 = vst [vmem:[#allocation2 + $0x70] sm:$0xff] %v904
  %969 = vst [vmem:[#allocation2 + $0x78] sm:$0xff] %v905
  %970 = vst [vmem:[#allocation2 + $0x80] sm:$0xff] %v906
  %971 = vst [vmem:[#allocation2 + $0x88] sm:$0xff] %v907
  %972 = vst [vmem:[#allocation2 + $0x90] sm:$0xff] %v908
  %973 = vst [vmem:[#allocation2 + $0x98] sm:$0xff] %v909
  %974 = vst [vmem:[#allocation2 + $0xa0] sm:$0xff] %v910
  %975 = vst [vmem:[#allocation2 + $0xa8] sm:$0xff] %v911
  %976 = vst [vmem:[#allocation2 + $0xb0] sm:$0xff] %v912
  %977 = vst [vmem:[#allocation2 + $0xb8] sm:$0xff] %v913
  %978 = vst [vmem:[#allocation2 + $0xc0] sm:$0xff] %v914
  %979 = vst [vmem:[#allocation2 + $0xc8] sm:$0xff] %v915
  %980 = vst [vmem:[#allocation2 + $0xd0] sm:$0xff] %v916
  %981 = vst [vmem:[#allocation2 + $0xd8] sm:$0xff] %v917
  %982 = vst [vmem:[#allocation2 + $0xe0] sm:$0xff] %v918
  %983 = vst [vmem:[#allocation2 + $0xe8] sm:$0xff] %v919
  %984 = vst [vmem:[#allocation2 + $0xf0] sm:$0xff] %v920
  %985 = vst [vmem:[#allocation2 + $0xf8] sm:$0xff] %v921
  %986 = vst [vmem:[#allocation2 + $0x100] sm:$0xff] %v922
  %987 = vst [vmem:[#allocation2 + $0x108] sm:$0xff] %v923
  %988 = vst [vmem:[#allocation2 + $0x110] sm:$0xff] %v924
  %989 = vst [vmem:[#allocation2 + $0x118] sm:$0xff] %v925
  %990 = vst [vmem:[#allocation2 + $0x120] sm:$0xff] %v926
  %991 = vst [vmem:[#allocation2 + $0x128] sm:$0xff] %v927
  %992 = vst [vmem:[#allocation2 + $0x130] sm:$0xff] %v928
  %993 = vst [vmem:[#allocation2 + $0x138] sm:$0xff] %v929
  %994 = vst [vmem:[#allocation2 + $0x140] sm:$0xff] %v930
  %995 = vst [vmem:[#allocation2 + $0x148] sm:$0xff] %v931
  %996 = vst [vmem:[#allocation2 + $0x150] sm:$0xff] %v932
  %997 = vst [vmem:[#allocation2 + $0x158] sm:$0xff] %v933
  %998 = vst [vmem:[#allocation2 + $0x160] sm:$0xff] %v934
  %999 = vst [vmem:[#allocation2 + $0x168] sm:$0xff] %v935
  %1000 = vst [vmem:[#allocation2 + $0x170] sm:$0xff] %v936
  %1001 = vst [vmem:[#allocation2 + $0x178] sm:$0xff] %v937
  %1002 = vst [vmem:[#allocation2 + $0x180] sm:$0xff] %v938
  %1003 = vst [vmem:[#allocation2 + $0x188] sm:$0xff] %v939
  %1004 = vst [vmem:[#allocation2 + $0x190] sm:$0xff] %v940
  %1005 = vst [vmem:[#allocation2 + $0x198] sm:$0xff] %v941
  %1006 = vst [vmem:[#allocation2 + $0x1a0] sm:$0xff] %v942
  %1007 = vst [vmem:[#allocation2 + $0x1a8] sm:$0xff] %v943
  %1008 = vst [vmem:[#allocation2 + $0x1b0] sm:$0xff] %v944
  %1009 = vst [vmem:[#allocation2 + $0x1b8] sm:$0xff] %v945
  %1010 = vst [vmem:[#allocation2 + $0x1c0] sm:$0xff] %v946
  %1011 = vst [vmem:[#allocation2 + $0x1c8] sm:$0xff] %v947
  %1012 = vst [vmem:[#allocation2 + $0x1d0] sm:$0xff] %v948
  %1013 = vst [vmem:[#allocation2 + $0x1d8] sm:$0xff] %v949
  %1014 = vst [vmem:[#allocation2 + $0x1e0] sm:$0xff] %v950
  %1015 = vst [vmem:[#allocation2 + $0x1e8] sm:$0xff] %v951
  %1016 = vst [vmem:[#allocation2 + $0x1f0] sm:$0xff] %v952
  %1017 = vst [vmem:[#allocation2 + $0x1f8] sm:$0xff] %v953
  // Predicated region
  $region18: #{reward_model_forward.2} parent=0 // pred_check
    %p1018 = pneg %p181
  $region19: #{reward_model_forward.2} parent=0 // pred_check_branch
    %1020 = sbr.rel (%p1018) target = $region21
  $region20: #{reward_model_forward.2} parent=0 // pred_region
    %v1021 = vld [vmem:[#allocation2] sm:$0xff]
    %v1022 = vld [vmem:[#allocation2 + $0x8] sm:$0xff]
    %v1023 = vld [vmem:[#allocation2 + $0x10] sm:$0xff]
    %v1024 = vld [vmem:[#allocation2 + $0x18] sm:$0xff]
    %v1025 = vld [vmem:[#allocation2 + $0x20] sm:$0xff]
    %v1026 = vld [vmem:[#allocation2 + $0x28] sm:$0xff]
    %v1027 = vld [vmem:[#allocation2 + $0x30] sm:$0xff]
    %v1028 = vld [vmem:[#allocation2 + $0x38] sm:$0xff]
    %v1029 = vld [vmem:[#allocation2 + $0x40] sm:$0xff]
    %v1030 = vld [vmem:[#allocation2 + $0x48] sm:$0xff]
    %v1031 = vld [vmem:[#allocation2 + $0x50] sm:$0xff]
    %v1032 = vld [vmem:[#allocation2 + $0x58] sm:$0xff]
    %v1033 = vld [vmem:[#allocation2 + $0x60] sm:$0xff]
    %v1034 = vld [vmem:[#allocation2 + $0x68] sm:$0xff]
    %v1035 = vld [vmem:[#allocation2 + $0x70] sm:$0xff]
    %v1036 = vld [vmem:[#allocation2 + $0x78] sm:$0xff]
    %v1037 = vld [vmem:[#allocation2 + $0x80] sm:$0xff]
    %v1038 = vld [vmem:[#allocation2 + $0x88] sm:$0xff]
    %v1039 = vld [vmem:[#allocation2 + $0x90] sm:$0xff]
    %v1040 = vld [vmem:[#allocation2 + $0x98] sm:$0xff]
    %v1041 = vld [vmem:[#allocation2 + $0xa0] sm:$0xff]
    %v1042 = vld [vmem:[#allocation2 + $0xa8] sm:$0xff]
    %v1043 = vld [vmem:[#allocation2 + $0xb0] sm:$0xff]
    %v1044 = vld [vmem:[#allocation2 + $0xb8] sm:$0xff]
    %v1045 = vld [vmem:[#allocation2 + $0xc0] sm:$0xff]
    %v1046 = vld [vmem:[#allocation2 + $0xc8] sm:$0xff]
    %v1047 = vld [vmem:[#allocation2 + $0xd0] sm:$0xff]
    %v1048 = vld [vmem:[#allocation2 + $0xd8] sm:$0xff]
    %v1049 = vld [vmem:[#allocation2 + $0xe0] sm:$0xff]
    %v1050 = vld [vmem:[#allocation2 + $0xe8] sm:$0xff]
    %v1051 = vld [vmem:[#allocation2 + $0xf0] sm:$0xff]
    %v1052 = vld [vmem:[#allocation2 + $0xf8] sm:$0xff]
    %v1053 = vld [vmem:[#allocation2 + $0x100] sm:$0xff]
    %v1054 = vld [vmem:[#allocation2 + $0x108] sm:$0xff]
    %v1055 = vld [vmem:[#allocation2 + $0x110] sm:$0xff]
    %v1056 = vld [vmem:[#allocation2 + $0x118] sm:$0xff]
    %v1057 = vld [vmem:[#allocation2 + $0x120] sm:$0xff]
    %v1058 = vld [vmem:[#allocation2 + $0x128] sm:$0xff]
    %v1059 = vld [vmem:[#allocation2 + $0x130] sm:$0xff]
    %v1060 = vld [vmem:[#allocation2 + $0x138] sm:$0xff]
    %v1061 = vld [vmem:[#allocation2 + $0x140] sm:$0xff]
    %v1062 = vld [vmem:[#allocation2 + $0x148] sm:$0xff]
    %v1063 = vld [vmem:[#allocation2 + $0x150] sm:$0xff]
    %v1064 = vld [vmem:[#allocation2 + $0x158] sm:$0xff]
    %v1065 = vld [vmem:[#allocation2 + $0x160] sm:$0xff]
    %v1066 = vld [vmem:[#allocation2 + $0x168] sm:$0xff]
    %v1067 = vld [vmem:[#allocation2 + $0x170] sm:$0xff]
    %v1068 = vld [vmem:[#allocation2 + $0x178] sm:$0xff]
    %v1069 = vld [vmem:[#allocation2 + $0x180] sm:$0xff]
    %v1070 = vld [vmem:[#allocation2 + $0x188] sm:$0xff]
    %v1071 = vld [vmem:[#allocation2 + $0x190] sm:$0xff]
    %v1072 = vld [vmem:[#allocation2 + $0x198] sm:$0xff]
    %v1073 = vld [vmem:[#allocation2 + $0x1a0] sm:$0xff]
    %v1074 = vld [vmem:[#allocation2 + $0x1a8] sm:$0xff]
    %v1075 = vld [vmem:[#allocation2 + $0x1b0] sm:$0xff]
    %v1076 = vld [vmem:[#allocation2 + $0x1b8] sm:$0xff]
    %v1077 = vld [vmem:[#allocation2 + $0x1c0] sm:$0xff]
    %v1078 = vld [vmem:[#allocation2 + $0x1c8] sm:$0xff]
    %v1079 = vld [vmem:[#allocation2 + $0x1d0] sm:$0xff]
    %v1080 = vld [vmem:[#allocation2 + $0x1d8] sm:$0xff]
    %v1081 = vld [vmem:[#allocation2 + $0x1e0] sm:$0xff]
    %v1082 = vld [vmem:[#allocation2 + $0x1e8] sm:$0xff]
    %v1083 = vld [vmem:[#allocation2 + $0x1f0] sm:$0xff]
    %v1084 = vld [vmem:[#allocation2 + $0x1f8] sm:$0xff]
    %v1085 = vtanh.pop %v1021
    %v1086 = vtanh.pop %v1022
    %v1087 = vtanh.pop %v1023
    %v1088 = vtanh.pop %v1024
    %v1089 = vtanh.pop %v1025
    %v1090 = vtanh.pop %v1026
    %v1091 = vtanh.pop %v1027
    %v1092 = vtanh.pop %v1028
    %v1093 = vtanh.pop %v1029
    %v1094 = vtanh.pop %v1030
    %v1095 = vtanh.pop %v1031
    %v1096 = vtanh.pop %v1032
    %v1097 = vtanh.pop %v1033
    %v1098 = vtanh.pop %v1034
    %v1099 = vtanh.pop %v1035
    %v1100 = vtanh.pop %v1036
    %v1101 = vtanh.pop %v1037
    %v1102 = vtanh.pop %v1038
    %v1103 = vtanh.pop %v1039
    %v1104 = vtanh.pop %v1040
    %v1105 = vtanh.pop %v1041
    %v1106 = vtanh.pop %v1042
    %v1107 = vtanh.pop %v1043
    %v1108 = vtanh.pop %v1044
    %v1109 = vtanh.pop %v1045
    %v1110 = vtanh.pop %v1046
    %v1111 = vtanh.pop %v1047
    %v1112 = vtanh.pop %v1048
    %v1113 = vtanh.pop %v1049
    %v1114 = vtanh.pop %v1050
    %v1115 = vtanh.pop %v1051
    %v1116 = vtanh.pop %v1052
    %v1117 = vtanh.pop %v1053
    %v1118 = vtanh.pop %v1054
    %v1119 = vtanh.pop %v1055
    %v1120 = vtanh.pop %v1056
    %v1121 = vtanh.pop %v1057
    %v1122 = vtanh.pop %v1058
    %v1123 = vtanh.pop %v1059
    %v1124 = vtanh.pop %v1060
    %v1125 = vtanh.pop %v1061
    %v1126 = vtanh.pop %v1062
    %v1127 = vtanh.pop %v1063
    %v1128 = vtanh.pop %v1064
    %v1129 = vtanh.pop %v1065
    %v1130 = vtanh.pop %v1066
    %v1131 = vtanh.pop %v1067
    %v1132 = vtanh.pop %v1068
    %v1133 = vtanh.pop %v1069
    %v1134 = vtanh.pop %v1070
    %v1135 = vtanh.pop %v1071
    %v1136 = vtanh.pop %v1072
    %v1137 = vtanh.pop %v1073
    %v1138 = vtanh.pop %v1074
    %v1139 = vtanh.pop %v1075
    %v1140 = vtanh.pop %v1076
    %v1141 = vtanh.pop %v1077
    %v1142 = vtanh.pop %v1078
    %v1143 = vtanh.pop %v1079
    %v1144 = vtanh.pop %v1080
    %v1145 = vtanh.pop %v1081
    %v1146 = vtanh.pop %v1082
    %v1147 = vtanh.pop %v1083
    %v1148 = vtanh.pop %v1084
    %v1149 = vld [vmem:[%s2] sm:$0x3]
    %v1151 = vlaneseq
    %v1152 = vshrl.u32 %v1151, 7
    %v1153 = vsub.s32 0, %v1152
    %v1154 = vrot.slane %v1149, %v1153
    %v1155 = vlaneseq
    %v1156 = vshrl.u32 %v1155, 7
    %v1157 = vsub.s32 1, %v1156
    %v1158 = vrot.slane %v1149, %v1157
    %v1161 = vmul.f32 %v1085, %v1154
    %v1162 = vmul.f32 %v1086, %v1158
    %v1163 = vmul.f32 %v1087, %v1154
    %v1164 = vmul.f32 %v1088, %v1158
    %v1165 = vmul.f32 %v1089, %v1154
    %v1166 = vmul.f32 %v1090, %v1158
    %v1167 = vmul.f32 %v1091, %v1154
    %v1168 = vmul.f32 %v1092, %v1158
    %v1169 = vmul.f32 %v1093, %v1154
    %v1170 = vmul.f32 %v1094, %v1158
    %v1171 = vmul.f32 %v1095, %v1154
    %v1172 = vmul.f32 %v1096, %v1158
    %v1173 = vmul.f32 %v1097, %v1154
    %v1174 = vmul.f32 %v1098, %v1158
    %v1175 = vmul.f32 %v1099, %v1154
    %v1176 = vmul.f32 %v1100, %v1158
    %v1177 = vmul.f32 %v1101, %v1154
    %v1178 = vmul.f32 %v1102, %v1158
    %v1179 = vmul.f32 %v1103, %v1154
    %v1180 = vmul.f32 %v1104, %v1158
    %v1181 = vmul.f32 %v1105, %v1154
    %v1182 = vmul.f32 %v1106, %v1158
    %v1183 = vmul.f32 %v1107, %v1154
    %v1184 = vmul.f32 %v1108, %v1158
    %v1185 = vmul.f32 %v1109, %v1154
    %v1186 = vmul.f32 %v1110, %v1158
    %v1187 = vmul.f32 %v1111, %v1154
    %v1188 = vmul.f32 %v1112, %v1158
    %v1189 = vmul.f32 %v1113, %v1154
    %v1190 = vmul.f32 %v1114, %v1158
    %v1191 = vmul.f32 %v1115, %v1154
    %v1192 = vmul.f32 %v1116, %v1158
    %v1193 = vmul.f32 %v1117, %v1154
    %v1194 = vmul.f32 %v1118, %v1158
    %v1195 = vmul.f32 %v1119, %v1154
    %v1196 = vmul.f32 %v1120, %v1158
    %v1197 = vmul.f32 %v1121, %v1154
    %v1198 = vmul.f32 %v1122, %v1158
    %v1199 = vmul.f32 %v1123, %v1154
    %v1200 = vmul.f32 %v1124, %v1158
    %v1201 = vmul.f32 %v1125, %v1154
    %v1202 = vmul.f32 %v1126, %v1158
    %v1203 = vmul.f32 %v1127, %v1154
    %v1204 = vmul.f32 %v1128, %v1158
    %v1205 = vmul.f32 %v1129, %v1154
    %v1206 = vmul.f32 %v1130, %v1158
    %v1207 = vmul.f32 %v1131, %v1154
    %v1208 = vmul.f32 %v1132, %v1158
    %v1209 = vmul.f32 %v1133, %v1154
    %v1210 = vmul.f32 %v1134, %v1158
    %v1211 = vmul.f32 %v1135, %v1154
    %v1212 = vmul.f32 %v1136, %v1158
    %v1213 = vmul.f32 %v1137, %v1154
    %v1214 = vmul.f32 %v1138, %v1158
    %v1215 = vmul.f32 %v1139, %v1154
    %v1216 = vmul.f32 %v1140, %v1158
    %v1217 = vmul.f32 %v1141, %v1154
    %v1218 = vmul.f32 %v1142, %v1158
    %v1219 = vmul.f32 %v1143, %v1154
    %v1220 = vmul.f32 %v1144, %v1158
    %v1221 = vmul.f32 %v1145, %v1154
    %v1222 = vmul.f32 %v1146, %v1158
    %v1223 = vmul.f32 %v1147, %v1154
    %v1224 = vmul.f32 %v1148, %v1158
    %v1225 = vadd.f32 %v1161, %v1162
    %1226 = vadd.xlane.f32.xlu0 %v1225
    %v1227 = vpop.xlane.xlu0 %1226
    %v1228 = vadd.f32 %v1163, %v1164
    %1229 = vadd.xlane.f32.xlu0 %v1228
    %v1230 = vpop.xlane.xlu0 %1229
    %v1231 = vadd.f32 %v1165, %v1166
    %1232 = vadd.xlane.f32.xlu0 %v1231
    %v1233 = vpop.xlane.xlu0 %1232
    %v1234 = vadd.f32 %v1167, %v1168
    %1235 = vadd.xlane.f32.xlu0 %v1234
    %v1236 = vpop.xlane.xlu0 %1235
    %v1237 = vadd.f32 %v1169, %v1170
    %1238 = vadd.xlane.f32.xlu0 %v1237
    %v1239 = vpop.xlane.xlu0 %1238
    %v1240 = vadd.f32 %v1171, %v1172
    %1241 = vadd.xlane.f32.xlu0 %v1240
    %v1242 = vpop.xlane.xlu0 %1241
    %v1243 = vadd.f32 %v1173, %v1174
    %1244 = vadd.xlane.f32.xlu0 %v1243
    %v1245 = vpop.xlane.xlu0 %1244
    %v1246 = vadd.f32 %v1175, %v1176
    %1247 = vadd.xlane.f32.xlu0 %v1246
    %v1248 = vpop.xlane.xlu0 %1247
    %v1249 = vadd.f32 %v1177, %v1178
    %1250 = vadd.xlane.f32.xlu0 %v1249
    %v1251 = vpop.xlane.xlu0 %1250
    %v1252 = vadd.f32 %v1179, %v1180
    %1253 = vadd.xlane.f32.xlu0 %v1252
    %v1254 = vpop.xlane.xlu0 %1253
    %v1255 = vadd.f32 %v1181, %v1182
    %1256 = vadd.xlane.f32.xlu0 %v1255
    %v1257 = vpop.xlane.xlu0 %1256
    %v1258 = vadd.f32 %v1183, %v1184
    %1259 = vadd.xlane.f32.xlu0 %v1258
    %v1260 = vpop.xlane.xlu0 %1259
    %v1261 = vadd.f32 %v1185, %v1186
    %1262 = vadd.xlane.f32.xlu0 %v1261
    %v1263 = vpop.xlane.xlu0 %1262
    %v1264 = vadd.f32 %v1187, %v1188
    %1265 = vadd.xlane.f32.xlu0 %v1264
    %v1266 = vpop.xlane.xlu0 %1265
    %v1267 = vadd.f32 %v1189, %v1190
    %1268 = vadd.xlane.f32.xlu0 %v1267
    %v1269 = vpop.xlane.xlu0 %1268
    %v1270 = vadd.f32 %v1191, %v1192
    %1271 = vadd.xlane.f32.xlu0 %v1270
    %v1272 = vpop.xlane.xlu0 %1271
    %v1273 = vadd.f32 %v1193, %v1194
    %1274 = vadd.xlane.f32.xlu0 %v1273
    %v1275 = vpop.xlane.xlu0 %1274
    %v1276 = vadd.f32 %v1195, %v1196
    %1277 = vadd.xlane.f32.xlu0 %v1276
    %v1278 = vpop.xlane.xlu0 %1277
    %v1279 = vadd.f32 %v1197, %v1198
    %1280 = vadd.xlane.f32.xlu0 %v1279
    %v1281 = vpop.xlane.xlu0 %1280
    %v1282 = vadd.f32 %v1199, %v1200
    %1283 = vadd.xlane.f32.xlu0 %v1282
    %v1284 = vpop.xlane.xlu0 %1283
    %v1285 = vadd.f32 %v1201, %v1202
    %1286 = vadd.xlane.f32.xlu0 %v1285
    %v1287 = vpop.xlane.xlu0 %1286
    %v1288 = vadd.f32 %v1203, %v1204
    %1289 = vadd.xlane.f32.xlu0 %v1288
    %v1290 = vpop.xlane.xlu0 %1289
    %v1291 = vadd.f32 %v1205, %v1206
    %1292 = vadd.xlane.f32.xlu0 %v1291
    %v1293 = vpop.xlane.xlu0 %1292
    %v1294 = vadd.f32 %v1207, %v1208
    %1295 = vadd.xlane.f32.xlu0 %v1294
    %v1296 = vpop.xlane.xlu0 %1295
    %v1297 = vadd.f32 %v1209, %v1210
    %1298 = vadd.xlane.f32.xlu0 %v1297
    %v1299 = vpop.xlane.xlu0 %1298
    %v1300 = vadd.f32 %v1211, %v1212
    %1301 = vadd.xlane.f32.xlu0 %v1300
    %v1302 = vpop.xlane.xlu0 %1301
    %v1303 = vadd.f32 %v1213, %v1214
    %1304 = vadd.xlane.f32.xlu0 %v1303
    %v1305 = vpop.xlane.xlu0 %1304
    %v1306 = vadd.f32 %v1215, %v1216
    %1307 = vadd.xlane.f32.xlu0 %v1306
    %v1308 = vpop.xlane.xlu0 %1307
    %v1309 = vadd.f32 %v1217, %v1218
    %1310 = vadd.xlane.f32.xlu0 %v1309
    %v1311 = vpop.xlane.xlu0 %1310
    %v1312 = vadd.f32 %v1219, %v1220
    %1313 = vadd.xlane.f32.xlu0 %v1312
    %v1314 = vpop.xlane.xlu0 %1313
    %v1315 = vadd.f32 %v1221, %v1222
    %1316 = vadd.xlane.f32.xlu0 %v1315
    %v1317 = vpop.xlane.xlu0 %1316
    %v1318 = vadd.f32 %v1223, %v1224
    %1319 = vadd.xlane.f32.xlu0 %v1318
    %v1320 = vpop.xlane.xlu0 %1319
    %v1321 = vadd.f32 %v1227, 0.0
    %v1322 = vadd.f32 %v1230, 0.0
    %v1323 = vadd.f32 %v1233, 0.0
    %v1324 = vadd.f32 %v1236, 0.0
    %v1325 = vadd.f32 %v1239, 0.0
    %v1326 = vadd.f32 %v1242, 0.0
    %v1327 = vadd.f32 %v1245, 0.0
    %v1328 = vadd.f32 %v1248, 0.0
    %v1329 = vadd.f32 %v1251, 0.0
    %v1330 = vadd.f32 %v1254, 0.0
    %v1331 = vadd.f32 %v1257, 0.0
    %v1332 = vadd.f32 %v1260, 0.0
    %v1333 = vadd.f32 %v1263, 0.0
    %v1334 = vadd.f32 %v1266, 0.0
    %v1335 = vadd.f32 %v1269, 0.0
    %v1336 = vadd.f32 %v1272, 0.0
    %v1337 = vadd.f32 %v1275, 0.0
    %v1338 = vadd.f32 %v1278, 0.0
    %v1339 = vadd.f32 %v1281, 0.0
    %v1340 = vadd.f32 %v1284, 0.0
    %v1341 = vadd.f32 %v1287, 0.0
    %v1342 = vadd.f32 %v1290, 0.0
    %v1343 = vadd.f32 %v1293, 0.0
    %v1344 = vadd.f32 %v1296, 0.0
    %v1345 = vadd.f32 %v1299, 0.0
    %v1346 = vadd.f32 %v1302, 0.0
    %v1347 = vadd.f32 %v1305, 0.0
    %v1348 = vadd.f32 %v1308, 0.0
    %v1349 = vadd.f32 %v1311, 0.0
    %v1350 = vadd.f32 %v1314, 0.0
    %v1351 = vadd.f32 %v1317, 0.0
    %v1352 = vadd.f32 %v1320, 0.0
    %v1385 = vlaneseq
    %v1386 = vshrl.u32 %v1385, 7
    %v1387 = vsub.s32 0, %v1386
    %v1388 = vrot.slane %v1321, %v1387
    %v1389 = vlaneseq
    %v1390 = vshrl.u32 %v1389, 7
    %v1391 = vsub.s32 1, %v1390
    %v1392 = vrot.slane %v1321, %v1391
    %v1393 = vlaneseq
    %v1394 = vshrl.u32 %v1393, 7
    %v1395 = vsub.s32 2, %v1394
    %v1396 = vrot.slane %v1321, %v1395
    %v1397 = vlaneseq
    %v1398 = vshrl.u32 %v1397, 7
    %v1399 = vsub.s32 3, %v1398
    %v1400 = vrot.slane %v1321, %v1399
    %v1401 = vlaneseq
    %v1402 = vshrl.u32 %v1401, 7
    %v1403 = vsub.s32 4, %v1402
    %v1404 = vrot.slane %v1321, %v1403
    %v1405 = vlaneseq
    %v1406 = vshrl.u32 %v1405, 7
    %v1407 = vsub.s32 5, %v1406
    %v1408 = vrot.slane %v1321, %v1407
    %v1409 = vlaneseq
    %v1410 = vshrl.u32 %v1409, 7
    %v1411 = vsub.s32 6, %v1410
    %v1412 = vrot.slane %v1321, %v1411
    %v1413 = vlaneseq
    %v1414 = vshrl.u32 %v1413, 7
    %v1415 = vsub.s32 7, %v1414
    %v1416 = vrot.slane %v1321, %v1415
    %v1417 = vlaneseq
    %v1418 = vshrl.u32 %v1417, 7
    %v1419 = vsub.s32 0, %v1418
    %v1420 = vrot.slane %v1322, %v1419
    %v1421 = vlaneseq
    %v1422 = vshrl.u32 %v1421, 7
    %v1423 = vsub.s32 1, %v1422
    %v1424 = vrot.slane %v1322, %v1423
    %v1425 = vlaneseq
    %v1426 = vshrl.u32 %v1425, 7
    %v1427 = vsub.s32 2, %v1426
    %v1428 = vrot.slane %v1322, %v1427
    %v1429 = vlaneseq
    %v1430 = vshrl.u32 %v1429, 7
    %v1431 = vsub.s32 3, %v1430
    %v1432 = vrot.slane %v1322, %v1431
    %v1433 = vlaneseq
    %v1434 = vshrl.u32 %v1433, 7
    %v1435 = vsub.s32 4, %v1434
    %v1436 = vrot.slane %v1322, %v1435
    %v1437 = vlaneseq
    %v1438 = vshrl.u32 %v1437, 7
    %v1439 = vsub.s32 5, %v1438
    %v1440 = vrot.slane %v1322, %v1439
    %v1441 = vlaneseq
    %v1442 = vshrl.u32 %v1441, 7
    %v1443 = vsub.s32 6, %v1442
    %v1444 = vrot.slane %v1322, %v1443
    %v1445 = vlaneseq
    %v1446 = vshrl.u32 %v1445, 7
    %v1447 = vsub.s32 7, %v1446
    %v1448 = vrot.slane %v1322, %v1447
    %v1449 = vlaneseq
    %v1450 = vshrl.u32 %v1449, 7
    %v1451 = vsub.s32 0, %v1450
    %v1452 = vrot.slane %v1323, %v1451
    %v1453 = vlaneseq
    %v1454 = vshrl.u32 %v1453, 7
    %v1455 = vsub.s32 1, %v1454
    %v1456 = vrot.slane %v1323, %v1455
    %v1457 = vlaneseq
    %v1458 = vshrl.u32 %v1457, 7
    %v1459 = vsub.s32 2, %v1458
    %v1460 = vrot.slane %v1323, %v1459
    %v1461 = vlaneseq
    %v1462 = vshrl.u32 %v1461, 7
    %v1463 = vsub.s32 3, %v1462
    %v1464 = vrot.slane %v1323, %v1463
    %v1465 = vlaneseq
    %v1466 = vshrl.u32 %v1465, 7
    %v1467 = vsub.s32 4, %v1466
    %v1468 = vrot.slane %v1323, %v1467
    %v1469 = vlaneseq
    %v1470 = vshrl.u32 %v1469, 7
    %v1471 = vsub.s32 5, %v1470
    %v1472 = vrot.slane %v1323, %v1471
    %v1473 = vlaneseq
    %v1474 = vshrl.u32 %v1473, 7
    %v1475 = vsub.s32 6, %v1474
    %v1476 = vrot.slane %v1323, %v1475
    %v1477 = vlaneseq
    %v1478 = vshrl.u32 %v1477, 7
    %v1479 = vsub.s32 7, %v1478
    %v1480 = vrot.slane %v1323, %v1479
    %v1481 = vlaneseq
    %v1482 = vshrl.u32 %v1481, 7
    %v1483 = vsub.s32 0, %v1482
    %v1484 = vrot.slane %v1324, %v1483
    %v1485 = vlaneseq
    %v1486 = vshrl.u32 %v1485, 7
    %v1487 = vsub.s32 1, %v1486
    %v1488 = vrot.slane %v1324, %v1487
    %v1489 = vlaneseq
    %v1490 = vshrl.u32 %v1489, 7
    %v1491 = vsub.s32 2, %v1490
    %v1492 = vrot.slane %v1324, %v1491
    %v1493 = vlaneseq
    %v1494 = vshrl.u32 %v1493, 7
    %v1495 = vsub.s32 3, %v1494
    %v1496 = vrot.slane %v1324, %v1495
    %v1497 = vlaneseq
    %v1498 = vshrl.u32 %v1497, 7
    %v1499 = vsub.s32 4, %v1498
    %v1500 = vrot.slane %v1324, %v1499
    %v1501 = vlaneseq
    %v1502 = vshrl.u32 %v1501, 7
    %v1503 = vsub.s32 5, %v1502
    %v1504 = vrot.slane %v1324, %v1503
    %v1505 = vlaneseq
    %v1506 = vshrl.u32 %v1505, 7
    %v1507 = vsub.s32 6, %v1506
    %v1508 = vrot.slane %v1324, %v1507
    %v1509 = vlaneseq
    %v1510 = vshrl.u32 %v1509, 7
    %v1511 = vsub.s32 7, %v1510
    %v1512 = vrot.slane %v1324, %v1511
    %v1513 = vlaneseq
    %v1514 = vshrl.u32 %v1513, 7
    %v1515 = vsub.s32 0, %v1514
    %v1516 = vrot.slane %v1325, %v1515
    %v1517 = vlaneseq
    %v1518 = vshrl.u32 %v1517, 7
    %v1519 = vsub.s32 1, %v1518
    %v1520 = vrot.slane %v1325, %v1519
    %v1521 = vlaneseq
    %v1522 = vshrl.u32 %v1521, 7
    %v1523 = vsub.s32 2, %v1522
    %v1524 = vrot.slane %v1325, %v1523
    %v1525 = vlaneseq
    %v1526 = vshrl.u32 %v1525, 7
    %v1527 = vsub.s32 3, %v1526
    %v1528 = vrot.slane %v1325, %v1527
    %v1529 = vlaneseq
    %v1530 = vshrl.u32 %v1529, 7
    %v1531 = vsub.s32 4, %v1530
    %v1532 = vrot.slane %v1325, %v1531
    %v1533 = vlaneseq
    %v1534 = vshrl.u32 %v1533, 7
    %v1535 = vsub.s32 5, %v1534
    %v1536 = vrot.slane %v1325, %v1535
    %v1537 = vlaneseq
    %v1538 = vshrl.u32 %v1537, 7
    %v1539 = vsub.s32 6, %v1538
    %v1540 = vrot.slane %v1325, %v1539
    %v1541 = vlaneseq
    %v1542 = vshrl.u32 %v1541, 7
    %v1543 = vsub.s32 7, %v1542
    %v1544 = vrot.slane %v1325, %v1543
    %v1545 = vlaneseq
    %v1546 = vshrl.u32 %v1545, 7
    %v1547 = vsub.s32 0, %v1546
    %v1548 = vrot.slane %v1326, %v1547
    %v1549 = vlaneseq
    %v1550 = vshrl.u32 %v1549, 7
    %v1551 = vsub.s32 1, %v1550
    %v1552 = vrot.slane %v1326, %v1551
    %v1553 = vlaneseq
    %v1554 = vshrl.u32 %v1553, 7
    %v1555 = vsub.s32 2, %v1554
    %v1556 = vrot.slane %v1326, %v1555
    %v1557 = vlaneseq
    %v1558 = vshrl.u32 %v1557, 7
    %v1559 = vsub.s32 3, %v1558
    %v1560 = vrot.slane %v1326, %v1559
    %v1561 = vlaneseq
    %v1562 = vshrl.u32 %v1561, 7
    %v1563 = vsub.s32 4, %v1562
    %v1564 = vrot.slane %v1326, %v1563
    %v1565 = vlaneseq
    %v1566 = vshrl.u32 %v1565, 7
    %v1567 = vsub.s32 5, %v1566
    %v1568 = vrot.slane %v1326, %v1567
    %v1569 = vlaneseq
    %v1570 = vshrl.u32 %v1569, 7
    %v1571 = vsub.s32 6, %v1570
    %v1572 = vrot.slane %v1326, %v1571
    %v1573 = vlaneseq
    %v1574 = vshrl.u32 %v1573, 7
    %v1575 = vsub.s32 7, %v1574
    %v1576 = vrot.slane %v1326, %v1575
    %v1577 = vlaneseq
    %v1578 = vshrl.u32 %v1577, 7
    %v1579 = vsub.s32 0, %v1578
    %v1580 = vrot.slane %v1327, %v1579
    %v1581 = vlaneseq
    %v1582 = vshrl.u32 %v1581, 7
    %v1583 = vsub.s32 1, %v1582
    %v1584 = vrot.slane %v1327, %v1583
    %v1585 = vlaneseq
    %v1586 = vshrl.u32 %v1585, 7
    %v1587 = vsub.s32 2, %v1586
    %v1588 = vrot.slane %v1327, %v1587
    %v1589 = vlaneseq
    %v1590 = vshrl.u32 %v1589, 7
    %v1591 = vsub.s32 3, %v1590
    %v1592 = vrot.slane %v1327, %v1591
    %v1593 = vlaneseq
    %v1594 = vshrl.u32 %v1593, 7
    %v1595 = vsub.s32 4, %v1594
    %v1596 = vrot.slane %v1327, %v1595
    %v1597 = vlaneseq
    %v1598 = vshrl.u32 %v1597, 7
    %v1599 = vsub.s32 5, %v1598
    %v1600 = vrot.slane %v1327, %v1599
    %v1601 = vlaneseq
    %v1602 = vshrl.u32 %v1601, 7
    %v1603 = vsub.s32 6, %v1602
    %v1604 = vrot.slane %v1327, %v1603
    %v1605 = vlaneseq
    %v1606 = vshrl.u32 %v1605, 7
    %v1607 = vsub.s32 7, %v1606
    %v1608 = vrot.slane %v1327, %v1607
    %v1609 = vlaneseq
    %v1610 = vshrl.u32 %v1609, 7
    %v1611 = vsub.s32 0, %v1610
    %v1612 = vrot.slane %v1328, %v1611
    %v1613 = vlaneseq
    %v1614 = vshrl.u32 %v1613, 7
    %v1615 = vsub.s32 1, %v1614
    %v1616 = vrot.slane %v1328, %v1615
    %v1617 = vlaneseq
    %v1618 = vshrl.u32 %v1617, 7
    %v1619 = vsub.s32 2, %v1618
    %v1620 = vrot.slane %v1328, %v1619
    %v1621 = vlaneseq
    %v1622 = vshrl.u32 %v1621, 7
    %v1623 = vsub.s32 3, %v1622
    %v1624 = vrot.slane %v1328, %v1623
    %v1625 = vlaneseq
    %v1626 = vshrl.u32 %v1625, 7
    %v1627 = vsub.s32 4, %v1626
    %v1628 = vrot.slane %v1328, %v1627
    %v1629 = vlaneseq
    %v1630 = vshrl.u32 %v1629, 7
    %v1631 = vsub.s32 5, %v1630
    %v1632 = vrot.slane %v1328, %v1631
    %v1633 = vlaneseq
    %v1634 = vshrl.u32 %v1633, 7
    %v1635 = vsub.s32 6, %v1634
    %v1636 = vrot.slane %v1328, %v1635
    %v1637 = vlaneseq
    %v1638 = vshrl.u32 %v1637, 7
    %v1639 = vsub.s32 7, %v1638
    %v1640 = vrot.slane %v1328, %v1639
    %v1641 = vlaneseq
    %v1642 = vshrl.u32 %v1641, 7
    %v1643 = vsub.s32 0, %v1642
    %v1644 = vrot.slane %v1329, %v1643
    %v1645 = vlaneseq
    %v1646 = vshrl.u32 %v1645, 7
    %v1647 = vsub.s32 1, %v1646
    %v1648 = vrot.slane %v1329, %v1647
    %v1649 = vlaneseq
    %v1650 = vshrl.u32 %v1649, 7
    %v1651 = vsub.s32 2, %v1650
    %v1652 = vrot.slane %v1329, %v1651
    %v1653 = vlaneseq
    %v1654 = vshrl.u32 %v1653, 7
    %v1655 = vsub.s32 3, %v1654
    %v1656 = vrot.slane %v1329, %v1655
    %v1657 = vlaneseq
    %v1658 = vshrl.u32 %v1657, 7
    %v1659 = vsub.s32 4, %v1658
    %v1660 = vrot.slane %v1329, %v1659
    %v1661 = vlaneseq
    %v1662 = vshrl.u32 %v1661, 7
    %v1663 = vsub.s32 5, %v1662
    %v1664 = vrot.slane %v1329, %v1663
    %v1665 = vlaneseq
    %v1666 = vshrl.u32 %v1665, 7
    %v1667 = vsub.s32 6, %v1666
    %v1668 = vrot.slane %v1329, %v1667
    %v1669 = vlaneseq
    %v1670 = vshrl.u32 %v1669, 7
    %v1671 = vsub.s32 7, %v1670
    %v1672 = vrot.slane %v1329, %v1671
    %v1673 = vlaneseq
    %v1674 = vshrl.u32 %v1673, 7
    %v1675 = vsub.s32 0, %v1674
    %v1676 = vrot.slane %v1330, %v1675
    %v1677 = vlaneseq
    %v1678 = vshrl.u32 %v1677, 7
    %v1679 = vsub.s32 1, %v1678
    %v1680 = vrot.slane %v1330, %v1679
    %v1681 = vlaneseq
    %v1682 = vshrl.u32 %v1681, 7
    %v1683 = vsub.s32 2, %v1682
    %v1684 = vrot.slane %v1330, %v1683
    %v1685 = vlaneseq
    %v1686 = vshrl.u32 %v1685, 7
    %v1687 = vsub.s32 3, %v1686
    %v1688 = vrot.slane %v1330, %v1687
    %v1689 = vlaneseq
    %v1690 = vshrl.u32 %v1689, 7
    %v1691 = vsub.s32 4, %v1690
    %v1692 = vrot.slane %v1330, %v1691
    %v1693 = vlaneseq
    %v1694 = vshrl.u32 %v1693, 7
    %v1695 = vsub.s32 5, %v1694
    %v1696 = vrot.slane %v1330, %v1695
    %v1697 = vlaneseq
    %v1698 = vshrl.u32 %v1697, 7
    %v1699 = vsub.s32 6, %v1698
    %v1700 = vrot.slane %v1330, %v1699
    %v1701 = vlaneseq
    %v1702 = vshrl.u32 %v1701, 7
    %v1703 = vsub.s32 7, %v1702
    %v1704 = vrot.slane %v1330, %v1703
    %v1705 = vlaneseq
    %v1706 = vshrl.u32 %v1705, 7
    %v1707 = vsub.s32 0, %v1706
    %v1708 = vrot.slane %v1331, %v1707
    %v1709 = vlaneseq
    %v1710 = vshrl.u32 %v1709, 7
    %v1711 = vsub.s32 1, %v1710
    %v1712 = vrot.slane %v1331, %v1711
    %v1713 = vlaneseq
    %v1714 = vshrl.u32 %v1713, 7
    %v1715 = vsub.s32 2, %v1714
    %v1716 = vrot.slane %v1331, %v1715
    %v1717 = vlaneseq
    %v1718 = vshrl.u32 %v1717, 7
    %v1719 = vsub.s32 3, %v1718
    %v1720 = vrot.slane %v1331, %v1719
    %v1721 = vlaneseq
    %v1722 = vshrl.u32 %v1721, 7
    %v1723 = vsub.s32 4, %v1722
    %v1724 = vrot.slane %v1331, %v1723
    %v1725 = vlaneseq
    %v1726 = vshrl.u32 %v1725, 7
    %v1727 = vsub.s32 5, %v1726
    %v1728 = vrot.slane %v1331, %v1727
    %v1729 = vlaneseq
    %v1730 = vshrl.u32 %v1729, 7
    %v1731 = vsub.s32 6, %v1730
    %v1732 = vrot.slane %v1331, %v1731
    %v1733 = vlaneseq
    %v1734 = vshrl.u32 %v1733, 7
    %v1735 = vsub.s32 7, %v1734
    %v1736 = vrot.slane %v1331, %v1735
    %v1737 = vlaneseq
    %v1738 = vshrl.u32 %v1737, 7
    %v1739 = vsub.s32 0, %v1738
    %v1740 = vrot.slane %v1332, %v1739
    %v1741 = vlaneseq
    %v1742 = vshrl.u32 %v1741, 7
    %v1743 = vsub.s32 1, %v1742
    %v1744 = vrot.slane %v1332, %v1743
    %v1745 = vlaneseq
    %v1746 = vshrl.u32 %v1745, 7
    %v1747 = vsub.s32 2, %v1746
    %v1748 = vrot.slane %v1332, %v1747
    %v1749 = vlaneseq
    %v1750 = vshrl.u32 %v1749, 7
    %v1751 = vsub.s32 3, %v1750
    %v1752 = vrot.slane %v1332, %v1751
    %v1753 = vlaneseq
    %v1754 = vshrl.u32 %v1753, 7
    %v1755 = vsub.s32 4, %v1754
    %v1756 = vrot.slane %v1332, %v1755
    %v1757 = vlaneseq
    %v1758 = vshrl.u32 %v1757, 7
    %v1759 = vsub.s32 5, %v1758
    %v1760 = vrot.slane %v1332, %v1759
    %v1761 = vlaneseq
    %v1762 = vshrl.u32 %v1761, 7
    %v1763 = vsub.s32 6, %v1762
    %v1764 = vrot.slane %v1332, %v1763
    %v1765 = vlaneseq
    %v1766 = vshrl.u32 %v1765, 7
    %v1767 = vsub.s32 7, %v1766
    %v1768 = vrot.slane %v1332, %v1767
    %v1769 = vlaneseq
    %v1770 = vshrl.u32 %v1769, 7
    %v1771 = vsub.s32 0, %v1770
    %v1772 = vrot.slane %v1333, %v1771
    %v1773 = vlaneseq
    %v1774 = vshrl.u32 %v1773, 7
    %v1775 = vsub.s32 1, %v1774
    %v1776 = vrot.slane %v1333, %v1775
    %v1777 = vlaneseq
    %v1778 = vshrl.u32 %v1777, 7
    %v1779 = vsub.s32 2, %v1778
    %v1780 = vrot.slane %v1333, %v1779
    %v1781 = vlaneseq
    %v1782 = vshrl.u32 %v1781, 7
    %v1783 = vsub.s32 3, %v1782
    %v1784 = vrot.slane %v1333, %v1783
    %v1785 = vlaneseq
    %v1786 = vshrl.u32 %v1785, 7
    %v1787 = vsub.s32 4, %v1786
    %v1788 = vrot.slane %v1333, %v1787
    %v1789 = vlaneseq
    %v1790 = vshrl.u32 %v1789, 7
    %v1791 = vsub.s32 5, %v1790
    %v1792 = vrot.slane %v1333, %v1791
    %v1793 = vlaneseq
    %v1794 = vshrl.u32 %v1793, 7
    %v1795 = vsub.s32 6, %v1794
    %v1796 = vrot.slane %v1333, %v1795
    %v1797 = vlaneseq
    %v1798 = vshrl.u32 %v1797, 7
    %v1799 = vsub.s32 7, %v1798
    %v1800 = vrot.slane %v1333, %v1799
    %v1801 = vlaneseq
    %v1802 = vshrl.u32 %v1801, 7
    %v1803 = vsub.s32 0, %v1802
    %v1804 = vrot.slane %v1334, %v1803
    %v1805 = vlaneseq
    %v1806 = vshrl.u32 %v1805, 7
    %v1807 = vsub.s32 1, %v1806
    %v1808 = vrot.slane %v1334, %v1807
    %v1809 = vlaneseq
    %v1810 = vshrl.u32 %v1809, 7
    %v1811 = vsub.s32 2, %v1810
    %v1812 = vrot.slane %v1334, %v1811
    %v1813 = vlaneseq
    %v1814 = vshrl.u32 %v1813, 7
    %v1815 = vsub.s32 3, %v1814
    %v1816 = vrot.slane %v1334, %v1815
    %v1817 = vlaneseq
    %v1818 = vshrl.u32 %v1817, 7
    %v1819 = vsub.s32 4, %v1818
    %v1820 = vrot.slane %v1334, %v1819
    %v1821 = vlaneseq
    %v1822 = vshrl.u32 %v1821, 7
    %v1823 = vsub.s32 5, %v1822
    %v1824 = vrot.slane %v1334, %v1823
    %v1825 = vlaneseq
    %v1826 = vshrl.u32 %v1825, 7
    %v1827 = vsub.s32 6, %v1826
    %v1828 = vrot.slane %v1334, %v1827
    %v1829 = vlaneseq
    %v1830 = vshrl.u32 %v1829, 7
    %v1831 = vsub.s32 7, %v1830
    %v1832 = vrot.slane %v1334, %v1831
    %v1833 = vlaneseq
    %v1834 = vshrl.u32 %v1833, 7
    %v1835 = vsub.s32 0, %v1834
    %v1836 = vrot.slane %v1335, %v1835
    %v1837 = vlaneseq
    %v1838 = vshrl.u32 %v1837, 7
    %v1839 = vsub.s32 1, %v1838
    %v1840 = vrot.slane %v1335, %v1839
    %v1841 = vlaneseq
    %v1842 = vshrl.u32 %v1841, 7
    %v1843 = vsub.s32 2, %v1842
    %v1844 = vrot.slane %v1335, %v1843
    %v1845 = vlaneseq
    %v1846 = vshrl.u32 %v1845, 7
    %v1847 = vsub.s32 3, %v1846
    %v1848 = vrot.slane %v1335, %v1847
    %v1849 = vlaneseq
    %v1850 = vshrl.u32 %v1849, 7
    %v1851 = vsub.s32 4, %v1850
    %v1852 = vrot.slane %v1335, %v1851
    %v1853 = vlaneseq
    %v1854 = vshrl.u32 %v1853, 7
    %v1855 = vsub.s32 5, %v1854
    %v1856 = vrot.slane %v1335, %v1855
    %v1857 = vlaneseq
    %v1858 = vshrl.u32 %v1857, 7
    %v1859 = vsub.s32 6, %v1858
    %v1860 = vrot.slane %v1335, %v1859
    %v1861 = vlaneseq
    %v1862 = vshrl.u32 %v1861, 7
    %v1863 = vsub.s32 7, %v1862
    %v1864 = vrot.slane %v1335, %v1863
    %v1865 = vlaneseq
    %v1866 = vshrl.u32 %v1865, 7
    %v1867 = vsub.s32 0, %v1866
    %v1868 = vrot.slane %v1336, %v1867
    %v1869 = vlaneseq
    %v1870 = vshrl.u32 %v1869, 7
    %v1871 = vsub.s32 1, %v1870
    %v1872 = vrot.slane %v1336, %v1871
    %v1873 = vlaneseq
    %v1874 = vshrl.u32 %v1873, 7
    %v1875 = vsub.s32 2, %v1874
    %v1876 = vrot.slane %v1336, %v1875
    %v1877 = vlaneseq
    %v1878 = vshrl.u32 %v1877, 7
    %v1879 = vsub.s32 3, %v1878
    %v1880 = vrot.slane %v1336, %v1879
    %v1881 = vlaneseq
    %v1882 = vshrl.u32 %v1881, 7
    %v1883 = vsub.s32 4, %v1882
    %v1884 = vrot.slane %v1336, %v1883
    %v1885 = vlaneseq
    %v1886 = vshrl.u32 %v1885, 7
    %v1887 = vsub.s32 5, %v1886
    %v1888 = vrot.slane %v1336, %v1887
    %v1889 = vlaneseq
    %v1890 = vshrl.u32 %v1889, 7
    %v1891 = vsub.s32 6, %v1890
    %v1892 = vrot.slane %v1336, %v1891
    %v1893 = vlaneseq
    %v1894 = vshrl.u32 %v1893, 7
    %v1895 = vsub.s32 7, %v1894
    %v1896 = vrot.slane %v1336, %v1895
    %v1897 = vlaneseq
    %v1898 = vshrl.u32 %v1897, 7
    %v1899 = vsub.s32 0, %v1898
    %v1900 = vrot.slane %v1337, %v1899
    %v1901 = vlaneseq
    %v1902 = vshrl.u32 %v1901, 7
    %v1903 = vsub.s32 1, %v1902
    %v1904 = vrot.slane %v1337, %v1903
    %v1905 = vlaneseq
    %v1906 = vshrl.u32 %v1905, 7
    %v1907 = vsub.s32 2, %v1906
    %v1908 = vrot.slane %v1337, %v1907
    %v1909 = vlaneseq
    %v1910 = vshrl.u32 %v1909, 7
    %v1911 = vsub.s32 3, %v1910
    %v1912 = vrot.slane %v1337, %v1911
    %v1913 = vlaneseq
    %v1914 = vshrl.u32 %v1913, 7
    %v1915 = vsub.s32 4, %v1914
    %v1916 = vrot.slane %v1337, %v1915
    %v1917 = vlaneseq
    %v1918 = vshrl.u32 %v1917, 7
    %v1919 = vsub.s32 5, %v1918
    %v1920 = vrot.slane %v1337, %v1919
    %v1921 = vlaneseq
    %v1922 = vshrl.u32 %v1921, 7
    %v1923 = vsub.s32 6, %v1922
    %v1924 = vrot.slane %v1337, %v1923
    %v1925 = vlaneseq
    %v1926 = vshrl.u32 %v1925, 7
    %v1927 = vsub.s32 7, %v1926
    %v1928 = vrot.slane %v1337, %v1927
    %v1929 = vlaneseq
    %v1930 = vshrl.u32 %v1929, 7
    %v1931 = vsub.s32 0, %v1930
    %v1932 = vrot.slane %v1338, %v1931
    %v1933 = vlaneseq
    %v1934 = vshrl.u32 %v1933, 7
    %v1935 = vsub.s32 1, %v1934
    %v1936 = vrot.slane %v1338, %v1935
    %v1937 = vlaneseq
    %v1938 = vshrl.u32 %v1937, 7
    %v1939 = vsub.s32 2, %v1938
    %v1940 = vrot.slane %v1338, %v1939
    %v1941 = vlaneseq
    %v1942 = vshrl.u32 %v1941, 7
    %v1943 = vsub.s32 3, %v1942
    %v1944 = vrot.slane %v1338, %v1943
    %v1945 = vlaneseq
    %v1946 = vshrl.u32 %v1945, 7
    %v1947 = vsub.s32 4, %v1946
    %v1948 = vrot.slane %v1338, %v1947
    %v1949 = vlaneseq
    %v1950 = vshrl.u32 %v1949, 7
    %v1951 = vsub.s32 5, %v1950
    %v1952 = vrot.slane %v1338, %v1951
    %v1953 = vlaneseq
    %v1954 = vshrl.u32 %v1953, 7
    %v1955 = vsub.s32 6, %v1954
    %v1956 = vrot.slane %v1338, %v1955
    %v1957 = vlaneseq
    %v1958 = vshrl.u32 %v1957, 7
    %v1959 = vsub.s32 7, %v1958
    %v1960 = vrot.slane %v1338, %v1959
    %v1961 = vlaneseq
    %v1962 = vshrl.u32 %v1961, 7
    %v1963 = vsub.s32 0, %v1962
    %v1964 = vrot.slane %v1339, %v1963
    %v1965 = vlaneseq
    %v1966 = vshrl.u32 %v1965, 7
    %v1967 = vsub.s32 1, %v1966
    %v1968 = vrot.slane %v1339, %v1967
    %v1969 = vlaneseq
    %v1970 = vshrl.u32 %v1969, 7
    %v1971 = vsub.s32 2, %v1970
    %v1972 = vrot.slane %v1339, %v1971
    %v1973 = vlaneseq
    %v1974 = vshrl.u32 %v1973, 7
    %v1975 = vsub.s32 3, %v1974
    %v1976 = vrot.slane %v1339, %v1975
    %v1977 = vlaneseq
    %v1978 = vshrl.u32 %v1977, 7
    %v1979 = vsub.s32 4, %v1978
    %v1980 = vrot.slane %v1339, %v1979
    %v1981 = vlaneseq
    %v1982 = vshrl.u32 %v1981, 7
    %v1983 = vsub.s32 5, %v1982
    %v1984 = vrot.slane %v1339, %v1983
    %v1985 = vlaneseq
    %v1986 = vshrl.u32 %v1985, 7
    %v1987 = vsub.s32 6, %v1986
    %v1988 = vrot.slane %v1339, %v1987
    %v1989 = vlaneseq
    %v1990 = vshrl.u32 %v1989, 7
    %v1991 = vsub.s32 7, %v1990
    %v1992 = vrot.slane %v1339, %v1991
    %v1993 = vlaneseq
    %v1994 = vshrl.u32 %v1993, 7
    %v1995 = vsub.s32 0, %v1994
    %v1996 = vrot.slane %v1340, %v1995
    %v1997 = vlaneseq
    %v1998 = vshrl.u32 %v1997, 7
    %v1999 = vsub.s32 1, %v1998
    %v2000 = vrot.slane %v1340, %v1999
    %v2001 = vlaneseq
    %v2002 = vshrl.u32 %v2001, 7
    %v2003 = vsub.s32 2, %v2002
    %v2004 = vrot.slane %v1340, %v2003
    %v2005 = vlaneseq
    %v2006 = vshrl.u32 %v2005, 7
    %v2007 = vsub.s32 3, %v2006
    %v2008 = vrot.slane %v1340, %v2007
    %v2009 = vlaneseq
    %v2010 = vshrl.u32 %v2009, 7
    %v2011 = vsub.s32 4, %v2010
    %v2012 = vrot.slane %v1340, %v2011
    %v2013 = vlaneseq
    %v2014 = vshrl.u32 %v2013, 7
    %v2015 = vsub.s32 5, %v2014
    %v2016 = vrot.slane %v1340, %v2015
    %v2017 = vlaneseq
    %v2018 = vshrl.u32 %v2017, 7
    %v2019 = vsub.s32 6, %v2018
    %v2020 = vrot.slane %v1340, %v2019
    %v2021 = vlaneseq
    %v2022 = vshrl.u32 %v2021, 7
    %v2023 = vsub.s32 7, %v2022
    %v2024 = vrot.slane %v1340, %v2023
    %v2025 = vlaneseq
    %v2026 = vshrl.u32 %v2025, 7
    %v2027 = vsub.s32 0, %v2026
    %v2028 = vrot.slane %v1341, %v2027
    %v2029 = vlaneseq
    %v2030 = vshrl.u32 %v2029, 7
    %v2031 = vsub.s32 1, %v2030
    %v2032 = vrot.slane %v1341, %v2031
    %v2033 = vlaneseq
    %v2034 = vshrl.u32 %v2033, 7
    %v2035 = vsub.s32 2, %v2034
    %v2036 = vrot.slane %v1341, %v2035
    %v2037 = vlaneseq
    %v2038 = vshrl.u32 %v2037, 7
    %v2039 = vsub.s32 3, %v2038
    %v2040 = vrot.slane %v1341, %v2039
    %v2041 = vlaneseq
    %v2042 = vshrl.u32 %v2041, 7
    %v2043 = vsub.s32 4, %v2042
    %v2044 = vrot.slane %v1341, %v2043
    %v2045 = vlaneseq
    %v2046 = vshrl.u32 %v2045, 7
    %v2047 = vsub.s32 5, %v2046
    %v2048 = vrot.slane %v1341, %v2047
    %v2049 = vlaneseq
    %v2050 = vshrl.u32 %v2049, 7
    %v2051 = vsub.s32 6, %v2050
    %v2052 = vrot.slane %v1341, %v2051
    %v2053 = vlaneseq
    %v2054 = vshrl.u32 %v2053, 7
    %v2055 = vsub.s32 7, %v2054
    %v2056 = vrot.slane %v1341, %v2055
    %v2057 = vlaneseq
    %v2058 = vshrl.u32 %v2057, 7
    %v2059 = vsub.s32 0, %v2058
    %v2060 = vrot.slane %v1342, %v2059
    %v2061 = vlaneseq
    %v2062 = vshrl.u32 %v2061, 7
    %v2063 = vsub.s32 1, %v2062
    %v2064 = vrot.slane %v1342, %v2063
    %v2065 = vlaneseq
    %v2066 = vshrl.u32 %v2065, 7
    %v2067 = vsub.s32 2, %v2066
    %v2068 = vrot.slane %v1342, %v2067
    %v2069 = vlaneseq
    %v2070 = vshrl.u32 %v2069, 7
    %v2071 = vsub.s32 3, %v2070
    %v2072 = vrot.slane %v1342, %v2071
    %v2073 = vlaneseq
    %v2074 = vshrl.u32 %v2073, 7
    %v2075 = vsub.s32 4, %v2074
    %v2076 = vrot.slane %v1342, %v2075
    %v2077 = vlaneseq
    %v2078 = vshrl.u32 %v2077, 7
    %v2079 = vsub.s32 5, %v2078
    %v2080 = vrot.slane %v1342, %v2079
    %v2081 = vlaneseq
    %v2082 = vshrl.u32 %v2081, 7
    %v2083 = vsub.s32 6, %v2082
    %v2084 = vrot.slane %v1342, %v2083
    %v2085 = vlaneseq
    %v2086 = vshrl.u32 %v2085, 7
    %v2087 = vsub.s32 7, %v2086
    %v2088 = vrot.slane %v1342, %v2087
    %v2089 = vlaneseq
    %v2090 = vshrl.u32 %v2089, 7
    %v2091 = vsub.s32 0, %v2090
    %v2092 = vrot.slane %v1343, %v2091
    %v2093 = vlaneseq
    %v2094 = vshrl.u32 %v2093, 7
    %v2095 = vsub.s32 1, %v2094
    %v2096 = vrot.slane %v1343, %v2095
    %v2097 = vlaneseq
    %v2098 = vshrl.u32 %v2097, 7
    %v2099 = vsub.s32 2, %v2098
    %v2100 = vrot.slane %v1343, %v2099
    %v2101 = vlaneseq
    %v2102 = vshrl.u32 %v2101, 7
    %v2103 = vsub.s32 3, %v2102
    %v2104 = vrot.slane %v1343, %v2103
    %v2105 = vlaneseq
    %v2106 = vshrl.u32 %v2105, 7
    %v2107 = vsub.s32 4, %v2106
    %v2108 = vrot.slane %v1343, %v2107
    %v2109 = vlaneseq
    %v2110 = vshrl.u32 %v2109, 7
    %v2111 = vsub.s32 5, %v2110
    %v2112 = vrot.slane %v1343, %v2111
    %v2113 = vlaneseq
    %v2114 = vshrl.u32 %v2113, 7
    %v2115 = vsub.s32 6, %v2114
    %v2116 = vrot.slane %v1343, %v2115
    %v2117 = vlaneseq
    %v2118 = vshrl.u32 %v2117, 7
    %v2119 = vsub.s32 7, %v2118
    %v2120 = vrot.slane %v1343, %v2119
    %v2121 = vlaneseq
    %v2122 = vshrl.u32 %v2121, 7
    %v2123 = vsub.s32 0, %v2122
    %v2124 = vrot.slane %v1344, %v2123
    %v2125 = vlaneseq
    %v2126 = vshrl.u32 %v2125, 7
    %v2127 = vsub.s32 1, %v2126
    %v2128 = vrot.slane %v1344, %v2127
    %v2129 = vlaneseq
    %v2130 = vshrl.u32 %v2129, 7
    %v2131 = vsub.s32 2, %v2130
    %v2132 = vrot.slane %v1344, %v2131
    %v2133 = vlaneseq
    %v2134 = vshrl.u32 %v2133, 7
    %v2135 = vsub.s32 3, %v2134
    %v2136 = vrot.slane %v1344, %v2135
    %v2137 = vlaneseq
    %v2138 = vshrl.u32 %v2137, 7
    %v2139 = vsub.s32 4, %v2138
    %v2140 = vrot.slane %v1344, %v2139
    %v2141 = vlaneseq
    %v2142 = vshrl.u32 %v2141, 7
    %v2143 = vsub.s32 5, %v2142
    %v2144 = vrot.slane %v1344, %v2143
    %v2145 = vlaneseq
    %v2146 = vshrl.u32 %v2145, 7
    %v2147 = vsub.s32 6, %v2146
    %v2148 = vrot.slane %v1344, %v2147
    %v2149 = vlaneseq
    %v2150 = vshrl.u32 %v2149, 7
    %v2151 = vsub.s32 7, %v2150
    %v2152 = vrot.slane %v1344, %v2151
    %v2153 = vlaneseq
    %v2154 = vshrl.u32 %v2153, 7
    %v2155 = vsub.s32 0, %v2154
    %v2156 = vrot.slane %v1345, %v2155
    %v2157 = vlaneseq
    %v2158 = vshrl.u32 %v2157, 7
    %v2159 = vsub.s32 1, %v2158
    %v2160 = vrot.slane %v1345, %v2159
    %v2161 = vlaneseq
    %v2162 = vshrl.u32 %v2161, 7
    %v2163 = vsub.s32 2, %v2162
    %v2164 = vrot.slane %v1345, %v2163
    %v2165 = vlaneseq
    %v2166 = vshrl.u32 %v2165, 7
    %v2167 = vsub.s32 3, %v2166
    %v2168 = vrot.slane %v1345, %v2167
    %v2169 = vlaneseq
    %v2170 = vshrl.u32 %v2169, 7
    %v2171 = vsub.s32 4, %v2170
    %v2172 = vrot.slane %v1345, %v2171
    %v2173 = vlaneseq
    %v2174 = vshrl.u32 %v2173, 7
    %v2175 = vsub.s32 5, %v2174
    %v2176 = vrot.slane %v1345, %v2175
    %v2177 = vlaneseq
    %v2178 = vshrl.u32 %v2177, 7
    %v2179 = vsub.s32 6, %v2178
    %v2180 = vrot.slane %v1345, %v2179
    %v2181 = vlaneseq
    %v2182 = vshrl.u32 %v2181, 7
    %v2183 = vsub.s32 7, %v2182
    %v2184 = vrot.slane %v1345, %v2183
    %v2185 = vlaneseq
    %v2186 = vshrl.u32 %v2185, 7
    %v2187 = vsub.s32 0, %v2186
    %v2188 = vrot.slane %v1346, %v2187
    %v2189 = vlaneseq
    %v2190 = vshrl.u32 %v2189, 7
    %v2191 = vsub.s32 1, %v2190
    %v2192 = vrot.slane %v1346, %v2191
    %v2193 = vlaneseq
    %v2194 = vshrl.u32 %v2193, 7
    %v2195 = vsub.s32 2, %v2194
    %v2196 = vrot.slane %v1346, %v2195
    %v2197 = vlaneseq
    %v2198 = vshrl.u32 %v2197, 7
    %v2199 = vsub.s32 3, %v2198
    %v2200 = vrot.slane %v1346, %v2199
    %v2201 = vlaneseq
    %v2202 = vshrl.u32 %v2201, 7
    %v2203 = vsub.s32 4, %v2202
    %v2204 = vrot.slane %v1346, %v2203
    %v2205 = vlaneseq
    %v2206 = vshrl.u32 %v2205, 7
    %v2207 = vsub.s32 5, %v2206
    %v2208 = vrot.slane %v1346, %v2207
    %v2209 = vlaneseq
    %v2210 = vshrl.u32 %v2209, 7
    %v2211 = vsub.s32 6, %v2210
    %v2212 = vrot.slane %v1346, %v2211
    %v2213 = vlaneseq
    %v2214 = vshrl.u32 %v2213, 7
    %v2215 = vsub.s32 7, %v2214
    %v2216 = vrot.slane %v1346, %v2215
    %v2217 = vlaneseq
    %v2218 = vshrl.u32 %v2217, 7
    %v2219 = vsub.s32 0, %v2218
    %v2220 = vrot.slane %v1347, %v2219
    %v2221 = vlaneseq
    %v2222 = vshrl.u32 %v2221, 7
    %v2223 = vsub.s32 1, %v2222
    %v2224 = vrot.slane %v1347, %v2223
    %v2225 = vlaneseq
    %v2226 = vshrl.u32 %v2225, 7
    %v2227 = vsub.s32 2, %v2226
    %v2228 = vrot.slane %v1347, %v2227
    %v2229 = vlaneseq
    %v2230 = vshrl.u32 %v2229, 7
    %v2231 = vsub.s32 3, %v2230
    %v2232 = vrot.slane %v1347, %v2231
    %v2233 = vlaneseq
    %v2234 = vshrl.u32 %v2233, 7
    %v2235 = vsub.s32 4, %v2234
    %v2236 = vrot.slane %v1347, %v2235
    %v2237 = vlaneseq
    %v2238 = vshrl.u32 %v2237, 7
    %v2239 = vsub.s32 5, %v2238
    %v2240 = vrot.slane %v1347, %v2239
    %v2241 = vlaneseq
    %v2242 = vshrl.u32 %v2241, 7
    %v2243 = vsub.s32 6, %v2242
    %v2244 = vrot.slane %v1347, %v2243
    %v2245 = vlaneseq
    %v2246 = vshrl.u32 %v2245, 7
    %v2247 = vsub.s32 7, %v2246
    %v2248 = vrot.slane %v1347, %v2247
    %v2249 = vlaneseq
    %v2250 = vshrl.u32 %v2249, 7
    %v2251 = vsub.s32 0, %v2250
    %v2252 = vrot.slane %v1348, %v2251
    %v2253 = vlaneseq
    %v2254 = vshrl.u32 %v2253, 7
    %v2255 = vsub.s32 1, %v2254
    %v2256 = vrot.slane %v1348, %v2255
    %v2257 = vlaneseq
    %v2258 = vshrl.u32 %v2257, 7
    %v2259 = vsub.s32 2, %v2258
    %v2260 = vrot.slane %v1348, %v2259
    %v2261 = vlaneseq
    %v2262 = vshrl.u32 %v2261, 7
    %v2263 = vsub.s32 3, %v2262
    %v2264 = vrot.slane %v1348, %v2263
    %v2265 = vlaneseq
    %v2266 = vshrl.u32 %v2265, 7
    %v2267 = vsub.s32 4, %v2266
    %v2268 = vrot.slane %v1348, %v2267
    %v2269 = vlaneseq
    %v2270 = vshrl.u32 %v2269, 7
    %v2271 = vsub.s32 5, %v2270
    %v2272 = vrot.slane %v1348, %v2271
    %v2273 = vlaneseq
    %v2274 = vshrl.u32 %v2273, 7
    %v2275 = vsub.s32 6, %v2274
    %v2276 = vrot.slane %v1348, %v2275
    %v2277 = vlaneseq
    %v2278 = vshrl.u32 %v2277, 7
    %v2279 = vsub.s32 7, %v2278
    %v2280 = vrot.slane %v1348, %v2279
    %v2281 = vlaneseq
    %v2282 = vshrl.u32 %v2281, 7
    %v2283 = vsub.s32 0, %v2282
    %v2284 = vrot.slane %v1349, %v2283
    %v2285 = vlaneseq
    %v2286 = vshrl.u32 %v2285, 7
    %v2287 = vsub.s32 1, %v2286
    %v2288 = vrot.slane %v1349, %v2287
    %v2289 = vlaneseq
    %v2290 = vshrl.u32 %v2289, 7
    %v2291 = vsub.s32 2, %v2290
    %v2292 = vrot.slane %v1349, %v2291
    %v2293 = vlaneseq
    %v2294 = vshrl.u32 %v2293, 7
    %v2295 = vsub.s32 3, %v2294
    %v2296 = vrot.slane %v1349, %v2295
    %v2297 = vlaneseq
    %v2298 = vshrl.u32 %v2297, 7
    %v2299 = vsub.s32 4, %v2298
    %v2300 = vrot.slane %v1349, %v2299
    %v2301 = vlaneseq
    %v2302 = vshrl.u32 %v2301, 7
    %v2303 = vsub.s32 5, %v2302
    %v2304 = vrot.slane %v1349, %v2303
    %v2305 = vlaneseq
    %v2306 = vshrl.u32 %v2305, 7
    %v2307 = vsub.s32 6, %v2306
    %v2308 = vrot.slane %v1349, %v2307
    %v2309 = vlaneseq
    %v2310 = vshrl.u32 %v2309, 7
    %v2311 = vsub.s32 7, %v2310
    %v2312 = vrot.slane %v1349, %v2311
    %v2313 = vlaneseq
    %v2314 = vshrl.u32 %v2313, 7
    %v2315 = vsub.s32 0, %v2314
    %v2316 = vrot.slane %v1350, %v2315
    %v2317 = vlaneseq
    %v2318 = vshrl.u32 %v2317, 7
    %v2319 = vsub.s32 1, %v2318
    %v2320 = vrot.slane %v1350, %v2319
    %v2321 = vlaneseq
    %v2322 = vshrl.u32 %v2321, 7
    %v2323 = vsub.s32 2, %v2322
    %v2324 = vrot.slane %v1350, %v2323
    %v2325 = vlaneseq
    %v2326 = vshrl.u32 %v2325, 7
    %v2327 = vsub.s32 3, %v2326
    %v2328 = vrot.slane %v1350, %v2327
    %v2329 = vlaneseq
    %v2330 = vshrl.u32 %v2329, 7
    %v2331 = vsub.s32 4, %v2330
    %v2332 = vrot.slane %v1350, %v2331
    %v2333 = vlaneseq
    %v2334 = vshrl.u32 %v2333, 7
    %v2335 = vsub.s32 5, %v2334
    %v2336 = vrot.slane %v1350, %v2335
    %v2337 = vlaneseq
    %v2338 = vshrl.u32 %v2337, 7
    %v2339 = vsub.s32 6, %v2338
    %v2340 = vrot.slane %v1350, %v2339
    %v2341 = vlaneseq
    %v2342 = vshrl.u32 %v2341, 7
    %v2343 = vsub.s32 7, %v2342
    %v2344 = vrot.slane %v1350, %v2343
    %v2345 = vlaneseq
    %v2346 = vshrl.u32 %v2345, 7
    %v2347 = vsub.s32 0, %v2346
    %v2348 = vrot.slane %v1351, %v2347
    %v2349 = vlaneseq
    %v2350 = vshrl.u32 %v2349, 7
    %v2351 = vsub.s32 1, %v2350
    %v2352 = vrot.slane %v1351, %v2351
    %v2353 = vlaneseq
    %v2354 = vshrl.u32 %v2353, 7
    %v2355 = vsub.s32 2, %v2354
    %v2356 = vrot.slane %v1351, %v2355
    %v2357 = vlaneseq
    %v2358 = vshrl.u32 %v2357, 7
    %v2359 = vsub.s32 3, %v2358
    %v2360 = vrot.slane %v1351, %v2359
    %v2361 = vlaneseq
    %v2362 = vshrl.u32 %v2361, 7
    %v2363 = vsub.s32 4, %v2362
    %v2364 = vrot.slane %v1351, %v2363
    %v2365 = vlaneseq
    %v2366 = vshrl.u32 %v2365, 7
    %v2367 = vsub.s32 5, %v2366
    %v2368 = vrot.slane %v1351, %v2367
    %v2369 = vlaneseq
    %v2370 = vshrl.u32 %v2369, 7
    %v2371 = vsub.s32 6, %v2370
    %v2372 = vrot.slane %v1351, %v2371
    %v2373 = vlaneseq
    %v2374 = vshrl.u32 %v2373, 7
    %v2375 = vsub.s32 7, %v2374
    %v2376 = vrot.slane %v1351, %v2375
    %v2377 = vlaneseq
    %v2378 = vshrl.u32 %v2377, 7
    %v2379 = vsub.s32 0, %v2378
    %v2380 = vrot.slane %v1352, %v2379
    %v2381 = vlaneseq
    %v2382 = vshrl.u32 %v2381, 7
    %v2383 = vsub.s32 1, %v2382
    %v2384 = vrot.slane %v1352, %v2383
    %v2385 = vlaneseq
    %v2386 = vshrl.u32 %v2385, 7
    %v2387 = vsub.s32 2, %v2386
    %v2388 = vrot.slane %v1352, %v2387
    %v2389 = vlaneseq
    %v2390 = vshrl.u32 %v2389, 7
    %v2391 = vsub.s32 3, %v2390
    %v2392 = vrot.slane %v1352, %v2391
    %v2393 = vlaneseq
    %v2394 = vshrl.u32 %v2393, 7
    %v2395 = vsub.s32 4, %v2394
    %v2396 = vrot.slane %v1352, %v2395
    %v2397 = vlaneseq
    %v2398 = vshrl.u32 %v2397, 7
    %v2399 = vsub.s32 5, %v2398
    %v2400 = vrot.slane %v1352, %v2399
    %v2401 = vlaneseq
    %v2402 = vshrl.u32 %v2401, 7
    %v2403 = vsub.s32 6, %v2402
    %v2404 = vrot.slane %v1352, %v2403
    %v2405 = vlaneseq
    %v2406 = vshrl.u32 %v2405, 7
    %v2407 = vsub.s32 7, %v2406
    %v2408 = vrot.slane %v1352, %v2407
    %v2409 = vcombine.low %v1388, %v1392
    %v2410 = vcombine.low %v1396, %v1400
    %v2411 = vcombine.low %v1404, %v1408
    %v2412 = vcombine.low %v1412, %v1416
    %v2414 = vunpack.c.l.s4 1966171168
    %v2415 = vunpack.c.0.s8 %v2414
    %v2416 = vlaneseq
    %v2417 = vshrl.u32 %v2416, 7
    %v2418 = vsub.s32 %v2415, %v2417
    %v2419 = vrot.slane %v2409, %v2418
    %v2421 = vunpack.c.l.s4 1966171168
    %v2422 = vunpack.c.0.s8 %v2421
    %v2423 = vlaneseq
    %v2424 = vshrl.u32 %v2423, 7
    %v2425 = vsub.s32 %v2422, %v2424
    %v2426 = vrot.slane %v2410, %v2425
    %v2428 = vunpack.c.l.s4 1966171168
    %v2429 = vunpack.c.0.s8 %v2428
    %v2430 = vlaneseq
    %v2431 = vshrl.u32 %v2430, 7
    %v2432 = vsub.s32 %v2429, %v2431
    %v2433 = vrot.slane %v2411, %v2432
    %v2435 = vunpack.c.l.s4 1966171168
    %v2436 = vunpack.c.0.s8 %v2435
    %v2437 = vlaneseq
    %v2438 = vshrl.u32 %v2437, 7
    %v2439 = vsub.s32 %v2436, %v2438
    %v2440 = vrot.slane %v2412, %v2439
    %v2441 = vcombine.low %v2419, %v2426
    %v2442 = vcombine.low %v2433, %v2440
    %v2444 = vunpack.c.l.s4 1966171168
    %v2445 = vunpack.c.0.s8 %v2444
    %v2446 = vlaneseq
    %v2447 = vshrl.u32 %v2446, 7
    %v2448 = vsub.s32 %v2445, %v2447
    %v2449 = vrot.slane %v2441, %v2448
    %v2451 = vunpack.c.l.s4 1966171168
    %v2452 = vunpack.c.0.s8 %v2451
    %v2453 = vlaneseq
    %v2454 = vshrl.u32 %v2453, 7
    %v2455 = vsub.s32 %v2452, %v2454
    %v2456 = vrot.slane %v2442, %v2455
    %v2457 = vcombine.low %v2449, %v2456
    %v2458 = vcombine.low %v1420, %v1424
    %v2459 = vcombine.low %v1428, %v1432
    %v2460 = vcombine.low %v1436, %v1440
    %v2461 = vcombine.low %v1444, %v1448
    %v2463 = vunpack.c.l.s4 1966171168
    %v2464 = vunpack.c.0.s8 %v2463
    %v2465 = vlaneseq
    %v2466 = vshrl.u32 %v2465, 7
    %v2467 = vsub.s32 %v2464, %v2466
    %v2468 = vrot.slane %v2458, %v2467
    %v2470 = vunpack.c.l.s4 1966171168
    %v2471 = vunpack.c.0.s8 %v2470
    %v2472 = vlaneseq
    %v2473 = vshrl.u32 %v2472, 7
    %v2474 = vsub.s32 %v2471, %v2473
    %v2475 = vrot.slane %v2459, %v2474
    %v2477 = vunpack.c.l.s4 1966171168
    %v2478 = vunpack.c.0.s8 %v2477
    %v2479 = vlaneseq
    %v2480 = vshrl.u32 %v2479, 7
    %v2481 = vsub.s32 %v2478, %v2480
    %v2482 = vrot.slane %v2460, %v2481
    %v2484 = vunpack.c.l.s4 1966171168
    %v2485 = vunpack.c.0.s8 %v2484
    %v2486 = vlaneseq
    %v2487 = vshrl.u32 %v2486, 7
    %v2488 = vsub.s32 %v2485, %v2487
    %v2489 = vrot.slane %v2461, %v2488
    %v2490 = vcombine.low %v2468, %v2475
    %v2491 = vcombine.low %v2482, %v2489
    %v2493 = vunpack.c.l.s4 1966171168
    %v2494 = vunpack.c.0.s8 %v2493
    %v2495 = vlaneseq
    %v2496 = vshrl.u32 %v2495, 7
    %v2497 = vsub.s32 %v2494, %v2496
    %v2498 = vrot.slane %v2490, %v2497
    %v2500 = vunpack.c.l.s4 1966171168
    %v2501 = vunpack.c.0.s8 %v2500
    %v2502 = vlaneseq
    %v2503 = vshrl.u32 %v2502, 7
    %v2504 = vsub.s32 %v2501, %v2503
    %v2505 = vrot.slane %v2491, %v2504
    %v2506 = vcombine.low %v2498, %v2505
    %v2507 = vcombine.low %v1452, %v1456
    %v2508 = vcombine.low %v1460, %v1464
    %v2509 = vcombine.low %v1468, %v1472
    %v2510 = vcombine.low %v1476, %v1480
    %v2512 = vunpack.c.l.s4 1966171168
    %v2513 = vunpack.c.0.s8 %v2512
    %v2514 = vlaneseq
    %v2515 = vshrl.u32 %v2514, 7
    %v2516 = vsub.s32 %v2513, %v2515
    %v2517 = vrot.slane %v2507, %v2516
    %v2519 = vunpack.c.l.s4 1966171168
    %v2520 = vunpack.c.0.s8 %v2519
    %v2521 = vlaneseq
    %v2522 = vshrl.u32 %v2521, 7
    %v2523 = vsub.s32 %v2520, %v2522
    %v2524 = vrot.slane %v2508, %v2523
    %v2526 = vunpack.c.l.s4 1966171168
    %v2527 = vunpack.c.0.s8 %v2526
    %v2528 = vlaneseq
    %v2529 = vshrl.u32 %v2528, 7
    %v2530 = vsub.s32 %v2527, %v2529
    %v2531 = vrot.slane %v2509, %v2530
    %v2533 = vunpack.c.l.s4 1966171168
    %v2534 = vunpack.c.0.s8 %v2533
    %v2535 = vlaneseq
    %v2536 = vshrl.u32 %v2535, 7
    %v2537 = vsub.s32 %v2534, %v2536
    %v2538 = vrot.slane %v2510, %v2537
    %v2539 = vcombine.low %v2517, %v2524
    %v2540 = vcombine.low %v2531, %v2538
    %v2542 = vunpack.c.l.s4 1966171168
    %v2543 = vunpack.c.0.s8 %v2542
    %v2544 = vlaneseq
    %v2545 = vshrl.u32 %v2544, 7
    %v2546 = vsub.s32 %v2543, %v2545
    %v2547 = vrot.slane %v2539, %v2546
    %v2549 = vunpack.c.l.s4 1966171168
    %v2550 = vunpack.c.0.s8 %v2549
    %v2551 = vlaneseq
    %v2552 = vshrl.u32 %v2551, 7
    %v2553 = vsub.s32 %v2550, %v2552
    %v2554 = vrot.slane %v2540, %v2553
    %v2555 = vcombine.low %v2547, %v2554
    %v2556 = vcombine.low %v1484, %v1488
    %v2557 = vcombine.low %v1492, %v1496
    %v2558 = vcombine.low %v1500, %v1504
    %v2559 = vcombine.low %v1508, %v1512
    %v2561 = vunpack.c.l.s4 1966171168
    %v2562 = vunpack.c.0.s8 %v2561
    %v2563 = vlaneseq
    %v2564 = vshrl.u32 %v2563, 7
    %v2565 = vsub.s32 %v2562, %v2564
    %v2566 = vrot.slane %v2556, %v2565
    %v2568 = vunpack.c.l.s4 1966171168
    %v2569 = vunpack.c.0.s8 %v2568
    %v2570 = vlaneseq
    %v2571 = vshrl.u32 %v2570, 7
    %v2572 = vsub.s32 %v2569, %v2571
    %v2573 = vrot.slane %v2557, %v2572
    %v2575 = vunpack.c.l.s4 1966171168
    %v2576 = vunpack.c.0.s8 %v2575
    %v2577 = vlaneseq
    %v2578 = vshrl.u32 %v2577, 7
    %v2579 = vsub.s32 %v2576, %v2578
    %v2580 = vrot.slane %v2558, %v2579
    %v2582 = vunpack.c.l.s4 1966171168
    %v2583 = vunpack.c.0.s8 %v2582
    %v2584 = vlaneseq
    %v2585 = vshrl.u32 %v2584, 7
    %v2586 = vsub.s32 %v2583, %v2585
    %v2587 = vrot.slane %v2559, %v2586
    %v2588 = vcombine.low %v2566, %v2573
    %v2589 = vcombine.low %v2580, %v2587
    %v2591 = vunpack.c.l.s4 1966171168
    %v2592 = vunpack.c.0.s8 %v2591
    %v2593 = vlaneseq
    %v2594 = vshrl.u32 %v2593, 7
    %v2595 = vsub.s32 %v2592, %v2594
    %v2596 = vrot.slane %v2588, %v2595
    %v2598 = vunpack.c.l.s4 1966171168
    %v2599 = vunpack.c.0.s8 %v2598
    %v2600 = vlaneseq
    %v2601 = vshrl.u32 %v2600, 7
    %v2602 = vsub.s32 %v2599, %v2601
    %v2603 = vrot.slane %v2589, %v2602
    %v2604 = vcombine.low %v2596, %v2603
    %v2605 = vcombine.low %v1516, %v1520
    %v2606 = vcombine.low %v1524, %v1528
    %v2607 = vcombine.low %v1532, %v1536
    %v2608 = vcombine.low %v1540, %v1544
    %v2610 = vunpack.c.l.s4 1966171168
    %v2611 = vunpack.c.0.s8 %v2610
    %v2612 = vlaneseq
    %v2613 = vshrl.u32 %v2612, 7
    %v2614 = vsub.s32 %v2611, %v2613
    %v2615 = vrot.slane %v2605, %v2614
    %v2617 = vunpack.c.l.s4 1966171168
    %v2618 = vunpack.c.0.s8 %v2617
    %v2619 = vlaneseq
    %v2620 = vshrl.u32 %v2619, 7
    %v2621 = vsub.s32 %v2618, %v2620
    %v2622 = vrot.slane %v2606, %v2621
    %v2624 = vunpack.c.l.s4 1966171168
    %v2625 = vunpack.c.0.s8 %v2624
    %v2626 = vlaneseq
    %v2627 = vshrl.u32 %v2626, 7
    %v2628 = vsub.s32 %v2625, %v2627
    %v2629 = vrot.slane %v2607, %v2628
    %v2631 = vunpack.c.l.s4 1966171168
    %v2632 = vunpack.c.0.s8 %v2631
    %v2633 = vlaneseq
    %v2634 = vshrl.u32 %v2633, 7
    %v2635 = vsub.s32 %v2632, %v2634
    %v2636 = vrot.slane %v2608, %v2635
    %v2637 = vcombine.low %v2615, %v2622
    %v2638 = vcombine.low %v2629, %v2636
    %v2640 = vunpack.c.l.s4 1966171168
    %v2641 = vunpack.c.0.s8 %v2640
    %v2642 = vlaneseq
    %v2643 = vshrl.u32 %v2642, 7
    %v2644 = vsub.s32 %v2641, %v2643
    %v2645 = vrot.slane %v2637, %v2644
    %v2647 = vunpack.c.l.s4 1966171168
    %v2648 = vunpack.c.0.s8 %v2647
    %v2649 = vlaneseq
    %v2650 = vshrl.u32 %v2649, 7
    %v2651 = vsub.s32 %v2648, %v2650
    %v2652 = vrot.slane %v2638, %v2651
    %v2653 = vcombine.low %v2645, %v2652
    %v2654 = vcombine.low %v1548, %v1552
    %v2655 = vcombine.low %v1556, %v1560
    %v2656 = vcombine.low %v1564, %v1568
    %v2657 = vcombine.low %v1572, %v1576
    %v2659 = vunpack.c.l.s4 1966171168
    %v2660 = vunpack.c.0.s8 %v2659
    %v2661 = vlaneseq
    %v2662 = vshrl.u32 %v2661, 7
    %v2663 = vsub.s32 %v2660, %v2662
    %v2664 = vrot.slane %v2654, %v2663
    %v2666 = vunpack.c.l.s4 1966171168
    %v2667 = vunpack.c.0.s8 %v2666
    %v2668 = vlaneseq
    %v2669 = vshrl.u32 %v2668, 7
    %v2670 = vsub.s32 %v2667, %v2669
    %v2671 = vrot.slane %v2655, %v2670
    %v2673 = vunpack.c.l.s4 1966171168
    %v2674 = vunpack.c.0.s8 %v2673
    %v2675 = vlaneseq
    %v2676 = vshrl.u32 %v2675, 7
    %v2677 = vsub.s32 %v2674, %v2676
    %v2678 = vrot.slane %v2656, %v2677
    %v2680 = vunpack.c.l.s4 1966171168
    %v2681 = vunpack.c.0.s8 %v2680
    %v2682 = vlaneseq
    %v2683 = vshrl.u32 %v2682, 7
    %v2684 = vsub.s32 %v2681, %v2683
    %v2685 = vrot.slane %v2657, %v2684
    %v2686 = vcombine.low %v2664, %v2671
    %v2687 = vcombine.low %v2678, %v2685
    %v2689 = vunpack.c.l.s4 1966171168
    %v2690 = vunpack.c.0.s8 %v2689
    %v2691 = vlaneseq
    %v2692 = vshrl.u32 %v2691, 7
    %v2693 = vsub.s32 %v2690, %v2692
    %v2694 = vrot.slane %v2686, %v2693
    %v2696 = vunpack.c.l.s4 1966171168
    %v2697 = vunpack.c.0.s8 %v2696
    %v2698 = vlaneseq
    %v2699 = vshrl.u32 %v2698, 7
    %v2700 = vsub.s32 %v2697, %v2699
    %v2701 = vrot.slane %v2687, %v2700
    %v2702 = vcombine.low %v2694, %v2701
    %v2703 = vcombine.low %v1580, %v1584
    %v2704 = vcombine.low %v1588, %v1592
    %v2705 = vcombine.low %v1596, %v1600
    %v2706 = vcombine.low %v1604, %v1608
    %v2708 = vunpack.c.l.s4 1966171168
    %v2709 = vunpack.c.0.s8 %v2708
    %v2710 = vlaneseq
    %v2711 = vshrl.u32 %v2710, 7
    %v2712 = vsub.s32 %v2709, %v2711
    %v2713 = vrot.slane %v2703, %v2712
    %v2715 = vunpack.c.l.s4 1966171168
    %v2716 = vunpack.c.0.s8 %v2715
    %v2717 = vlaneseq
    %v2718 = vshrl.u32 %v2717, 7
    %v2719 = vsub.s32 %v2716, %v2718
    %v2720 = vrot.slane %v2704, %v2719
    %v2722 = vunpack.c.l.s4 1966171168
    %v2723 = vunpack.c.0.s8 %v2722
    %v2724 = vlaneseq
    %v2725 = vshrl.u32 %v2724, 7
    %v2726 = vsub.s32 %v2723, %v2725
    %v2727 = vrot.slane %v2705, %v2726
    %v2729 = vunpack.c.l.s4 1966171168
    %v2730 = vunpack.c.0.s8 %v2729
    %v2731 = vlaneseq
    %v2732 = vshrl.u32 %v2731, 7
    %v2733 = vsub.s32 %v2730, %v2732
    %v2734 = vrot.slane %v2706, %v2733
    %v2735 = vcombine.low %v2713, %v2720
    %v2736 = vcombine.low %v2727, %v2734
    %v2738 = vunpack.c.l.s4 1966171168
    %v2739 = vunpack.c.0.s8 %v2738
    %v2740 = vlaneseq
    %v2741 = vshrl.u32 %v2740, 7
    %v2742 = vsub.s32 %v2739, %v2741
    %v2743 = vrot.slane %v2735, %v2742
    %v2745 = vunpack.c.l.s4 1966171168
    %v2746 = vunpack.c.0.s8 %v2745
    %v2747 = vlaneseq
    %v2748 = vshrl.u32 %v2747, 7
    %v2749 = vsub.s32 %v2746, %v2748
    %v2750 = vrot.slane %v2736, %v2749
    %v2751 = vcombine.low %v2743, %v2750
    %v2752 = vcombine.low %v1612, %v1616
    %v2753 = vcombine.low %v1620, %v1624
    %v2754 = vcombine.low %v1628, %v1632
    %v2755 = vcombine.low %v1636, %v1640
    %v2757 = vunpack.c.l.s4 1966171168
    %v2758 = vunpack.c.0.s8 %v2757
    %v2759 = vlaneseq
    %v2760 = vshrl.u32 %v2759, 7
    %v2761 = vsub.s32 %v2758, %v2760
    %v2762 = vrot.slane %v2752, %v2761
    %v2764 = vunpack.c.l.s4 1966171168
    %v2765 = vunpack.c.0.s8 %v2764
    %v2766 = vlaneseq
    %v2767 = vshrl.u32 %v2766, 7
    %v2768 = vsub.s32 %v2765, %v2767
    %v2769 = vrot.slane %v2753, %v2768
    %v2771 = vunpack.c.l.s4 1966171168
    %v2772 = vunpack.c.0.s8 %v2771
    %v2773 = vlaneseq
    %v2774 = vshrl.u32 %v2773, 7
    %v2775 = vsub.s32 %v2772, %v2774
    %v2776 = vrot.slane %v2754, %v2775
    %v2778 = vunpack.c.l.s4 1966171168
    %v2779 = vunpack.c.0.s8 %v2778
    %v2780 = vlaneseq
    %v2781 = vshrl.u32 %v2780, 7
    %v2782 = vsub.s32 %v2779, %v2781
    %v2783 = vrot.slane %v2755, %v2782
    %v2784 = vcombine.low %v2762, %v2769
    %v2785 = vcombine.low %v2776, %v2783
    %v2787 = vunpack.c.l.s4 1966171168
    %v2788 = vunpack.c.0.s8 %v2787
    %v2789 = vlaneseq
    %v2790 = vshrl.u32 %v2789, 7
    %v2791 = vsub.s32 %v2788, %v2790
    %v2792 = vrot.slane %v2784, %v2791
    %v2794 = vunpack.c.l.s4 1966171168
    %v2795 = vunpack.c.0.s8 %v2794
    %v2796 = vlaneseq
    %v2797 = vshrl.u32 %v2796, 7
    %v2798 = vsub.s32 %v2795, %v2797
    %v2799 = vrot.slane %v2785, %v2798
    %v2800 = vcombine.low %v2792, %v2799
    %v2801 = vcombine.low %v1644, %v1648
    %v2802 = vcombine.low %v1652, %v1656
    %v2803 = vcombine.low %v1660, %v1664
    %v2804 = vcombine.low %v1668, %v1672
    %v2806 = vunpack.c.l.s4 1966171168
    %v2807 = vunpack.c.0.s8 %v2806
    %v2808 = vlaneseq
    %v2809 = vshrl.u32 %v2808, 7
    %v2810 = vsub.s32 %v2807, %v2809
    %v2811 = vrot.slane %v2801, %v2810
    %v2813 = vunpack.c.l.s4 1966171168
    %v2814 = vunpack.c.0.s8 %v2813
    %v2815 = vlaneseq
    %v2816 = vshrl.u32 %v2815, 7
    %v2817 = vsub.s32 %v2814, %v2816
    %v2818 = vrot.slane %v2802, %v2817
    %v2820 = vunpack.c.l.s4 1966171168
    %v2821 = vunpack.c.0.s8 %v2820
    %v2822 = vlaneseq
    %v2823 = vshrl.u32 %v2822, 7
    %v2824 = vsub.s32 %v2821, %v2823
    %v2825 = vrot.slane %v2803, %v2824
    %v2827 = vunpack.c.l.s4 1966171168
    %v2828 = vunpack.c.0.s8 %v2827
    %v2829 = vlaneseq
    %v2830 = vshrl.u32 %v2829, 7
    %v2831 = vsub.s32 %v2828, %v2830
    %v2832 = vrot.slane %v2804, %v2831
    %v2833 = vcombine.low %v2811, %v2818
    %v2834 = vcombine.low %v2825, %v2832
    %v2836 = vunpack.c.l.s4 1966171168
    %v2837 = vunpack.c.0.s8 %v2836
    %v2838 = vlaneseq
    %v2839 = vshrl.u32 %v2838, 7
    %v2840 = vsub.s32 %v2837, %v2839
    %v2841 = vrot.slane %v2833, %v2840
    %v2843 = vunpack.c.l.s4 1966171168
    %v2844 = vunpack.c.0.s8 %v2843
    %v2845 = vlaneseq
    %v2846 = vshrl.u32 %v2845, 7
    %v2847 = vsub.s32 %v2844, %v2846
    %v2848 = vrot.slane %v2834, %v2847
    %v2849 = vcombine.low %v2841, %v2848
    %v2850 = vcombine.low %v1676, %v1680
    %v2851 = vcombine.low %v1684, %v1688
    %v2852 = vcombine.low %v1692, %v1696
    %v2853 = vcombine.low %v1700, %v1704
    %v2855 = vunpack.c.l.s4 1966171168
    %v2856 = vunpack.c.0.s8 %v2855
    %v2857 = vlaneseq
    %v2858 = vshrl.u32 %v2857, 7
    %v2859 = vsub.s32 %v2856, %v2858
    %v2860 = vrot.slane %v2850, %v2859
    %v2862 = vunpack.c.l.s4 1966171168
    %v2863 = vunpack.c.0.s8 %v2862
    %v2864 = vlaneseq
    %v2865 = vshrl.u32 %v2864, 7
    %v2866 = vsub.s32 %v2863, %v2865
    %v2867 = vrot.slane %v2851, %v2866
    %v2869 = vunpack.c.l.s4 1966171168
    %v2870 = vunpack.c.0.s8 %v2869
    %v2871 = vlaneseq
    %v2872 = vshrl.u32 %v2871, 7
    %v2873 = vsub.s32 %v2870, %v2872
    %v2874 = vrot.slane %v2852, %v2873
    %v2876 = vunpack.c.l.s4 1966171168
    %v2877 = vunpack.c.0.s8 %v2876
    %v2878 = vlaneseq
    %v2879 = vshrl.u32 %v2878, 7
    %v2880 = vsub.s32 %v2877, %v2879
    %v2881 = vrot.slane %v2853, %v2880
    %v2882 = vcombine.low %v2860, %v2867
    %v2883 = vcombine.low %v2874, %v2881
    %v2885 = vunpack.c.l.s4 1966171168
    %v2886 = vunpack.c.0.s8 %v2885
    %v2887 = vlaneseq
    %v2888 = vshrl.u32 %v2887, 7
    %v2889 = vsub.s32 %v2886, %v2888
    %v2890 = vrot.slane %v2882, %v2889
    %v2892 = vunpack.c.l.s4 1966171168
    %v2893 = vunpack.c.0.s8 %v2892
    %v2894 = vlaneseq
    %v2895 = vshrl.u32 %v2894, 7
    %v2896 = vsub.s32 %v2893, %v2895
    %v2897 = vrot.slane %v2883, %v2896
    %v2898 = vcombine.low %v2890, %v2897
    %v2899 = vcombine.low %v1708, %v1712
    %v2900 = vcombine.low %v1716, %v1720
    %v2901 = vcombine.low %v1724, %v1728
    %v2902 = vcombine.low %v1732, %v1736
    %v2904 = vunpack.c.l.s4 1966171168
    %v2905 = vunpack.c.0.s8 %v2904
    %v2906 = vlaneseq
    %v2907 = vshrl.u32 %v2906, 7
    %v2908 = vsub.s32 %v2905, %v2907
    %v2909 = vrot.slane %v2899, %v2908
    %v2911 = vunpack.c.l.s4 1966171168
    %v2912 = vunpack.c.0.s8 %v2911
    %v2913 = vlaneseq
    %v2914 = vshrl.u32 %v2913, 7
    %v2915 = vsub.s32 %v2912, %v2914
    %v2916 = vrot.slane %v2900, %v2915
    %v2918 = vunpack.c.l.s4 1966171168
    %v2919 = vunpack.c.0.s8 %v2918
    %v2920 = vlaneseq
    %v2921 = vshrl.u32 %v2920, 7
    %v2922 = vsub.s32 %v2919, %v2921
    %v2923 = vrot.slane %v2901, %v2922
    %v2925 = vunpack.c.l.s4 1966171168
    %v2926 = vunpack.c.0.s8 %v2925
    %v2927 = vlaneseq
    %v2928 = vshrl.u32 %v2927, 7
    %v2929 = vsub.s32 %v2926, %v2928
    %v2930 = vrot.slane %v2902, %v2929
    %v2931 = vcombine.low %v2909, %v2916
    %v2932 = vcombine.low %v2923, %v2930
    %v2934 = vunpack.c.l.s4 1966171168
    %v2935 = vunpack.c.0.s8 %v2934
    %v2936 = vlaneseq
    %v2937 = vshrl.u32 %v2936, 7
    %v2938 = vsub.s32 %v2935, %v2937
    %v2939 = vrot.slane %v2931, %v2938
    %v2941 = vunpack.c.l.s4 1966171168
    %v2942 = vunpack.c.0.s8 %v2941
    %v2943 = vlaneseq
    %v2944 = vshrl.u32 %v2943, 7
    %v2945 = vsub.s32 %v2942, %v2944
    %v2946 = vrot.slane %v2932, %v2945
    %v2947 = vcombine.low %v2939, %v2946
    %v2948 = vcombine.low %v1740, %v1744
    %v2949 = vcombine.low %v1748, %v1752
    %v2950 = vcombine.low %v1756, %v1760
    %v2951 = vcombine.low %v1764, %v1768
    %v2953 = vunpack.c.l.s4 1966171168
    %v2954 = vunpack.c.0.s8 %v2953
    %v2955 = vlaneseq
    %v2956 = vshrl.u32 %v2955, 7
    %v2957 = vsub.s32 %v2954, %v2956
    %v2958 = vrot.slane %v2948, %v2957
    %v2960 = vunpack.c.l.s4 1966171168
    %v2961 = vunpack.c.0.s8 %v2960
    %v2962 = vlaneseq
    %v2963 = vshrl.u32 %v2962, 7
    %v2964 = vsub.s32 %v2961, %v2963
    %v2965 = vrot.slane %v2949, %v2964
    %v2967 = vunpack.c.l.s4 1966171168
    %v2968 = vunpack.c.0.s8 %v2967
    %v2969 = vlaneseq
    %v2970 = vshrl.u32 %v2969, 7
    %v2971 = vsub.s32 %v2968, %v2970
    %v2972 = vrot.slane %v2950, %v2971
    %v2974 = vunpack.c.l.s4 1966171168
    %v2975 = vunpack.c.0.s8 %v2974
    %v2976 = vlaneseq
    %v2977 = vshrl.u32 %v2976, 7
    %v2978 = vsub.s32 %v2975, %v2977
    %v2979 = vrot.slane %v2951, %v2978
    %v2980 = vcombine.low %v2958, %v2965
    %v2981 = vcombine.low %v2972, %v2979
    %v2983 = vunpack.c.l.s4 1966171168
    %v2984 = vunpack.c.0.s8 %v2983
    %v2985 = vlaneseq
    %v2986 = vshrl.u32 %v2985, 7
    %v2987 = vsub.s32 %v2984, %v2986
    %v2988 = vrot.slane %v2980, %v2987
    %v2990 = vunpack.c.l.s4 1966171168
    %v2991 = vunpack.c.0.s8 %v2990
    %v2992 = vlaneseq
    %v2993 = vshrl.u32 %v2992, 7
    %v2994 = vsub.s32 %v2991, %v2993
    %v2995 = vrot.slane %v2981, %v2994
    %v2996 = vcombine.low %v2988, %v2995
    %v2997 = vcombine.low %v1772, %v1776
    %v2998 = vcombine.low %v1780, %v1784
    %v2999 = vcombine.low %v1788, %v1792
    %v3000 = vcombine.low %v1796, %v1800
    %v3002 = vunpack.c.l.s4 1966171168
    %v3003 = vunpack.c.0.s8 %v3002
    %v3004 = vlaneseq
    %v3005 = vshrl.u32 %v3004, 7
    %v3006 = vsub.s32 %v3003, %v3005
    %v3007 = vrot.slane %v2997, %v3006
    %v3009 = vunpack.c.l.s4 1966171168
    %v3010 = vunpack.c.0.s8 %v3009
    %v3011 = vlaneseq
    %v3012 = vshrl.u32 %v3011, 7
    %v3013 = vsub.s32 %v3010, %v3012
    %v3014 = vrot.slane %v2998, %v3013
    %v3016 = vunpack.c.l.s4 1966171168
    %v3017 = vunpack.c.0.s8 %v3016
    %v3018 = vlaneseq
    %v3019 = vshrl.u32 %v3018, 7
    %v3020 = vsub.s32 %v3017, %v3019
    %v3021 = vrot.slane %v2999, %v3020
    %v3023 = vunpack.c.l.s4 1966171168
    %v3024 = vunpack.c.0.s8 %v3023
    %v3025 = vlaneseq
    %v3026 = vshrl.u32 %v3025, 7
    %v3027 = vsub.s32 %v3024, %v3026
    %v3028 = vrot.slane %v3000, %v3027
    %v3029 = vcombine.low %v3007, %v3014
    %v3030 = vcombine.low %v3021, %v3028
    %v3032 = vunpack.c.l.s4 1966171168
    %v3033 = vunpack.c.0.s8 %v3032
    %v3034 = vlaneseq
    %v3035 = vshrl.u32 %v3034, 7
    %v3036 = vsub.s32 %v3033, %v3035
    %v3037 = vrot.slane %v3029, %v3036
    %v3039 = vunpack.c.l.s4 1966171168
    %v3040 = vunpack.c.0.s8 %v3039
    %v3041 = vlaneseq
    %v3042 = vshrl.u32 %v3041, 7
    %v3043 = vsub.s32 %v3040, %v3042
    %v3044 = vrot.slane %v3030, %v3043
    %v3045 = vcombine.low %v3037, %v3044
    %v3046 = vcombine.low %v1804, %v1808
    %v3047 = vcombine.low %v1812, %v1816
    %v3048 = vcombine.low %v1820, %v1824
    %v3049 = vcombine.low %v1828, %v1832
    %v3051 = vunpack.c.l.s4 1966171168
    %v3052 = vunpack.c.0.s8 %v3051
    %v3053 = vlaneseq
    %v3054 = vshrl.u32 %v3053, 7
    %v3055 = vsub.s32 %v3052, %v3054
    %v3056 = vrot.slane %v3046, %v3055
    %v3058 = vunpack.c.l.s4 1966171168
    %v3059 = vunpack.c.0.s8 %v3058
    %v3060 = vlaneseq
    %v3061 = vshrl.u32 %v3060, 7
    %v3062 = vsub.s32 %v3059, %v3061
    %v3063 = vrot.slane %v3047, %v3062
    %v3065 = vunpack.c.l.s4 1966171168
    %v3066 = vunpack.c.0.s8 %v3065
    %v3067 = vlaneseq
    %v3068 = vshrl.u32 %v3067, 7
    %v3069 = vsub.s32 %v3066, %v3068
    %v3070 = vrot.slane %v3048, %v3069
    %v3072 = vunpack.c.l.s4 1966171168
    %v3073 = vunpack.c.0.s8 %v3072
    %v3074 = vlaneseq
    %v3075 = vshrl.u32 %v3074, 7
    %v3076 = vsub.s32 %v3073, %v3075
    %v3077 = vrot.slane %v3049, %v3076
    %v3078 = vcombine.low %v3056, %v3063
    %v3079 = vcombine.low %v3070, %v3077
    %v3081 = vunpack.c.l.s4 1966171168
    %v3082 = vunpack.c.0.s8 %v3081
    %v3083 = vlaneseq
    %v3084 = vshrl.u32 %v3083, 7
    %v3085 = vsub.s32 %v3082, %v3084
    %v3086 = vrot.slane %v3078, %v3085
    %v3088 = vunpack.c.l.s4 1966171168
    %v3089 = vunpack.c.0.s8 %v3088
    %v3090 = vlaneseq
    %v3091 = vshrl.u32 %v3090, 7
    %v3092 = vsub.s32 %v3089, %v3091
    %v3093 = vrot.slane %v3079, %v3092
    %v3094 = vcombine.low %v3086, %v3093
    %v3095 = vcombine.low %v1836, %v1840
    %v3096 = vcombine.low %v1844, %v1848
    %v3097 = vcombine.low %v1852, %v1856
    %v3098 = vcombine.low %v1860, %v1864
    %v3100 = vunpack.c.l.s4 1966171168
    %v3101 = vunpack.c.0.s8 %v3100
    %v3102 = vlaneseq
    %v3103 = vshrl.u32 %v3102, 7
    %v3104 = vsub.s32 %v3101, %v3103
    %v3105 = vrot.slane %v3095, %v3104
    %v3107 = vunpack.c.l.s4 1966171168
    %v3108 = vunpack.c.0.s8 %v3107
    %v3109 = vlaneseq
    %v3110 = vshrl.u32 %v3109, 7
    %v3111 = vsub.s32 %v3108, %v3110
    %v3112 = vrot.slane %v3096, %v3111
    %v3114 = vunpack.c.l.s4 1966171168
    %v3115 = vunpack.c.0.s8 %v3114
    %v3116 = vlaneseq
    %v3117 = vshrl.u32 %v3116, 7
    %v3118 = vsub.s32 %v3115, %v3117
    %v3119 = vrot.slane %v3097, %v3118
    %v3121 = vunpack.c.l.s4 1966171168
    %v3122 = vunpack.c.0.s8 %v3121
    %v3123 = vlaneseq
    %v3124 = vshrl.u32 %v3123, 7
    %v3125 = vsub.s32 %v3122, %v3124
    %v3126 = vrot.slane %v3098, %v3125
    %v3127 = vcombine.low %v3105, %v3112
    %v3128 = vcombine.low %v3119, %v3126
    %v3130 = vunpack.c.l.s4 1966171168
    %v3131 = vunpack.c.0.s8 %v3130
    %v3132 = vlaneseq
    %v3133 = vshrl.u32 %v3132, 7
    %v3134 = vsub.s32 %v3131, %v3133
    %v3135 = vrot.slane %v3127, %v3134
    %v3137 = vunpack.c.l.s4 1966171168
    %v3138 = vunpack.c.0.s8 %v3137
    %v3139 = vlaneseq
    %v3140 = vshrl.u32 %v3139, 7
    %v3141 = vsub.s32 %v3138, %v3140
    %v3142 = vrot.slane %v3128, %v3141
    %v3143 = vcombine.low %v3135, %v3142
    %v3144 = vcombine.low %v1868, %v1872
    %v3145 = vcombine.low %v1876, %v1880
    %v3146 = vcombine.low %v1884, %v1888
    %v3147 = vcombine.low %v1892, %v1896
    %v3149 = vunpack.c.l.s4 1966171168
    %v3150 = vunpack.c.0.s8 %v3149
    %v3151 = vlaneseq
    %v3152 = vshrl.u32 %v3151, 7
    %v3153 = vsub.s32 %v3150, %v3152
    %v3154 = vrot.slane %v3144, %v3153
    %v3156 = vunpack.c.l.s4 1966171168
    %v3157 = vunpack.c.0.s8 %v3156
    %v3158 = vlaneseq
    %v3159 = vshrl.u32 %v3158, 7
    %v3160 = vsub.s32 %v3157, %v3159
    %v3161 = vrot.slane %v3145, %v3160
    %v3163 = vunpack.c.l.s4 1966171168
    %v3164 = vunpack.c.0.s8 %v3163
    %v3165 = vlaneseq
    %v3166 = vshrl.u32 %v3165, 7
    %v3167 = vsub.s32 %v3164, %v3166
    %v3168 = vrot.slane %v3146, %v3167
    %v3170 = vunpack.c.l.s4 1966171168
    %v3171 = vunpack.c.0.s8 %v3170
    %v3172 = vlaneseq
    %v3173 = vshrl.u32 %v3172, 7
    %v3174 = vsub.s32 %v3171, %v3173
    %v3175 = vrot.slane %v3147, %v3174
    %v3176 = vcombine.low %v3154, %v3161
    %v3177 = vcombine.low %v3168, %v3175
    %v3179 = vunpack.c.l.s4 1966171168
    %v3180 = vunpack.c.0.s8 %v3179
    %v3181 = vlaneseq
    %v3182 = vshrl.u32 %v3181, 7
    %v3183 = vsub.s32 %v3180, %v3182
    %v3184 = vrot.slane %v3176, %v3183
    %v3186 = vunpack.c.l.s4 1966171168
    %v3187 = vunpack.c.0.s8 %v3186
    %v3188 = vlaneseq
    %v3189 = vshrl.u32 %v3188, 7
    %v3190 = vsub.s32 %v3187, %v3189
    %v3191 = vrot.slane %v3177, %v3190
    %v3192 = vcombine.low %v3184, %v3191
    %v3193 = vcombine.low %v1900, %v1904
    %v3194 = vcombine.low %v1908, %v1912
    %v3195 = vcombine.low %v1916, %v1920
    %v3196 = vcombine.low %v1924, %v1928
    %v3198 = vunpack.c.l.s4 1966171168
    %v3199 = vunpack.c.0.s8 %v3198
    %v3200 = vlaneseq
    %v3201 = vshrl.u32 %v3200, 7
    %v3202 = vsub.s32 %v3199, %v3201
    %v3203 = vrot.slane %v3193, %v3202
    %v3205 = vunpack.c.l.s4 1966171168
    %v3206 = vunpack.c.0.s8 %v3205
    %v3207 = vlaneseq
    %v3208 = vshrl.u32 %v3207, 7
    %v3209 = vsub.s32 %v3206, %v3208
    %v3210 = vrot.slane %v3194, %v3209
    %v3212 = vunpack.c.l.s4 1966171168
    %v3213 = vunpack.c.0.s8 %v3212
    %v3214 = vlaneseq
    %v3215 = vshrl.u32 %v3214, 7
    %v3216 = vsub.s32 %v3213, %v3215
    %v3217 = vrot.slane %v3195, %v3216
    %v3219 = vunpack.c.l.s4 1966171168
    %v3220 = vunpack.c.0.s8 %v3219
    %v3221 = vlaneseq
    %v3222 = vshrl.u32 %v3221, 7
    %v3223 = vsub.s32 %v3220, %v3222
    %v3224 = vrot.slane %v3196, %v3223
    %v3225 = vcombine.low %v3203, %v3210
    %v3226 = vcombine.low %v3217, %v3224
    %v3228 = vunpack.c.l.s4 1966171168
    %v3229 = vunpack.c.0.s8 %v3228
    %v3230 = vlaneseq
    %v3231 = vshrl.u32 %v3230, 7
    %v3232 = vsub.s32 %v3229, %v3231
    %v3233 = vrot.slane %v3225, %v3232
    %v3235 = vunpack.c.l.s4 1966171168
    %v3236 = vunpack.c.0.s8 %v3235
    %v3237 = vlaneseq
    %v3238 = vshrl.u32 %v3237, 7
    %v3239 = vsub.s32 %v3236, %v3238
    %v3240 = vrot.slane %v3226, %v3239
    %v3241 = vcombine.low %v3233, %v3240
    %v3242 = vcombine.low %v1932, %v1936
    %v3243 = vcombine.low %v1940, %v1944
    %v3244 = vcombine.low %v1948, %v1952
    %v3245 = vcombine.low %v1956, %v1960
    %v3247 = vunpack.c.l.s4 1966171168
    %v3248 = vunpack.c.0.s8 %v3247
    %v3249 = vlaneseq
    %v3250 = vshrl.u32 %v3249, 7
    %v3251 = vsub.s32 %v3248, %v3250
    %v3252 = vrot.slane %v3242, %v3251
    %v3254 = vunpack.c.l.s4 1966171168
    %v3255 = vunpack.c.0.s8 %v3254
    %v3256 = vlaneseq
    %v3257 = vshrl.u32 %v3256, 7
    %v3258 = vsub.s32 %v3255, %v3257
    %v3259 = vrot.slane %v3243, %v3258
    %v3261 = vunpack.c.l.s4 1966171168
    %v3262 = vunpack.c.0.s8 %v3261
    %v3263 = vlaneseq
    %v3264 = vshrl.u32 %v3263, 7
    %v3265 = vsub.s32 %v3262, %v3264
    %v3266 = vrot.slane %v3244, %v3265
    %v3268 = vunpack.c.l.s4 1966171168
    %v3269 = vunpack.c.0.s8 %v3268
    %v3270 = vlaneseq
    %v3271 = vshrl.u32 %v3270, 7
    %v3272 = vsub.s32 %v3269, %v3271
    %v3273 = vrot.slane %v3245, %v3272
    %v3274 = vcombine.low %v3252, %v3259
    %v3275 = vcombine.low %v3266, %v3273
    %v3277 = vunpack.c.l.s4 1966171168
    %v3278 = vunpack.c.0.s8 %v3277
    %v3279 = vlaneseq
    %v3280 = vshrl.u32 %v3279, 7
    %v3281 = vsub.s32 %v3278, %v3280
    %v3282 = vrot.slane %v3274, %v3281
    %v3284 = vunpack.c.l.s4 1966171168
    %v3285 = vunpack.c.0.s8 %v3284
    %v3286 = vlaneseq
    %v3287 = vshrl.u32 %v3286, 7
    %v3288 = vsub.s32 %v3285, %v3287
    %v3289 = vrot.slane %v3275, %v3288
    %v3290 = vcombine.low %v3282, %v3289
    %v3291 = vcombine.low %v1964, %v1968
    %v3292 = vcombine.low %v1972, %v1976
    %v3293 = vcombine.low %v1980, %v1984
    %v3294 = vcombine.low %v1988, %v1992
    %v3296 = vunpack.c.l.s4 1966171168
    %v3297 = vunpack.c.0.s8 %v3296
    %v3298 = vlaneseq
    %v3299 = vshrl.u32 %v3298, 7
    %v3300 = vsub.s32 %v3297, %v3299
    %v3301 = vrot.slane %v3291, %v3300
    %v3303 = vunpack.c.l.s4 1966171168
    %v3304 = vunpack.c.0.s8 %v3303
    %v3305 = vlaneseq
    %v3306 = vshrl.u32 %v3305, 7
    %v3307 = vsub.s32 %v3304, %v3306
    %v3308 = vrot.slane %v3292, %v3307
    %v3310 = vunpack.c.l.s4 1966171168
    %v3311 = vunpack.c.0.s8 %v3310
    %v3312 = vlaneseq
    %v3313 = vshrl.u32 %v3312, 7
    %v3314 = vsub.s32 %v3311, %v3313
    %v3315 = vrot.slane %v3293, %v3314
    %v3317 = vunpack.c.l.s4 1966171168
    %v3318 = vunpack.c.0.s8 %v3317
    %v3319 = vlaneseq
    %v3320 = vshrl.u32 %v3319, 7
    %v3321 = vsub.s32 %v3318, %v3320
    %v3322 = vrot.slane %v3294, %v3321
    %v3323 = vcombine.low %v3301, %v3308
    %v3324 = vcombine.low %v3315, %v3322
    %v3326 = vunpack.c.l.s4 1966171168
    %v3327 = vunpack.c.0.s8 %v3326
    %v3328 = vlaneseq
    %v3329 = vshrl.u32 %v3328, 7
    %v3330 = vsub.s32 %v3327, %v3329
    %v3331 = vrot.slane %v3323, %v3330
    %v3333 = vunpack.c.l.s4 1966171168
    %v3334 = vunpack.c.0.s8 %v3333
    %v3335 = vlaneseq
    %v3336 = vshrl.u32 %v3335, 7
    %v3337 = vsub.s32 %v3334, %v3336
    %v3338 = vrot.slane %v3324, %v3337
    %v3339 = vcombine.low %v3331, %v3338
    %v3340 = vcombine.low %v1996, %v2000
    %v3341 = vcombine.low %v2004, %v2008
    %v3342 = vcombine.low %v2012, %v2016
    %v3343 = vcombine.low %v2020, %v2024
    %v3345 = vunpack.c.l.s4 1966171168
    %v3346 = vunpack.c.0.s8 %v3345
    %v3347 = vlaneseq
    %v3348 = vshrl.u32 %v3347, 7
    %v3349 = vsub.s32 %v3346, %v3348
    %v3350 = vrot.slane %v3340, %v3349
    %v3352 = vunpack.c.l.s4 1966171168
    %v3353 = vunpack.c.0.s8 %v3352
    %v3354 = vlaneseq
    %v3355 = vshrl.u32 %v3354, 7
    %v3356 = vsub.s32 %v3353, %v3355
    %v3357 = vrot.slane %v3341, %v3356
    %v3359 = vunpack.c.l.s4 1966171168
    %v3360 = vunpack.c.0.s8 %v3359
    %v3361 = vlaneseq
    %v3362 = vshrl.u32 %v3361, 7
    %v3363 = vsub.s32 %v3360, %v3362
    %v3364 = vrot.slane %v3342, %v3363
    %v3366 = vunpack.c.l.s4 1966171168
    %v3367 = vunpack.c.0.s8 %v3366
    %v3368 = vlaneseq
    %v3369 = vshrl.u32 %v3368, 7
    %v3370 = vsub.s32 %v3367, %v3369
    %v3371 = vrot.slane %v3343, %v3370
    %v3372 = vcombine.low %v3350, %v3357
    %v3373 = vcombine.low %v3364, %v3371
    %v3375 = vunpack.c.l.s4 1966171168
    %v3376 = vunpack.c.0.s8 %v3375
    %v3377 = vlaneseq
    %v3378 = vshrl.u32 %v3377, 7
    %v3379 = vsub.s32 %v3376, %v3378
    %v3380 = vrot.slane %v3372, %v3379
    %v3382 = vunpack.c.l.s4 1966171168
    %v3383 = vunpack.c.0.s8 %v3382
    %v3384 = vlaneseq
    %v3385 = vshrl.u32 %v3384, 7
    %v3386 = vsub.s32 %v3383, %v3385
    %v3387 = vrot.slane %v3373, %v3386
    %v3388 = vcombine.low %v3380, %v3387
    %v3389 = vcombine.low %v2028, %v2032
    %v3390 = vcombine.low %v2036, %v2040
    %v3391 = vcombine.low %v2044, %v2048
    %v3392 = vcombine.low %v2052, %v2056
    %v3394 = vunpack.c.l.s4 1966171168
    %v3395 = vunpack.c.0.s8 %v3394
    %v3396 = vlaneseq
    %v3397 = vshrl.u32 %v3396, 7
    %v3398 = vsub.s32 %v3395, %v3397
    %v3399 = vrot.slane %v3389, %v3398
    %v3401 = vunpack.c.l.s4 1966171168
    %v3402 = vunpack.c.0.s8 %v3401
    %v3403 = vlaneseq
    %v3404 = vshrl.u32 %v3403, 7
    %v3405 = vsub.s32 %v3402, %v3404
    %v3406 = vrot.slane %v3390, %v3405
    %v3408 = vunpack.c.l.s4 1966171168
    %v3409 = vunpack.c.0.s8 %v3408
    %v3410 = vlaneseq
    %v3411 = vshrl.u32 %v3410, 7
    %v3412 = vsub.s32 %v3409, %v3411
    %v3413 = vrot.slane %v3391, %v3412
    %v3415 = vunpack.c.l.s4 1966171168
    %v3416 = vunpack.c.0.s8 %v3415
    %v3417 = vlaneseq
    %v3418 = vshrl.u32 %v3417, 7
    %v3419 = vsub.s32 %v3416, %v3418
    %v3420 = vrot.slane %v3392, %v3419
    %v3421 = vcombine.low %v3399, %v3406
    %v3422 = vcombine.low %v3413, %v3420
    %v3424 = vunpack.c.l.s4 1966171168
    %v3425 = vunpack.c.0.s8 %v3424
    %v3426 = vlaneseq
    %v3427 = vshrl.u32 %v3426, 7
    %v3428 = vsub.s32 %v3425, %v3427
    %v3429 = vrot.slane %v3421, %v3428
    %v3431 = vunpack.c.l.s4 1966171168
    %v3432 = vunpack.c.0.s8 %v3431
    %v3433 = vlaneseq
    %v3434 = vshrl.u32 %v3433, 7
    %v3435 = vsub.s32 %v3432, %v3434
    %v3436 = vrot.slane %v3422, %v3435
    %v3437 = vcombine.low %v3429, %v3436
    %v3438 = vcombine.low %v2060, %v2064
    %v3439 = vcombine.low %v2068, %v2072
    %v3440 = vcombine.low %v2076, %v2080
    %v3441 = vcombine.low %v2084, %v2088
    %v3443 = vunpack.c.l.s4 1966171168
    %v3444 = vunpack.c.0.s8 %v3443
    %v3445 = vlaneseq
    %v3446 = vshrl.u32 %v3445, 7
    %v3447 = vsub.s32 %v3444, %v3446
    %v3448 = vrot.slane %v3438, %v3447
    %v3450 = vunpack.c.l.s4 1966171168
    %v3451 = vunpack.c.0.s8 %v3450
    %v3452 = vlaneseq
    %v3453 = vshrl.u32 %v3452, 7
    %v3454 = vsub.s32 %v3451, %v3453
    %v3455 = vrot.slane %v3439, %v3454
    %v3457 = vunpack.c.l.s4 1966171168
    %v3458 = vunpack.c.0.s8 %v3457
    %v3459 = vlaneseq
    %v3460 = vshrl.u32 %v3459, 7
    %v3461 = vsub.s32 %v3458, %v3460
    %v3462 = vrot.slane %v3440, %v3461
    %v3464 = vunpack.c.l.s4 1966171168
    %v3465 = vunpack.c.0.s8 %v3464
    %v3466 = vlaneseq
    %v3467 = vshrl.u32 %v3466, 7
    %v3468 = vsub.s32 %v3465, %v3467
    %v3469 = vrot.slane %v3441, %v3468
    %v3470 = vcombine.low %v3448, %v3455
    %v3471 = vcombine.low %v3462, %v3469
    %v3473 = vunpack.c.l.s4 1966171168
    %v3474 = vunpack.c.0.s8 %v3473
    %v3475 = vlaneseq
    %v3476 = vshrl.u32 %v3475, 7
    %v3477 = vsub.s32 %v3474, %v3476
    %v3478 = vrot.slane %v3470, %v3477
    %v3480 = vunpack.c.l.s4 1966171168
    %v3481 = vunpack.c.0.s8 %v3480
    %v3482 = vlaneseq
    %v3483 = vshrl.u32 %v3482, 7
    %v3484 = vsub.s32 %v3481, %v3483
    %v3485 = vrot.slane %v3471, %v3484
    %v3486 = vcombine.low %v3478, %v3485
    %v3487 = vcombine.low %v2092, %v2096
    %v3488 = vcombine.low %v2100, %v2104
    %v3489 = vcombine.low %v2108, %v2112
    %v3490 = vcombine.low %v2116, %v2120
    %v3492 = vunpack.c.l.s4 1966171168
    %v3493 = vunpack.c.0.s8 %v3492
    %v3494 = vlaneseq
    %v3495 = vshrl.u32 %v3494, 7
    %v3496 = vsub.s32 %v3493, %v3495
    %v3497 = vrot.slane %v3487, %v3496
    %v3499 = vunpack.c.l.s4 1966171168
    %v3500 = vunpack.c.0.s8 %v3499
    %v3501 = vlaneseq
    %v3502 = vshrl.u32 %v3501, 7
    %v3503 = vsub.s32 %v3500, %v3502
    %v3504 = vrot.slane %v3488, %v3503
    %v3506 = vunpack.c.l.s4 1966171168
    %v3507 = vunpack.c.0.s8 %v3506
    %v3508 = vlaneseq
    %v3509 = vshrl.u32 %v3508, 7
    %v3510 = vsub.s32 %v3507, %v3509
    %v3511 = vrot.slane %v3489, %v3510
    %v3513 = vunpack.c.l.s4 1966171168
    %v3514 = vunpack.c.0.s8 %v3513
    %v3515 = vlaneseq
    %v3516 = vshrl.u32 %v3515, 7
    %v3517 = vsub.s32 %v3514, %v3516
    %v3518 = vrot.slane %v3490, %v3517
    %v3519 = vcombine.low %v3497, %v3504
    %v3520 = vcombine.low %v3511, %v3518
    %v3522 = vunpack.c.l.s4 1966171168
    %v3523 = vunpack.c.0.s8 %v3522
    %v3524 = vlaneseq
    %v3525 = vshrl.u32 %v3524, 7
    %v3526 = vsub.s32 %v3523, %v3525
    %v3527 = vrot.slane %v3519, %v3526
    %v3529 = vunpack.c.l.s4 1966171168
    %v3530 = vunpack.c.0.s8 %v3529
    %v3531 = vlaneseq
    %v3532 = vshrl.u32 %v3531, 7
    %v3533 = vsub.s32 %v3530, %v3532
    %v3534 = vrot.slane %v3520, %v3533
    %v3535 = vcombine.low %v3527, %v3534
    %v3536 = vcombine.low %v2124, %v2128
    %v3537 = vcombine.low %v2132, %v2136
    %v3538 = vcombine.low %v2140, %v2144
    %v3539 = vcombine.low %v2148, %v2152
    %v3541 = vunpack.c.l.s4 1966171168
    %v3542 = vunpack.c.0.s8 %v3541
    %v3543 = vlaneseq
    %v3544 = vshrl.u32 %v3543, 7
    %v3545 = vsub.s32 %v3542, %v3544
    %v3546 = vrot.slane %v3536, %v3545
    %v3548 = vunpack.c.l.s4 1966171168
    %v3549 = vunpack.c.0.s8 %v3548
    %v3550 = vlaneseq
    %v3551 = vshrl.u32 %v3550, 7
    %v3552 = vsub.s32 %v3549, %v3551
    %v3553 = vrot.slane %v3537, %v3552
    %v3555 = vunpack.c.l.s4 1966171168
    %v3556 = vunpack.c.0.s8 %v3555
    %v3557 = vlaneseq
    %v3558 = vshrl.u32 %v3557, 7
    %v3559 = vsub.s32 %v3556, %v3558
    %v3560 = vrot.slane %v3538, %v3559
    %v3562 = vunpack.c.l.s4 1966171168
    %v3563 = vunpack.c.0.s8 %v3562
    %v3564 = vlaneseq
    %v3565 = vshrl.u32 %v3564, 7
    %v3566 = vsub.s32 %v3563, %v3565
    %v3567 = vrot.slane %v3539, %v3566
    %v3568 = vcombine.low %v3546, %v3553
    %v3569 = vcombine.low %v3560, %v3567
    %v3571 = vunpack.c.l.s4 1966171168
    %v3572 = vunpack.c.0.s8 %v3571
    %v3573 = vlaneseq
    %v3574 = vshrl.u32 %v3573, 7
    %v3575 = vsub.s32 %v3572, %v3574
    %v3576 = vrot.slane %v3568, %v3575
    %v3578 = vunpack.c.l.s4 1966171168
    %v3579 = vunpack.c.0.s8 %v3578
    %v3580 = vlaneseq
    %v3581 = vshrl.u32 %v3580, 7
    %v3582 = vsub.s32 %v3579, %v3581
    %v3583 = vrot.slane %v3569, %v3582
    %v3584 = vcombine.low %v3576, %v3583
    %v3585 = vcombine.low %v2156, %v2160
    %v3586 = vcombine.low %v2164, %v2168
    %v3587 = vcombine.low %v2172, %v2176
    %v3588 = vcombine.low %v2180, %v2184
    %v3590 = vunpack.c.l.s4 1966171168
    %v3591 = vunpack.c.0.s8 %v3590
    %v3592 = vlaneseq
    %v3593 = vshrl.u32 %v3592, 7
    %v3594 = vsub.s32 %v3591, %v3593
    %v3595 = vrot.slane %v3585, %v3594
    %v3597 = vunpack.c.l.s4 1966171168
    %v3598 = vunpack.c.0.s8 %v3597
    %v3599 = vlaneseq
    %v3600 = vshrl.u32 %v3599, 7
    %v3601 = vsub.s32 %v3598, %v3600
    %v3602 = vrot.slane %v3586, %v3601
    %v3604 = vunpack.c.l.s4 1966171168
    %v3605 = vunpack.c.0.s8 %v3604
    %v3606 = vlaneseq
    %v3607 = vshrl.u32 %v3606, 7
    %v3608 = vsub.s32 %v3605, %v3607
    %v3609 = vrot.slane %v3587, %v3608
    %v3611 = vunpack.c.l.s4 1966171168
    %v3612 = vunpack.c.0.s8 %v3611
    %v3613 = vlaneseq
    %v3614 = vshrl.u32 %v3613, 7
    %v3615 = vsub.s32 %v3612, %v3614
    %v3616 = vrot.slane %v3588, %v3615
    %v3617 = vcombine.low %v3595, %v3602
    %v3618 = vcombine.low %v3609, %v3616
    %v3620 = vunpack.c.l.s4 1966171168
    %v3621 = vunpack.c.0.s8 %v3620
    %v3622 = vlaneseq
    %v3623 = vshrl.u32 %v3622, 7
    %v3624 = vsub.s32 %v3621, %v3623
    %v3625 = vrot.slane %v3617, %v3624
    %v3627 = vunpack.c.l.s4 1966171168
    %v3628 = vunpack.c.0.s8 %v3627
    %v3629 = vlaneseq
    %v3630 = vshrl.u32 %v3629, 7
    %v3631 = vsub.s32 %v3628, %v3630
    %v3632 = vrot.slane %v3618, %v3631
    %v3633 = vcombine.low %v3625, %v3632
    %v3634 = vcombine.low %v2188, %v2192
    %v3635 = vcombine.low %v2196, %v2200
    %v3636 = vcombine.low %v2204, %v2208
    %v3637 = vcombine.low %v2212, %v2216
    %v3639 = vunpack.c.l.s4 1966171168
    %v3640 = vunpack.c.0.s8 %v3639
    %v3641 = vlaneseq
    %v3642 = vshrl.u32 %v3641, 7
    %v3643 = vsub.s32 %v3640, %v3642
    %v3644 = vrot.slane %v3634, %v3643
    %v3646 = vunpack.c.l.s4 1966171168
    %v3647 = vunpack.c.0.s8 %v3646
    %v3648 = vlaneseq
    %v3649 = vshrl.u32 %v3648, 7
    %v3650 = vsub.s32 %v3647, %v3649
    %v3651 = vrot.slane %v3635, %v3650
    %v3653 = vunpack.c.l.s4 1966171168
    %v3654 = vunpack.c.0.s8 %v3653
    %v3655 = vlaneseq
    %v3656 = vshrl.u32 %v3655, 7
    %v3657 = vsub.s32 %v3654, %v3656
    %v3658 = vrot.slane %v3636, %v3657
    %v3660 = vunpack.c.l.s4 1966171168
    %v3661 = vunpack.c.0.s8 %v3660
    %v3662 = vlaneseq
    %v3663 = vshrl.u32 %v3662, 7
    %v3664 = vsub.s32 %v3661, %v3663
    %v3665 = vrot.slane %v3637, %v3664
    %v3666 = vcombine.low %v3644, %v3651
    %v3667 = vcombine.low %v3658, %v3665
    %v3669 = vunpack.c.l.s4 1966171168
    %v3670 = vunpack.c.0.s8 %v3669
    %v3671 = vlaneseq
    %v3672 = vshrl.u32 %v3671, 7
    %v3673 = vsub.s32 %v3670, %v3672
    %v3674 = vrot.slane %v3666, %v3673
    %v3676 = vunpack.c.l.s4 1966171168
    %v3677 = vunpack.c.0.s8 %v3676
    %v3678 = vlaneseq
    %v3679 = vshrl.u32 %v3678, 7
    %v3680 = vsub.s32 %v3677, %v3679
    %v3681 = vrot.slane %v3667, %v3680
    %v3682 = vcombine.low %v3674, %v3681
    %v3683 = vcombine.low %v2220, %v2224
    %v3684 = vcombine.low %v2228, %v2232
    %v3685 = vcombine.low %v2236, %v2240
    %v3686 = vcombine.low %v2244, %v2248
    %v3688 = vunpack.c.l.s4 1966171168
    %v3689 = vunpack.c.0.s8 %v3688
    %v3690 = vlaneseq
    %v3691 = vshrl.u32 %v3690, 7
    %v3692 = vsub.s32 %v3689, %v3691
    %v3693 = vrot.slane %v3683, %v3692
    %v3695 = vunpack.c.l.s4 1966171168
    %v3696 = vunpack.c.0.s8 %v3695
    %v3697 = vlaneseq
    %v3698 = vshrl.u32 %v3697, 7
    %v3699 = vsub.s32 %v3696, %v3698
    %v3700 = vrot.slane %v3684, %v3699
    %v3702 = vunpack.c.l.s4 1966171168
    %v3703 = vunpack.c.0.s8 %v3702
    %v3704 = vlaneseq
    %v3705 = vshrl.u32 %v3704, 7
    %v3706 = vsub.s32 %v3703, %v3705
    %v3707 = vrot.slane %v3685, %v3706
    %v3709 = vunpack.c.l.s4 1966171168
    %v3710 = vunpack.c.0.s8 %v3709
    %v3711 = vlaneseq
    %v3712 = vshrl.u32 %v3711, 7
    %v3713 = vsub.s32 %v3710, %v3712
    %v3714 = vrot.slane %v3686, %v3713
    %v3715 = vcombine.low %v3693, %v3700
    %v3716 = vcombine.low %v3707, %v3714
    %v3718 = vunpack.c.l.s4 1966171168
    %v3719 = vunpack.c.0.s8 %v3718
    %v3720 = vlaneseq
    %v3721 = vshrl.u32 %v3720, 7
    %v3722 = vsub.s32 %v3719, %v3721
    %v3723 = vrot.slane %v3715, %v3722
    %v3725 = vunpack.c.l.s4 1966171168
    %v3726 = vunpack.c.0.s8 %v3725
    %v3727 = vlaneseq
    %v3728 = vshrl.u32 %v3727, 7
    %v3729 = vsub.s32 %v3726, %v3728
    %v3730 = vrot.slane %v3716, %v3729
    %v3731 = vcombine.low %v3723, %v3730
    %v3732 = vcombine.low %v2252, %v2256
    %v3733 = vcombine.low %v2260, %v2264
    %v3734 = vcombine.low %v2268, %v2272
    %v3735 = vcombine.low %v2276, %v2280
    %v3737 = vunpack.c.l.s4 1966171168
    %v3738 = vunpack.c.0.s8 %v3737
    %v3739 = vlaneseq
    %v3740 = vshrl.u32 %v3739, 7
    %v3741 = vsub.s32 %v3738, %v3740
    %v3742 = vrot.slane %v3732, %v3741
    %v3744 = vunpack.c.l.s4 1966171168
    %v3745 = vunpack.c.0.s8 %v3744
    %v3746 = vlaneseq
    %v3747 = vshrl.u32 %v3746, 7
    %v3748 = vsub.s32 %v3745, %v3747
    %v3749 = vrot.slane %v3733, %v3748
    %v3751 = vunpack.c.l.s4 1966171168
    %v3752 = vunpack.c.0.s8 %v3751
    %v3753 = vlaneseq
    %v3754 = vshrl.u32 %v3753, 7
    %v3755 = vsub.s32 %v3752, %v3754
    %v3756 = vrot.slane %v3734, %v3755
    %v3758 = vunpack.c.l.s4 1966171168
    %v3759 = vunpack.c.0.s8 %v3758
    %v3760 = vlaneseq
    %v3761 = vshrl.u32 %v3760, 7
    %v3762 = vsub.s32 %v3759, %v3761
    %v3763 = vrot.slane %v3735, %v3762
    %v3764 = vcombine.low %v3742, %v3749
    %v3765 = vcombine.low %v3756, %v3763
    %v3767 = vunpack.c.l.s4 1966171168
    %v3768 = vunpack.c.0.s8 %v3767
    %v3769 = vlaneseq
    %v3770 = vshrl.u32 %v3769, 7
    %v3771 = vsub.s32 %v3768, %v3770
    %v3772 = vrot.slane %v3764, %v3771
    %v3774 = vunpack.c.l.s4 1966171168
    %v3775 = vunpack.c.0.s8 %v3774
    %v3776 = vlaneseq
    %v3777 = vshrl.u32 %v3776, 7
    %v3778 = vsub.s32 %v3775, %v3777
    %v3779 = vrot.slane %v3765, %v3778
    %v3780 = vcombine.low %v3772, %v3779
    %v3781 = vcombine.low %v2284, %v2288
    %v3782 = vcombine.low %v2292, %v2296
    %v3783 = vcombine.low %v2300, %v2304
    %v3784 = vcombine.low %v2308, %v2312
    %v3786 = vunpack.c.l.s4 1966171168
    %v3787 = vunpack.c.0.s8 %v3786
    %v3788 = vlaneseq
    %v3789 = vshrl.u32 %v3788, 7
    %v3790 = vsub.s32 %v3787, %v3789
    %v3791 = vrot.slane %v3781, %v3790
    %v3793 = vunpack.c.l.s4 1966171168
    %v3794 = vunpack.c.0.s8 %v3793
    %v3795 = vlaneseq
    %v3796 = vshrl.u32 %v3795, 7
    %v3797 = vsub.s32 %v3794, %v3796
    %v3798 = vrot.slane %v3782, %v3797
    %v3800 = vunpack.c.l.s4 1966171168
    %v3801 = vunpack.c.0.s8 %v3800
    %v3802 = vlaneseq
    %v3803 = vshrl.u32 %v3802, 7
    %v3804 = vsub.s32 %v3801, %v3803
    %v3805 = vrot.slane %v3783, %v3804
    %v3807 = vunpack.c.l.s4 1966171168
    %v3808 = vunpack.c.0.s8 %v3807
    %v3809 = vlaneseq
    %v3810 = vshrl.u32 %v3809, 7
    %v3811 = vsub.s32 %v3808, %v3810
    %v3812 = vrot.slane %v3784, %v3811
    %v3813 = vcombine.low %v3791, %v3798
    %v3814 = vcombine.low %v3805, %v3812
    %v3816 = vunpack.c.l.s4 1966171168
    %v3817 = vunpack.c.0.s8 %v3816
    %v3818 = vlaneseq
    %v3819 = vshrl.u32 %v3818, 7
    %v3820 = vsub.s32 %v3817, %v3819
    %v3821 = vrot.slane %v3813, %v3820
    %v3823 = vunpack.c.l.s4 1966171168
    %v3824 = vunpack.c.0.s8 %v3823
    %v3825 = vlaneseq
    %v3826 = vshrl.u32 %v3825, 7
    %v3827 = vsub.s32 %v3824, %v3826
    %v3828 = vrot.slane %v3814, %v3827
    %v3829 = vcombine.low %v3821, %v3828
    %v3830 = vcombine.low %v2316, %v2320
    %v3831 = vcombine.low %v2324, %v2328
    %v3832 = vcombine.low %v2332, %v2336
    %v3833 = vcombine.low %v2340, %v2344
    %v3835 = vunpack.c.l.s4 1966171168
    %v3836 = vunpack.c.0.s8 %v3835
    %v3837 = vlaneseq
    %v3838 = vshrl.u32 %v3837, 7
    %v3839 = vsub.s32 %v3836, %v3838
    %v3840 = vrot.slane %v3830, %v3839
    %v3842 = vunpack.c.l.s4 1966171168
    %v3843 = vunpack.c.0.s8 %v3842
    %v3844 = vlaneseq
    %v3845 = vshrl.u32 %v3844, 7
    %v3846 = vsub.s32 %v3843, %v3845
    %v3847 = vrot.slane %v3831, %v3846
    %v3849 = vunpack.c.l.s4 1966171168
    %v3850 = vunpack.c.0.s8 %v3849
    %v3851 = vlaneseq
    %v3852 = vshrl.u32 %v3851, 7
    %v3853 = vsub.s32 %v3850, %v3852
    %v3854 = vrot.slane %v3832, %v3853
    %v3856 = vunpack.c.l.s4 1966171168
    %v3857 = vunpack.c.0.s8 %v3856
    %v3858 = vlaneseq
    %v3859 = vshrl.u32 %v3858, 7
    %v3860 = vsub.s32 %v3857, %v3859
    %v3861 = vrot.slane %v3833, %v3860
    %v3862 = vcombine.low %v3840, %v3847
    %v3863 = vcombine.low %v3854, %v3861
    %v3865 = vunpack.c.l.s4 1966171168
    %v3866 = vunpack.c.0.s8 %v3865
    %v3867 = vlaneseq
    %v3868 = vshrl.u32 %v3867, 7
    %v3869 = vsub.s32 %v3866, %v3868
    %v3870 = vrot.slane %v3862, %v3869
    %v3872 = vunpack.c.l.s4 1966171168
    %v3873 = vunpack.c.0.s8 %v3872
    %v3874 = vlaneseq
    %v3875 = vshrl.u32 %v3874, 7
    %v3876 = vsub.s32 %v3873, %v3875
    %v3877 = vrot.slane %v3863, %v3876
    %v3878 = vcombine.low %v3870, %v3877
    %v3879 = vcombine.low %v2348, %v2352
    %v3880 = vcombine.low %v2356, %v2360
    %v3881 = vcombine.low %v2364, %v2368
    %v3882 = vcombine.low %v2372, %v2376
    %v3884 = vunpack.c.l.s4 1966171168
    %v3885 = vunpack.c.0.s8 %v3884
    %v3886 = vlaneseq
    %v3887 = vshrl.u32 %v3886, 7
    %v3888 = vsub.s32 %v3885, %v3887
    %v3889 = vrot.slane %v3879, %v3888
    %v3891 = vunpack.c.l.s4 1966171168
    %v3892 = vunpack.c.0.s8 %v3891
    %v3893 = vlaneseq
    %v3894 = vshrl.u32 %v3893, 7
    %v3895 = vsub.s32 %v3892, %v3894
    %v3896 = vrot.slane %v3880, %v3895
    %v3898 = vunpack.c.l.s4 1966171168
    %v3899 = vunpack.c.0.s8 %v3898
    %v3900 = vlaneseq
    %v3901 = vshrl.u32 %v3900, 7
    %v3902 = vsub.s32 %v3899, %v3901
    %v3903 = vrot.slane %v3881, %v3902
    %v3905 = vunpack.c.l.s4 1966171168
    %v3906 = vunpack.c.0.s8 %v3905
    %v3907 = vlaneseq
    %v3908 = vshrl.u32 %v3907, 7
    %v3909 = vsub.s32 %v3906, %v3908
    %v3910 = vrot.slane %v3882, %v3909
    %v3911 = vcombine.low %v3889, %v3896
    %v3912 = vcombine.low %v3903, %v3910
    %v3914 = vunpack.c.l.s4 1966171168
    %v3915 = vunpack.c.0.s8 %v3914
    %v3916 = vlaneseq
    %v3917 = vshrl.u32 %v3916, 7
    %v3918 = vsub.s32 %v3915, %v3917
    %v3919 = vrot.slane %v3911, %v3918
    %v3921 = vunpack.c.l.s4 1966171168
    %v3922 = vunpack.c.0.s8 %v3921
    %v3923 = vlaneseq
    %v3924 = vshrl.u32 %v3923, 7
    %v3925 = vsub.s32 %v3922, %v3924
    %v3926 = vrot.slane %v3912, %v3925
    %v3927 = vcombine.low %v3919, %v3926
    %v3928 = vcombine.low %v2380, %v2384
    %v3929 = vcombine.low %v2388, %v2392
    %v3930 = vcombine.low %v2396, %v2400
    %v3931 = vcombine.low %v2404, %v2408
    %v3933 = vunpack.c.l.s4 1966171168
    %v3934 = vunpack.c.0.s8 %v3933
    %v3935 = vlaneseq
    %v3936 = vshrl.u32 %v3935, 7
    %v3937 = vsub.s32 %v3934, %v3936
    %v3938 = vrot.slane %v3928, %v3937
    %v3940 = vunpack.c.l.s4 1966171168
    %v3941 = vunpack.c.0.s8 %v3940
    %v3942 = vlaneseq
    %v3943 = vshrl.u32 %v3942, 7
    %v3944 = vsub.s32 %v3941, %v3943
    %v3945 = vrot.slane %v3929, %v3944
    %v3947 = vunpack.c.l.s4 1966171168
    %v3948 = vunpack.c.0.s8 %v3947
    %v3949 = vlaneseq
    %v3950 = vshrl.u32 %v3949, 7
    %v3951 = vsub.s32 %v3948, %v3950
    %v3952 = vrot.slane %v3930, %v3951
    %v3954 = vunpack.c.l.s4 1966171168
    %v3955 = vunpack.c.0.s8 %v3954
    %v3956 = vlaneseq
    %v3957 = vshrl.u32 %v3956, 7
    %v3958 = vsub.s32 %v3955, %v3957
    %v3959 = vrot.slane %v3931, %v3958
    %v3960 = vcombine.low %v3938, %v3945
    %v3961 = vcombine.low %v3952, %v3959
    %v3963 = vunpack.c.l.s4 1966171168
    %v3964 = vunpack.c.0.s8 %v3963
    %v3965 = vlaneseq
    %v3966 = vshrl.u32 %v3965, 7
    %v3967 = vsub.s32 %v3964, %v3966
    %v3968 = vrot.slane %v3960, %v3967
    %v3970 = vunpack.c.l.s4 1966171168
    %v3971 = vunpack.c.0.s8 %v3970
    %v3972 = vlaneseq
    %v3973 = vshrl.u32 %v3972, 7
    %v3974 = vsub.s32 %v3971, %v3973
    %v3975 = vrot.slane %v3961, %v3974
    %v3976 = vcombine.low %v3968, %v3975
    %3977 = vset.pattern.permute.xlu0 0
    %3978 = vperm.xlu0 %3977, %v2457
    %v3979 = vpop.permute.xlu0 %3978
    %3980 = vset.pattern.permute.xlu0 0
    %3981 = vperm.xlu0 %3980, %v2506
    %v3982 = vpop.permute.xlu0 %3981
    %3983 = vset.pattern.permute.xlu0 0
    %3984 = vperm.xlu0 %3983, %v2555
    %v3985 = vpop.permute.xlu0 %3984
    %3986 = vset.pattern.permute.xlu0 0
    %3987 = vperm.xlu0 %3986, %v2604
    %v3988 = vpop.permute.xlu0 %3987
    %3989 = vset.pattern.permute.xlu0 0
    %3990 = vperm.xlu0 %3989, %v2653
    %v3991 = vpop.permute.xlu0 %3990
    %3992 = vset.pattern.permute.xlu0 0
    %3993 = vperm.xlu0 %3992, %v2702
    %v3994 = vpop.permute.xlu0 %3993
    %3995 = vset.pattern.permute.xlu0 0
    %3996 = vperm.xlu0 %3995, %v2751
    %v3997 = vpop.permute.xlu0 %3996
    %3998 = vset.pattern.permute.xlu0 0
    %3999 = vperm.xlu0 %3998, %v2800
    %v4000 = vpop.permute.xlu0 %3999
    %4001 = vset.pattern.permute.xlu0 0
    %4002 = vperm.xlu0 %4001, %v2849
    %v4003 = vpop.permute.xlu0 %4002
    %4004 = vset.pattern.permute.xlu0 0
    %4005 = vperm.xlu0 %4004, %v2898
    %v4006 = vpop.permute.xlu0 %4005
    %4007 = vset.pattern.permute.xlu0 0
    %4008 = vperm.xlu0 %4007, %v2947
    %v4009 = vpop.permute.xlu0 %4008
    %4010 = vset.pattern.permute.xlu0 0
    %4011 = vperm.xlu0 %4010, %v2996
    %v4012 = vpop.permute.xlu0 %4011
    %4013 = vset.pattern.permute.xlu0 0
    %4014 = vperm.xlu0 %4013, %v3045
    %v4015 = vpop.permute.xlu0 %4014
    %4016 = vset.pattern.permute.xlu0 0
    %4017 = vperm.xlu0 %4016, %v3094
    %v4018 = vpop.permute.xlu0 %4017
    %4019 = vset.pattern.permute.xlu0 0
    %4020 = vperm.xlu0 %4019, %v3143
    %v4021 = vpop.permute.xlu0 %4020
    %4022 = vset.pattern.permute.xlu0 0
    %4023 = vperm.xlu0 %4022, %v3192
    %v4024 = vpop.permute.xlu0 %4023
    %4025 = vset.pattern.permute.xlu0 0
    %4026 = vperm.xlu0 %4025, %v3241
    %v4027 = vpop.permute.xlu0 %4026
    %4028 = vset.pattern.permute.xlu0 0
    %4029 = vperm.xlu0 %4028, %v3290
    %v4030 = vpop.permute.xlu0 %4029
    %4031 = vset.pattern.permute.xlu0 0
    %4032 = vperm.xlu0 %4031, %v3339
    %v4033 = vpop.permute.xlu0 %4032
    %4034 = vset.pattern.permute.xlu0 0
    %4035 = vperm.xlu0 %4034, %v3388
    %v4036 = vpop.permute.xlu0 %4035
    %4037 = vset.pattern.permute.xlu0 0
    %4038 = vperm.xlu0 %4037, %v3437
    %v4039 = vpop.permute.xlu0 %4038
    %4040 = vset.pattern.permute.xlu0 0
    %4041 = vperm.xlu0 %4040, %v3486
    %v4042 = vpop.permute.xlu0 %4041
    %4043 = vset.pattern.permute.xlu0 0
    %4044 = vperm.xlu0 %4043, %v3535
    %v4045 = vpop.permute.xlu0 %4044
    %4046 = vset.pattern.permute.xlu0 0
    %4047 = vperm.xlu0 %4046, %v3584
    %v4048 = vpop.permute.xlu0 %4047
    %4049 = vset.pattern.permute.xlu0 0
    %4050 = vperm.xlu0 %4049, %v3633
    %v4051 = vpop.permute.xlu0 %4050
    %4052 = vset.pattern.permute.xlu0 0
    %4053 = vperm.xlu0 %4052, %v3682
    %v4054 = vpop.permute.xlu0 %4053
    %4055 = vset.pattern.permute.xlu0 0
    %4056 = vperm.xlu0 %4055, %v3731
    %v4057 = vpop.permute.xlu0 %4056
    %4058 = vset.pattern.permute.xlu0 0
    %4059 = vperm.xlu0 %4058, %v3780
    %v4060 = vpop.permute.xlu0 %4059
    %4061 = vset.pattern.permute.xlu0 0
    %4062 = vperm.xlu0 %4061, %v3829
    %v4063 = vpop.permute.xlu0 %4062
    %4064 = vset.pattern.permute.xlu0 0
    %4065 = vperm.xlu0 %4064, %v3878
    %v4066 = vpop.permute.xlu0 %4065
    %4067 = vset.pattern.permute.xlu0 0
    %4068 = vperm.xlu0 %4067, %v3927
    %v4069 = vpop.permute.xlu0 %4068
    %4070 = vset.pattern.permute.xlu0 0
    %4071 = vperm.xlu0 %4070, %v3976
    %v4072 = vpop.permute.xlu0 %4071
    %v4073 = vlaneseq
    %v4074 = vand.u32 %v4073, 127
    %v4075 = vlaneseq
    %v4076 = vshrl.u32 %v4075, 7
    %v4077 = vsub.s32 %v4074, %v4076
    %v4078 = vrot.slane %v3979, %v4077
    %v4079 = vadd.s32 %v4074, 4294967288
    %v4080 = vlaneseq
    %v4081 = vshrl.u32 %v4080, 7
    %v4082 = vsub.s32 %v4079, %v4081
    %v4083 = vrot.slane %v3982, %v4082
    %vm4084 = vcmask 130112
    %v4085 = vsel %vm4084, %v4083, %v4078
    %v4086 = vadd.s32 %v4074, 4294967280
    %v4087 = vlaneseq
    %v4088 = vshrl.u32 %v4087, 7
    %v4089 = vsub.s32 %v4086, %v4088
    %v4090 = vrot.slane %v3985, %v4089
    %vm4091 = vcmask 195712
    %v4092 = vsel %vm4091, %v4090, %v4085
    %v4093 = vadd.s32 %v4074, 4294967272
    %v4094 = vlaneseq
    %v4095 = vshrl.u32 %v4094, 7
    %v4096 = vsub.s32 %v4093, %v4095
    %v4097 = vrot.slane %v3988, %v4096
    %vm4098 = vcmask 261312
    %v4099 = vsel %vm4098, %v4097, %v4092
    %v4100 = vadd.s32 %v4074, 4294967264
    %v4101 = vlaneseq
    %v4102 = vshrl.u32 %v4101, 7
    %v4103 = vsub.s32 %v4100, %v4102
    %v4104 = vrot.slane %v3991, %v4103
    %vm4105 = vcmask 326912
    %v4106 = vsel %vm4105, %v4104, %v4099
    %v4107 = vadd.s32 %v4074, 4294967256
    %v4108 = vlaneseq
    %v4109 = vshrl.u32 %v4108, 7
    %v4110 = vsub.s32 %v4107, %v4109
    %v4111 = vrot.slane %v3994, %v4110
    %vm4112 = vcmask 392512
    %v4113 = vsel %vm4112, %v4111, %v4106
    %v4114 = vadd.s32 %v4074, 4294967248
    %v4115 = vlaneseq
    %v4116 = vshrl.u32 %v4115, 7
    %v4117 = vsub.s32 %v4114, %v4116
    %v4118 = vrot.slane %v3997, %v4117
    %vm4119 = vcmask 458112
    %v4120 = vsel %vm4119, %v4118, %v4113
    %v4121 = vadd.s32 %v4074, 4294967240
    %v4122 = vlaneseq
    %v4123 = vshrl.u32 %v4122, 7
    %v4124 = vsub.s32 %v4121, %v4123
    %v4125 = vrot.slane %v4000, %v4124
    %vm4126 = vcmask 523712
    %v4127 = vsel %vm4126, %v4125, %v4120
    %v4128 = vadd.s32 %v4074, 4294967232
    %v4129 = vlaneseq
    %v4130 = vshrl.u32 %v4129, 7
    %v4131 = vsub.s32 %v4128, %v4130
    %v4132 = vrot.slane %v4003, %v4131
    %vm4133 = vcmask 589312
    %v4134 = vsel %vm4133, %v4132, %v4127
    %v4135 = vadd.s32 %v4074, 4294967224
    %v4136 = vlaneseq
    %v4137 = vshrl.u32 %v4136, 7
    %v4138 = vsub.s32 %v4135, %v4137
    %v4139 = vrot.slane %v4006, %v4138
    %vm4140 = vcmask 654912
    %v4141 = vsel %vm4140, %v4139, %v4134
    %v4142 = vadd.s32 %v4074, 4294967216
    %v4143 = vlaneseq
    %v4144 = vshrl.u32 %v4143, 7
    %v4145 = vsub.s32 %v4142, %v4144
    %v4146 = vrot.slane %v4009, %v4145
    %vm4147 = vcmask 720512
    %v4148 = vsel %vm4147, %v4146, %v4141
    %v4149 = vadd.s32 %v4074, 4294967208
    %v4150 = vlaneseq
    %v4151 = vshrl.u32 %v4150, 7
    %v4152 = vsub.s32 %v4149, %v4151
    %v4153 = vrot.slane %v4012, %v4152
    %vm4154 = vcmask 786112
    %v4155 = vsel %vm4154, %v4153, %v4148
    %v4156 = vadd.s32 %v4074, 4294967200
    %v4157 = vlaneseq
    %v4158 = vshrl.u32 %v4157, 7
    %v4159 = vsub.s32 %v4156, %v4158
    %v4160 = vrot.slane %v4015, %v4159
    %vm4161 = vcmask 851712
    %v4162 = vsel %vm4161, %v4160, %v4155
    %v4163 = vadd.s32 %v4074, 4294967192
    %v4164 = vlaneseq
    %v4165 = vshrl.u32 %v4164, 7
    %v4166 = vsub.s32 %v4163, %v4165
    %v4167 = vrot.slane %v4018, %v4166
    %vm4168 = vcmask 917312
    %v4169 = vsel %vm4168, %v4167, %v4162
    %v4170 = vadd.s32 %v4074, 4294967184
    %v4171 = vlaneseq
    %v4172 = vshrl.u32 %v4171, 7
    %v4173 = vsub.s32 %v4170, %v4172
    %v4174 = vrot.slane %v4021, %v4173
    %vm4175 = vcmask 982912
    %v4176 = vsel %vm4175, %v4174, %v4169
    %v4177 = vadd.s32 %v4074, 4294967176
    %v4178 = vlaneseq
    %v4179 = vshrl.u32 %v4178, 7
    %v4180 = vsub.s32 %v4177, %v4179
    %v4181 = vrot.slane %v4024, %v4180
    %vm4182 = vcmask 1048512
    %v4183 = vsel %vm4182, %v4181, %v4176
    %v4184 = vlaneseq
    %v4185 = vshrl.u32 %v4184, 7
    %v4186 = vsub.s32 %v4074, %v4185
    %v4187 = vrot.slane %v4027, %v4186
    %v4188 = vlaneseq
    %v4189 = vshrl.u32 %v4188, 7
    %v4190 = vsub.s32 %v4079, %v4189
    %v4191 = vrot.slane %v4030, %v4190
    %v4192 = vsel %vm4084, %v4191, %v4187
    %v4193 = vlaneseq
    %v4194 = vshrl.u32 %v4193, 7
    %v4195 = vsub.s32 %v4086, %v4194
    %v4196 = vrot.slane %v4033, %v4195
    %v4197 = vsel %vm4091, %v4196, %v4192
    %v4198 = vlaneseq
    %v4199 = vshrl.u32 %v4198, 7
    %v4200 = vsub.s32 %v4093, %v4199
    %v4201 = vrot.slane %v4036, %v4200
    %v4202 = vsel %vm4098, %v4201, %v4197
    %v4203 = vlaneseq
    %v4204 = vshrl.u32 %v4203, 7
    %v4205 = vsub.s32 %v4100, %v4204
    %v4206 = vrot.slane %v4039, %v4205
    %v4207 = vsel %vm4105, %v4206, %v4202
    %v4208 = vlaneseq
    %v4209 = vshrl.u32 %v4208, 7
    %v4210 = vsub.s32 %v4107, %v4209
    %v4211 = vrot.slane %v4042, %v4210
    %v4212 = vsel %vm4112, %v4211, %v4207
    %v4213 = vlaneseq
    %v4214 = vshrl.u32 %v4213, 7
    %v4215 = vsub.s32 %v4114, %v4214
    %v4216 = vrot.slane %v4045, %v4215
    %v4217 = vsel %vm4119, %v4216, %v4212
    %v4218 = vlaneseq
    %v4219 = vshrl.u32 %v4218, 7
    %v4220 = vsub.s32 %v4121, %v4219
    %v4221 = vrot.slane %v4048, %v4220
    %v4222 = vsel %vm4126, %v4221, %v4217
    %v4223 = vlaneseq
    %v4224 = vshrl.u32 %v4223, 7
    %v4225 = vsub.s32 %v4128, %v4224
    %v4226 = vrot.slane %v4051, %v4225
    %v4227 = vsel %vm4133, %v4226, %v4222
    %v4228 = vlaneseq
    %v4229 = vshrl.u32 %v4228, 7
    %v4230 = vsub.s32 %v4135, %v4229
    %v4231 = vrot.slane %v4054, %v4230
    %v4232 = vsel %vm4140, %v4231, %v4227
    %v4233 = vlaneseq
    %v4234 = vshrl.u32 %v4233, 7
    %v4235 = vsub.s32 %v4142, %v4234
    %v4236 = vrot.slane %v4057, %v4235
    %v4237 = vsel %vm4147, %v4236, %v4232
    %v4238 = vlaneseq
    %v4239 = vshrl.u32 %v4238, 7
    %v4240 = vsub.s32 %v4149, %v4239
    %v4241 = vrot.slane %v4060, %v4240
    %v4242 = vsel %vm4154, %v4241, %v4237
    %v4243 = vlaneseq
    %v4244 = vshrl.u32 %v4243, 7
    %v4245 = vsub.s32 %v4156, %v4244
    %v4246 = vrot.slane %v4063, %v4245
    %v4247 = vsel %vm4161, %v4246, %v4242
    %v4248 = vlaneseq
    %v4249 = vshrl.u32 %v4248, 7
    %v4250 = vsub.s32 %v4163, %v4249
    %v4251 = vrot.slane %v4066, %v4250
    %v4252 = vsel %vm4168, %v4251, %v4247
    %v4253 = vlaneseq
    %v4254 = vshrl.u32 %v4253, 7
    %v4255 = vsub.s32 %v4170, %v4254
    %v4256 = vrot.slane %v4069, %v4255
    %v4257 = vsel %vm4175, %v4256, %v4252
    %v4258 = vlaneseq
    %v4259 = vshrl.u32 %v4258, 7
    %v4260 = vsub.s32 %v4177, %v4259
    %v4261 = vrot.slane %v4072, %v4260
    %v4262 = vsel %vm4182, %v4261, %v4257
    %v4263 = vcombine.low %v4183, %v4262
    %v4265 = vunpack.c.l.s4 1966171168
    %v4266 = vunpack.c.0.s8 %v4265
    %v4267 = vlaneseq
    %v4268 = vshrl.u32 %v4267, 7
    %v4269 = vsub.s32 %v4266, %v4268
    %v4270 = vrot.slane %v4263, %v4269
    %v4272 = vunpack.c.l.s4 1966171168
    %v4273 = vunpack.c.0.s8 %v4272
    %v4274 = vlaneseq
    %v4275 = vshrl.u32 %v4274, 7
    %v4276 = vsub.s32 %v4273, %v4275
    %v4277 = vrot.slane %v4270, %v4276
    %v4279 = vlaneseq
    %vm4280 = vcmp.ge.s32.totalorder %v4279, 0
    %vm4281 = vcmp.lt.s32.totalorder %v4279, 256
    %vm4282 = vmand %vm4280, %vm4281
    %4283 = vst.msk [vmem:[%s3] sm:$0x3] %vm4282, %v4277
  $region21: #{reward_model_forward.2} parent=0 // pred_fallthru
    _
  // Predicated region
  $region22: #{reward_model_forward.2} parent=0 // pred_check
    _
  $region23: #{reward_model_forward.2} parent=0 // pred_check_branch
    %4285 = sbr.rel (0) target = $region25
  $region24: #{reward_model_forward.2} parent=0 // pred_region
    _
  $region25: #{reward_model_forward.2} parent=0 // pred_fallthru
    _
  // Predicated region
  $region26: #{reward_model_forward.2} parent=0 // pred_check
    _
  $region27: #{reward_model_forward.2} parent=0 // pred_check_branch
    %4287 = sbr.rel (0) target = $region29
  $region28: #{reward_model_forward.2} parent=0 // pred_region
    _
  $region29: #{reward_model_forward.2} parent=0 // pred_fallthru
    _

</llo_original>
